<compile_context>
chip_gen: v7x
topology: tpu7x:2x2x1
jax: 0.10.0
libtpu: 0.0.40
codegen_flags: <defaults>
</compile_context>

<pallas_src>
import functools

import jax
import jax.numpy as jnp
from jax.experimental import pallas as pl
from jax.experimental.pallas import tpu as pltpu

K = 7          # conv kernel size
PAD = K // 2   # "same" padding = 3


def conv_res_relu_kernel(xp_ref, w_ref, b_ref, out_ref, slab_ref, p_ref,
                         *, H, Lp, Sa):
    # xp_ref:   (bn, Cin, Hpa*Lp)   pre-padded images, rows flattened (pitch Lp)
    # w_ref:    (K*Cout, K*Cin)     rows grouped by kh, cols by kw; residual
    #                               identity already folded into the centre tap
    # b_ref:    (Cout, 1)           bias (f32)
    # out_ref:  (bn, Cout, H*Lp)    cols w >= W of each row are pitch padding
    # slab_ref: (K*Cin, bn*Sa)      kw-shifted im2col slab (VMEM scratch)
    # p_ref:    (K*Cout, bn*Sa)     matmul product (VMEM scratch, f32)
    bn, Cin, _ = xp_ref.shape
    Cout = out_ref.shape[1]
    HL = H * Lp

    # --- im2col: ONE kw-shifted slab per image (the only misaligned copies) --
    for n in range(bn):
        for kw in range(K):
            slab_ref[kw * Cin:(kw + 1) * Cin, n * Sa:(n + 1) * Sa] = (
                xp_ref[n, :, kw:kw + Sa].astype(slab_ref.dtype))

    # --- whole conv as one MXU matmul: (K*Cout,K*Cin) @ (K*Cin, bn*Sa) -------
    p_ref[...] = jnp.dot(w_ref[...], slab_ref[...],
                         preferred_element_type=jnp.float32)

    # --- combine kh row-blocks via static lane-offset slices; bias + ReLU ----
    for n in range(bn):
        base = n * Sa
        acc = p_ref[0:Cout, base:base + HL]                 # kh = 0, aligned
        for kh in range(1, K):
            off = base + kh * Lp
            acc = acc + p_ref[kh * Cout:(kh + 1) * Cout, off:off + HL]
        out_ref[n] = jnp.maximum(acc + b_ref[...], 0.0).astype(out_ref.dtype)


def _prefers_fused_batch():
    """True on single-TensorCore chips (v5e / v6e) -> fold batch into 1 step."""
    try:
        kind = jax.devices()[0].device_kind.lower()
    except Exception:
        return False
    return any(t in kind for t in ("v5e", "v5 lite", "v6e", "v6 lite", "lite"))


def model_forward(x_nchw, w_hwio, bias, *, mm_dtype=jnp.float32,
                  fuse_batch=None):
    """relu(conv2d(x, w, b, stride=1, padding=3) + x) for NCHW x.

    w_hwio: (K, K, Cin, Cout) conv weights (HWIO); bias: (Cout,).
    mm_dtype: dtype of the slab / weights fed to the MXU (bf16 halves the
    copy-bound VMEM traffic; f32 default keeps exact module parity).
    """
    N, Cin, H, W = x_nchw.shape
    Kh, Kw, Cin2, Cout = w_hwio.shape
    assert (Kh, Kw) == (K, K) and Cin2 == Cin
    assert Cin == Cout, "residual add requires Cin == Cout"

    # Row pitch: smallest Lp >= W+2*PAD such that H*Lp is a multiple of 128
    # (unmasked output stores / aligned output DMA); fall back to W+2*PAD.
    Lp = W + 2 * PAD
    for cand in range(Lp, Lp + 16):
        if (H * cand) % 128 == 0:
            Lp = cand
            break
    HL = H * Lp
    # Slab width: must cover every tap column, rounded up to a multiple of 128.
    Sa = -(-((H + K - 2) * Lp + W) // 128) * 128
    # Padded rows: enough for the conv halo and for the widest slab slice.
    Hpa = max(H + 2 * PAD, -(-(Sa + K - 1) // Lp))
    FLAT = Hpa * Lp

    if fuse_batch is None:
        fuse_batch = _prefers_fused_batch()
    bn = N if fuse_batch else 1      # images per grid step
    steps = N // bn

    # Zero padding done once in the wrapper (DMA'd in lane-dense, no in-kernel
    # masked writes).  Rows [PAD, PAD+H) x cols [PAD, PAD+W) hold x; the extra
    # bottom rows / right cols exist so every flat slab slice stays in bounds.
    xpad = jnp.pad(x_nchw, ((0, 0), (0, 0),
                            (PAD, Hpa - H - PAD), (PAD, Lp - W - PAD)))
    xpad_flat = xpad.reshape(N, Cin, FLAT).astype(mm_dtype)

    # Fold the residual into the centre tap (exact: conv is linear), then lay
    # the weights out as (K*Cout, K*Cin): rows grouped by kh, cols by (kw, cin).
    w_res = w_hwio.at[PAD, PAD].add(jnp.eye(Cin, dtype=w_hwio.dtype))
    w_lhs = jnp.transpose(w_res, (0, 3, 1, 2)).reshape(K * Cout, K * Cin)
    w_lhs = w_lhs.astype(mm_dtype)
    b2 = bias.reshape(Cout, 1).astype(jnp.float32)

    kernel = functools.partial(conv_res_relu_kernel, H=H, Lp=Lp, Sa=Sa)
    itemsize = jnp.dtype(mm_dtype).itemsize
    cost = pl.CostEstimate(
        flops=2 * N * H * W * K * K * Cin * Cout,
        transcendentals=0,
        bytes_accessed=(xpad_flat.size * itemsize
                        + N * Cout * HL * x_nchw.dtype.itemsize
                        + w_lhs.size * itemsize + b2.size * 4))

    out_flat = pl.pallas_call(
        kernel,
        out_shape=jax.ShapeDtypeStruct((N, Cout, HL), x_nchw.dtype),
        grid=(steps,),
        in_specs=[
            pl.BlockSpec((bn, Cin, FLAT), lambda i: (i, 0, 0)),
            pl.BlockSpec((K * Cout, K * Cin), lambda i: (0, 0)),
            pl.BlockSpec((Cout, 1), lambda i: (0, 0)),
        ],
        out_specs=pl.BlockSpec((bn, Cout, HL), lambda i: (i, 0, 0)),
        scratch_shapes=[
            pltpu.VMEM((K * Cin, bn * Sa), mm_dtype),       # im2col slab
            pltpu.VMEM((K * Cout, bn * Sa), jnp.float32),   # matmul product
        ],
        compiler_params=pltpu.CompilerParams(
            dimension_semantics=("parallel",)),
        cost_estimate=cost,
    )(xpad_flat, w_lhs, b2)

    # Drop the pitch-padding columns -> NCHW output.
    return out_flat.reshape(N, Cout, H, Lp)[:, :, :, :W]


if __name__ == "__main__":
    # Small shapes consistent with the module (channels must be 16).
    N, C, H, W = 2, 16, 32, 32

    key = jax.random.PRNGKey(0)
    kx, kw, kb = jax.random.split(key, 3)
    x = jax.random.normal(kx, (N, C, H, W), dtype=jnp.float32)
    w_hwio = jax.random.normal(kw, (K, K, C, C), dtype=jnp.float32) * 0.05
    bias = jax.random.normal(kb, (C,), dtype=jnp.float32) * 0.1

    fwd = jax.jit(model_forward)
    y = jax.block_until_ready(fwd(x, w_hwio, bias))

    # Reference: relu(conv2d(x, W, b, stride=1, pad=3) + x) via lax.conv (NCHW).
    ref_conv = jax.lax.conv_general_dilated(
        x, w_hwio, window_strides=(1, 1),
        padding=((PAD, PAD), (PAD, PAD)),
        dimension_numbers=("NCHW", "HWIO", "NCHW"))
    ref = jnp.maximum(ref_conv + bias[None, :, None, None] + x, 0.0)

    assert y.shape == ref.shape
    assert jnp.allclose(y, ref, atol=2e-3, rtol=2e-3), "mismatch vs reference"
    print("KERNEL_OK")
</pallas_src>

<mosaic_0001>
module attributes {stable_mosaic.version = 11 : i64} {
  func.func @conv_res_relu_kernel(%arg0: i32, %arg1: memref<1x16x1560xf32, #tpu.memory_space<vmem>>, %arg2: memref<112x112xf32, #tpu.memory_space<vmem>>, %arg3: memref<16x1xf32, #tpu.memory_space<vmem>>, %arg4: memref<1x16x1280xf32, #tpu.memory_space<vmem>>, %arg5: memref<112x1536xf32, #tpu.memory_space<vmem>>, %arg6: memref<112x1536xf32, #tpu.memory_space<vmem>>) attributes {dimension_semantics = [#tpu.dimension_semantics<parallel>], iteration_bounds = array<i64: 2>, scalar_prefetch = 0 : i64, scratch_operands = 2 : i64, tpu.core_type = #tpu.core_type<tc>, window_params = [{transform_indices = @transform_0, window_bounds = array<i64: 1, 16, 1560>}, {pipeline_mode = #tpu.pipeline_mode<synchronous>, transform_indices = @transform_1, window_bounds = array<i64: 112, 112>}, {pipeline_mode = #tpu.pipeline_mode<synchronous>, transform_indices = @transform_2, window_bounds = array<i64: 16, 1>}, {transform_indices = @transform_3, window_bounds = array<i64: 1, 16, 1280>}]} {
    %c0 = arith.constant 0 : index
    %c0_0 = arith.constant 0 : index
    %c0_1 = arith.constant 0 : index
    %0 = vector.load %arg1[%c0, %c0_0, %c0_1] : memref<1x16x1560xf32, #tpu.memory_space<vmem>>, vector<1x16x1536xf32>
    %1 = vector.shape_cast %0 : vector<1x16x1536xf32> to vector<16x1536xf32>
    %c0_2 = arith.constant 0 : index
    %c0_3 = arith.constant 0 : index
    %2 = vector.load %arg5[%c0_2, %c0_3] : memref<112x1536xf32, #tpu.memory_space<vmem>>, vector<16x1536xf32>
    tpu.vector_store %arg5[%c0_2, %c0_3], %1 {strides = array<i32>} : memref<112x1536xf32, #tpu.memory_space<vmem>>, vector<16x1536xf32>,
    %c0_4 = arith.constant 0 : index
    %c0_5 = arith.constant 0 : index
    %c1 = arith.constant 1 : index
    %3 = vector.load %arg1[%c0_4, %c0_5, %c1] : memref<1x16x1560xf32, #tpu.memory_space<vmem>>, vector<1x16x1536xf32>
    %4 = vector.shape_cast %3 : vector<1x16x1536xf32> to vector<16x1536xf32>
    %c16 = arith.constant 16 : index
    %c0_6 = arith.constant 0 : index
    %5 = vector.load %arg5[%c16, %c0_6] : memref<112x1536xf32, #tpu.memory_space<vmem>>, vector<16x1536xf32>
    tpu.vector_store %arg5[%c16, %c0_6], %4 {strides = array<i32>} : memref<112x1536xf32, #tpu.memory_space<vmem>>, vector<16x1536xf32>,
    %c0_7 = arith.constant 0 : index
    %c0_8 = arith.constant 0 : index
    %c2 = arith.constant 2 : index
    %6 = vector.load %arg1[%c0_7, %c0_8, %c2] : memref<1x16x1560xf32, #tpu.memory_space<vmem>>, vector<1x16x1536xf32>
    %7 = vector.shape_cast %6 : vector<1x16x1536xf32> to vector<16x1536xf32>
    %c32 = arith.constant 32 : index
    %c0_9 = arith.constant 0 : index
    %8 = vector.load %arg5[%c32, %c0_9] : memref<112x1536xf32, #tpu.memory_space<vmem>>, vector<16x1536xf32>
    tpu.vector_store %arg5[%c32, %c0_9], %7 {strides = array<i32>} : memref<112x1536xf32, #tpu.memory_space<vmem>>, vector<16x1536xf32>,
    %c0_10 = arith.constant 0 : index
    %c0_11 = arith.constant 0 : index
    %c3 = arith.constant 3 : index
    %9 = vector.load %arg1[%c0_10, %c0_11, %c3] : memref<1x16x1560xf32, #tpu.memory_space<vmem>>, vector<1x16x1536xf32>
    %10 = vector.shape_cast %9 : vector<1x16x1536xf32> to vector<16x1536xf32>
    %c48 = arith.constant 48 : index
    %c0_12 = arith.constant 0 : index
    %11 = vector.load %arg5[%c48, %c0_12] : memref<112x1536xf32, #tpu.memory_space<vmem>>, vector<16x1536xf32>
    tpu.vector_store %arg5[%c48, %c0_12], %10 {strides = array<i32>} : memref<112x1536xf32, #tpu.memory_space<vmem>>, vector<16x1536xf32>,
    %c0_13 = arith.constant 0 : index
    %c0_14 = arith.constant 0 : index
    %c4 = arith.constant 4 : index
    %12 = vector.load %arg1[%c0_13, %c0_14, %c4] : memref<1x16x1560xf32, #tpu.memory_space<vmem>>, vector<1x16x1536xf32>
    %13 = vector.shape_cast %12 : vector<1x16x1536xf32> to vector<16x1536xf32>
    %c64 = arith.constant 64 : index
    %c0_15 = arith.constant 0 : index
    %14 = vector.load %arg5[%c64, %c0_15] : memref<112x1536xf32, #tpu.memory_space<vmem>>, vector<16x1536xf32>
    tpu.vector_store %arg5[%c64, %c0_15], %13 {strides = array<i32>} : memref<112x1536xf32, #tpu.memory_space<vmem>>, vector<16x1536xf32>,
    %c0_16 = arith.constant 0 : index
    %c0_17 = arith.constant 0 : index
    %c5 = arith.constant 5 : index
    %15 = vector.load %arg1[%c0_16, %c0_17, %c5] : memref<1x16x1560xf32, #tpu.memory_space<vmem>>, vector<1x16x1536xf32>
    %16 = vector.shape_cast %15 : vector<1x16x1536xf32> to vector<16x1536xf32>
    %c80 = arith.constant 80 : index
    %c0_18 = arith.constant 0 : index
    %17 = vector.load %arg5[%c80, %c0_18] : memref<112x1536xf32, #tpu.memory_space<vmem>>, vector<16x1536xf32>
    tpu.vector_store %arg5[%c80, %c0_18], %16 {strides = array<i32>} : memref<112x1536xf32, #tpu.memory_space<vmem>>, vector<16x1536xf32>,
    %c0_19 = arith.constant 0 : index
    %c0_20 = arith.constant 0 : index
    %c6 = arith.constant 6 : index
    %18 = vector.load %arg1[%c0_19, %c0_20, %c6] : memref<1x16x1560xf32, #tpu.memory_space<vmem>>, vector<1x16x1536xf32>
    %19 = vector.shape_cast %18 : vector<1x16x1536xf32> to vector<16x1536xf32>
    %c96 = arith.constant 96 : index
    %c0_21 = arith.constant 0 : index
    %20 = vector.load %arg5[%c96, %c0_21] : memref<112x1536xf32, #tpu.memory_space<vmem>>, vector<16x1536xf32>
    tpu.vector_store %arg5[%c96, %c0_21], %19 {strides = array<i32>} : memref<112x1536xf32, #tpu.memory_space<vmem>>, vector<16x1536xf32>,
    %c0_22 = arith.constant 0 : index
    %c0_23 = arith.constant 0 : index
    %21 = vector.load %arg2[%c0_22, %c0_23] : memref<112x112xf32, #tpu.memory_space<vmem>>, vector<112x112xf32>
    %c0_24 = arith.constant 0 : index
    %c0_25 = arith.constant 0 : index
    %22 = vector.load %arg5[%c0_24, %c0_25] : memref<112x1536xf32, #tpu.memory_space<vmem>>, vector<112x1536xf32>
    %cst = arith.constant dense<0.000000e+00> : vector<112x1536xf32>
    %23 = tpu.matmul %21, %22, %cst {dimension_numbers = #tpu.dot_dimension_numbers<[1], [0], [0], [1], [0, 0, 1, 1], [], []>} : vector<112x112xf32>, vector<112x1536xf32>, vector<112x1536xf32> -> vector<112x1536xf32>
    %c0_26 = arith.constant 0 : index
    %c0_27 = arith.constant 0 : index
    %24 = vector.load %arg6[%c0_26, %c0_27] : memref<112x1536xf32, #tpu.memory_space<vmem>>, vector<112x1536xf32>
    tpu.vector_store %arg6[%c0_26, %c0_27], %23 {strides = array<i32>} : memref<112x1536xf32, #tpu.memory_space<vmem>>, vector<112x1536xf32>,
    %c0_28 = arith.constant 0 : index
    %c0_29 = arith.constant 0 : index
    %25 = vector.load %arg6[%c0_28, %c0_29] : memref<112x1536xf32, #tpu.memory_space<vmem>>, vector<16x1280xf32>
    %c16_30 = arith.constant 16 : index
    %c40 = arith.constant 40 : index
    %26 = vector.load %arg6[%c16_30, %c40] : memref<112x1536xf32, #tpu.memory_space<vmem>>, vector<16x1280xf32>
    %27 = arith.addf %25, %26 : vector<16x1280xf32>
    %c32_31 = arith.constant 32 : index
    %c80_32 = arith.constant 80 : index
    %28 = vector.load %arg6[%c32_31, %c80_32] : memref<112x1536xf32, #tpu.memory_space<vmem>>, vector<16x1280xf32>
    %29 = arith.addf %27, %28 : vector<16x1280xf32>
    %c48_33 = arith.constant 48 : index
    %c120 = arith.constant 120 : index
    %30 = vector.load %arg6[%c48_33, %c120] : memref<112x1536xf32, #tpu.memory_space<vmem>>, vector<16x1280xf32>
    %31 = arith.addf %29, %30 : vector<16x1280xf32>
    %c64_34 = arith.constant 64 : index
    %c160 = arith.constant 160 : index
    %32 = vector.load %arg6[%c64_34, %c160] : memref<112x1536xf32, #tpu.memory_space<vmem>>, vector<16x1280xf32>
    %33 = arith.addf %31, %32 : vector<16x1280xf32>
    %c80_35 = arith.constant 80 : index
    %c200 = arith.constant 200 : index
    %34 = vector.load %arg6[%c80_35, %c200] : memref<112x1536xf32, #tpu.memory_space<vmem>>, vector<16x1280xf32>
    %35 = arith.addf %33, %34 : vector<16x1280xf32>
    %c96_36 = arith.constant 96 : index
    %c240 = arith.constant 240 : index
    %36 = vector.load %arg6[%c96_36, %c240] : memref<112x1536xf32, #tpu.memory_space<vmem>>, vector<16x1280xf32>
    %37 = arith.addf %35, %36 : vector<16x1280xf32>
    %c0_37 = arith.constant 0 : index
    %c0_38 = arith.constant 0 : index
    %38 = vector.load %arg3[%c0_37, %c0_38] : memref<16x1xf32, #tpu.memory_space<vmem>>, vector<16x1xf32>
    %39 = vector.broadcast %38 : vector<16x1xf32> to vector<16x1280xf32>
    %40 = arith.addf %37, %39 : vector<16x1280xf32>
    %cst_39 = arith.constant 0.000000e+00 : f32
    %41 = vector.broadcast %cst_39 : f32 to vector<16x1280xf32>
    %42 = arith.maximumf %40, %41 : vector<16x1280xf32>
    %c0_40 = arith.constant 0 : index
    %c0_41 = arith.constant 0 : index
    %c0_42 = arith.constant 0 : index
    %43 = vector.load %arg4[%c0_40, %c0_41, %c0_42] : memref<1x16x1280xf32, #tpu.memory_space<vmem>>, vector<1x16x1280xf32>
    %44 = vector.shape_cast %43 : vector<1x16x1280xf32> to vector<16x1280xf32>
    %45 = vector.shape_cast %42 : vector<16x1280xf32> to vector<1x16x1280xf32>
    tpu.vector_store %arg4[%c0_40, %c0_41, %c0_42], %45 {strides = array<i32>} : memref<1x16x1280xf32, #tpu.memory_space<vmem>>, vector<1x16x1280xf32>,
    return
  }
  func.func @transform_0(%arg0: i32) -> (i32, i32, i32) {
    %c0_i32 = arith.constant 0 : i32
    %c0_i32_0 = arith.constant 0 : i32
    %c0_i32_1 = arith.constant 0 : i32
    return %arg0, %c0_i32, %c0_i32_0 : i32, i32, i32
  }
  func.func @transform_1(%arg0: i32) -> (i32, i32) {
    %c0_i32 = arith.constant 0 : i32
    %c0_i32_0 = arith.constant 0 : i32
    %c0_i32_1 = arith.constant 0 : i32
    return %c0_i32, %c0_i32_0 : i32, i32
  }
  func.func @transform_2(%arg0: i32) -> (i32, i32) {
    %c0_i32 = arith.constant 0 : i32
    %c0_i32_0 = arith.constant 0 : i32
    %c0_i32_1 = arith.constant 0 : i32
    return %c0_i32, %c0_i32_0 : i32, i32
  }
  func.func @transform_3(%arg0: i32) -> (i32, i32, i32) {
    %c0_i32 = arith.constant 0 : i32
    %c0_i32_0 = arith.constant 0 : i32
    %c0_i32_1 = arith.constant 0 : i32
    return %arg0, %c0_i32, %c0_i32_0 : i32, i32, i32
  }
}

</mosaic_0001>

<llo_original>
// kernel: model_forward.1
$region0: #{model_forward.1}
  #allocation0 [shape = 'u32[]', space=smem, size = 0x4, offset = 0x4, fixed_abs, tag = 'smem constant byte address 0x4 - core index']
  #allocation1 [shape = 'u32[144,128]{1,0:T(1,128)}', space=vmem, size = 0x12000, scoped, tag = 'internal scratch']
  #allocation2 [shape = 'f32[112,1536]{1,0:T(8,128)}', space=vmem, size = 0xa8000, scoped, tag = 'scratch operand']
  #allocation3 [shape = 'f32[112,1536]{1,0:T(8,128)}', space=vmem, size = 0xa8000, scoped, tag = 'scratch operand']
  %s0 = inlined_call_operand.vmem [shape: f32[2,16,1560], index: 0, kind: input, shape index: {}]
  %s1 = inlined_call_operand.vmem [shape: f32[112,112], index: 1, kind: input, shape index: {}]
  %s2 = inlined_call_operand.vmem [shape: f32[16,1], index: 2, kind: input, shape index: {}]
  %s3 = inlined_call_operand.vmem [shape: f32[2,16,1280], index: 3, kind: output, shape index: {}]
  %s4 = sld [smem:[#allocation0]]
  $region45: #{model_forward.1} parent=0
    _
  %s6 = ssub.s32 1, %s4
  %s7 = scalar_select 0, %s6, %s4
  loop: start=0, step=1, limit=4
  $region2: #{model_forward.1} parent=0 // loop_pre_header
    _
  $region3: #{model_forward.1} parent=0 // loop_header
    %s9 = sphi 0, %s13
    %p10 = scmp.ge.s32.totalorder %s9, 4
    %s19 = sphi 0, %s21
    %s22 = sphi 0, %s19
    %s23 = sphi 0, %s22
    %s39 = sphi 0, %s23
    %s43 = sphi 0, %s43
    %s45 = sphi 0, %s43
    %s46 = sphi 0, %s45
    %s60 = sphi 0, %s46
    %s64 = sphi 0, %s64
    %s66 = sphi 0, %s64
    %s67 = sphi 0, %s66
    %s81 = sphi 0, %s67
    %s87 = sphi 0, %s89
    %s90 = sphi 0, %s87
    %s91 = sphi 0, %s90
    %s107 = sphi 0, %s91
  $region4: #{model_forward.1} parent=0 // loop_header_branch
    %12 = sbr.rel (%p10) target = $region8
  $region5: #{model_forward.1} parent=0 // loop_body
    %s14 = ssub.s32 %s9, 1
    %s15 = ssub.s32 %s9, 2
    %s16 = sadd.s32 %s9, 1
    %s17 = ssub.s32 %s9, %s16
    %p18 = scmp.eq.s32.totalorder %s17, 0
    %s20 = sadd.s32 %s19, 1
    %s21 = scalar_select %p18, %s19, %s20
    %p24 = pneg %p18
    %p25 = scmp.eq.s32.totalorder %s9, 1
    %p26 = por %p24, %p25
    %p27 = scmp.ne.s32.totalorder %s19, %s22
    %p28 = scmp.eq.s32.totalorder %s9, 0
    %p29 = por %p27, %p28
    %p30 = scmp.ne.s32.totalorder %s19, %s22
    %p31 = scmp.eq.s32.totalorder %s14, 1
    %p32 = por %p30, %p31
    %p33 = scmp.ne.s32.totalorder %s22, %s23
    %p34 = scmp.eq.s32.totalorder %s14, 0
    %p35 = por %p33, %p34
    %p36 = scmp.ne.s32.totalorder %s22, %s23
    %p37 = scmp.eq.s32.totalorder %s15, 1
    %p38 = por %p36, %p37
    %p40 = scmp.ne.s32.totalorder %s23, %s39
    %p41 = scmp.eq.s32.totalorder %s15, 0
    %p42 = por %p40, %p41
    %s44 = sadd.s32 %s43, 1
    %p47 = scmp.eq.s32.totalorder %s9, 1
    %p48 = scmp.ne.s32.totalorder %s43, %s45
    %p49 = scmp.eq.s32.totalorder %s9, 0
    %p50 = por %p48, %p49
    %p51 = scmp.ne.s32.totalorder %s43, %s45
    %p52 = scmp.eq.s32.totalorder %s14, 1
    %p53 = por %p51, %p52
    %p54 = scmp.ne.s32.totalorder %s45, %s46
    %p55 = scmp.eq.s32.totalorder %s14, 0
    %p56 = por %p54, %p55
    %p57 = scmp.ne.s32.totalorder %s45, %s46
    %p58 = scmp.eq.s32.totalorder %s15, 1
    %p59 = por %p57, %p58
    %p61 = scmp.ne.s32.totalorder %s46, %s60
    %p62 = scmp.eq.s32.totalorder %s15, 0
    %p63 = por %p61, %p62
    %s65 = sadd.s32 %s64, 1
    %p68 = scmp.eq.s32.totalorder %s9, 1
    %p69 = scmp.ne.s32.totalorder %s64, %s66
    %p70 = scmp.eq.s32.totalorder %s9, 0
    %p71 = por %p69, %p70
    %p72 = scmp.ne.s32.totalorder %s64, %s66
    %p73 = scmp.eq.s32.totalorder %s14, 1
    %p74 = por %p72, %p73
    %p75 = scmp.ne.s32.totalorder %s66, %s67
    %p76 = scmp.eq.s32.totalorder %s14, 0
    %p77 = por %p75, %p76
    %p78 = scmp.ne.s32.totalorder %s66, %s67
    %p79 = scmp.eq.s32.totalorder %s15, 1
    %p80 = por %p78, %p79
    %p82 = scmp.ne.s32.totalorder %s67, %s81
    %p83 = scmp.eq.s32.totalorder %s15, 0
    %p84 = por %p82, %p83
    %s85 = ssub.s32 %s9, %s16
    %p86 = scmp.eq.s32.totalorder %s85, 0
    %s88 = sadd.s32 %s87, 1
    %s89 = scalar_select %p86, %s87, %s88
    %p92 = pneg %p86
    %p93 = scmp.eq.s32.totalorder %s9, 1
    %p94 = por %p92, %p93
    %p95 = scmp.ne.s32.totalorder %s87, %s90
    %p96 = scmp.eq.s32.totalorder %s9, 0
    %p97 = por %p95, %p96
    %p98 = scmp.ne.s32.totalorder %s87, %s90
    %p99 = scmp.eq.s32.totalorder %s14, 1
    %p100 = por %p98, %p99
    %p101 = scmp.ne.s32.totalorder %s90, %s91
    %p102 = scmp.eq.s32.totalorder %s14, 0
    %p103 = por %p101, %p102
    %p104 = scmp.ne.s32.totalorder %s90, %s91
    %p105 = scmp.eq.s32.totalorder %s15, 1
    %p106 = por %p104, %p105
    %p108 = scmp.ne.s32.totalorder %s91, %s107
    %p109 = scmp.eq.s32.totalorder %s15, 0
    %p110 = por %p108, %p109
    %p111 = scmp.le.s32.totalorder 1, %s9
    %p112 = scmp.lt.s32.totalorder %s9, 3
    %p113 = pnand %p111, %p112
    %p114 = pneg %p113
    // Predicated region
    $region9: #{model_forward.1} parent=5 // pred_check
      _
    $region10: #{model_forward.1} parent=5 // pred_check_branch
      %116 = sbr.rel (%p113) target = $region12
    $region11: #{model_forward.1} parent=5 // pred_region
      %s117 = ssub.s32 %s9, 1
      // Predicated region
      $region13: #{model_forward.1} parent=11 // pred_check
        %p118 = pneg %p56
      $region14: #{model_forward.1} parent=11 // pred_check_branch
        %120 = sbr.rel (%p118) target = $region16
      $region15: #{model_forward.1} parent=11 // pred_region
        _
      $region16: #{model_forward.1} parent=11 // pred_fallthru
        _
      // Predicated region
      $region17: #{model_forward.1} parent=11 // pred_check
        %p121 = pneg %p77
      $region18: #{model_forward.1} parent=11 // pred_check_branch
        %123 = sbr.rel (%p121) target = $region20
      $region19: #{model_forward.1} parent=11 // pred_region
        _
      $region20: #{model_forward.1} parent=11 // pred_fallthru
        _
    $region12: #{model_forward.1} parent=5 // pred_fallthru
      _
    %p124 = scmp.lt.s32.totalorder %s9, 2
    // Predicated region
    $region21: #{model_forward.1} parent=5 // pred_check
      %p125 = pneg %p124
    $region22: #{model_forward.1} parent=5 // pred_check_branch
      %127 = sbr.rel (%p125) target = $region24
    $region23: #{model_forward.1} parent=5 // pred_region
      // Predicated region
      $region25: #{model_forward.1} parent=23 // pred_check
        %p128 = pneg %p29
      $region26: #{model_forward.1} parent=23 // pred_check_branch
        %130 = sbr.rel (%p128) target = $region28
      $region27: #{model_forward.1} parent=23 // pred_region
        %p131 = scmp.lt.s32.totalorder %s9, 1
        %s132 = scalar_select %p131, %s9, 1
        %s133 = smul.addr %s132, 26
        %s134 = smul.addr %s133, 8
        %s135 = scalar_lea.vmem %s0, %s134
      $region28: #{model_forward.1} parent=23 // pred_fallthru
        _
    $region24: #{model_forward.1} parent=5 // pred_fallthru
      _
    %p136 = scmp.le.s32.totalorder 1, %s9
    %p137 = scmp.lt.s32.totalorder %s9, 3
    %p138 = pnand %p136, %p137
    %p139 = pneg %p138
    // Predicated region
    $region29: #{model_forward.1} parent=5 // pred_check
      _
    $region30: #{model_forward.1} parent=5 // pred_check_branch
      %141 = sbr.rel (%p138) target = $region32
    $region31: #{model_forward.1} parent=5 // pred_region
      %s142 = ssub.s32 %s9, 1
      %p143 = scmp.lt.s32.totalorder %s14, 1
      %s144 = scalar_select %p143, %s14, 1
      %s145 = smul.addr %s144, 26
      %s146 = smul.addr %s145, 8
      %s147 = scalar_lea.vmem %s0, %s146
      %p148 = pneg %p35
      %p149 = pneg %p32
      %p150 = pneg %p56
      %p151 = pneg %p53
      %p152 = pneg %p77
      %p153 = pneg %p74
      %p154 = pneg %p103
      %p155 = pneg %p100
      %p156 = scmp.lt.s32.totalorder %s14, 1
      %s157 = scalar_select %p156, %s14, 1
      %s158 = smul.addr %s157, 20
      %s159 = smul.addr %s158, 8
      %s160 = scalar_lea.vmem %s3, %s159
      %p161 = scmp.lt.s32.totalorder %s14, 1
      %s162 = scalar_select %p161, %s14, 1
      %s163 = smul.addr %s162, 26
      %s164 = smul.addr %s163, 8
      %s165 = scalar_lea.vmem %s0, %s164
      %p166 = scmp.lt.s32.totalorder %s14, 1
      %s167 = scalar_select %p166, %s14, 1
      %s168 = smul.addr %s167, 20
      %s169 = smul.addr %s168, 8
      %s170 = scalar_lea.vmem %s3, %s169
      %v171 = vld [vmem:[%s165] sm:$0xff]
      %v172 = vld [vmem:[%s165 + $0x8] sm:$0xff]
      %v173 = vld [vmem:[%s165 + $0x10] sm:$0xff]
      %v174 = vld [vmem:[%s165 + $0x18] sm:$0xff]
      %v175 = vld [vmem:[%s165 + $0x20] sm:$0xff]
      %v176 = vld [vmem:[%s165 + $0x28] sm:$0xff]
      %v177 = vld [vmem:[%s165 + $0x30] sm:$0xff]
      %v178 = vld [vmem:[%s165 + $0x38] sm:$0xff]
      %v179 = vld [vmem:[%s165 + $0x40] sm:$0xff]
      %v180 = vld [vmem:[%s165 + $0x48] sm:$0xff]
      %v181 = vld [vmem:[%s165 + $0x50] sm:$0xff]
      %v182 = vld [vmem:[%s165 + $0x58] sm:$0xff]
      %v183 = vld [vmem:[%s165 + $0x68] sm:$0xff]
      %v184 = vld [vmem:[%s165 + $0x70] sm:$0xff]
      %v185 = vld [vmem:[%s165 + $0x78] sm:$0xff]
      %v186 = vld [vmem:[%s165 + $0x80] sm:$0xff]
      %v187 = vld [vmem:[%s165 + $0x88] sm:$0xff]
      %v188 = vld [vmem:[%s165 + $0x90] sm:$0xff]
      %v189 = vld [vmem:[%s165 + $0x98] sm:$0xff]
      %v190 = vld [vmem:[%s165 + $0xa0] sm:$0xff]
      %v191 = vld [vmem:[%s165 + $0xa8] sm:$0xff]
      %v192 = vld [vmem:[%s165 + $0xb0] sm:$0xff]
      %v193 = vld [vmem:[%s165 + $0xb8] sm:$0xff]
      %v194 = vld [vmem:[%s165 + $0xc0] sm:$0xff]
      %195 = vst [vmem:[#allocation2] sm:$0xff] %v171
      %196 = vst [vmem:[#allocation2 + $0x8] sm:$0xff] %v172
      %197 = vst [vmem:[#allocation2 + $0x10] sm:$0xff] %v173
      %198 = vst [vmem:[#allocation2 + $0x18] sm:$0xff] %v174
      %199 = vst [vmem:[#allocation2 + $0x20] sm:$0xff] %v175
      %200 = vst [vmem:[#allocation2 + $0x28] sm:$0xff] %v176
      %201 = vst [vmem:[#allocation2 + $0x30] sm:$0xff] %v177
      %202 = vst [vmem:[#allocation2 + $0x38] sm:$0xff] %v178
      %203 = vst [vmem:[#allocation2 + $0x40] sm:$0xff] %v179
      %204 = vst [vmem:[#allocation2 + $0x48] sm:$0xff] %v180
      %205 = vst [vmem:[#allocation2 + $0x50] sm:$0xff] %v181
      %206 = vst [vmem:[#allocation2 + $0x58] sm:$0xff] %v182
      %207 = vst [vmem:[#allocation2 + $0x60] sm:$0xff] %v183
      %208 = vst [vmem:[#allocation2 + $0x68] sm:$0xff] %v184
      %209 = vst [vmem:[#allocation2 + $0x70] sm:$0xff] %v185
      %210 = vst [vmem:[#allocation2 + $0x78] sm:$0xff] %v186
      %211 = vst [vmem:[#allocation2 + $0x80] sm:$0xff] %v187
      %212 = vst [vmem:[#allocation2 + $0x88] sm:$0xff] %v188
      %213 = vst [vmem:[#allocation2 + $0x90] sm:$0xff] %v189
      %214 = vst [vmem:[#allocation2 + $0x98] sm:$0xff] %v190
      %215 = vst [vmem:[#allocation2 + $0xa0] sm:$0xff] %v191
      %216 = vst [vmem:[#allocation2 + $0xa8] sm:$0xff] %v192
      %217 = vst [vmem:[#allocation2 + $0xb0] sm:$0xff] %v193
      %218 = vst [vmem:[#allocation2 + $0xb8] sm:$0xff] %v194
      %v219 = vld [vmem:[%s165] sm:$0xff]
      %v220 = vld [vmem:[%s165 + $0x8] sm:$0xff]
      %v221 = vld [vmem:[%s165 + $0x10] sm:$0xff]
      %v222 = vld [vmem:[%s165 + $0x18] sm:$0xff]
      %v223 = vld [vmem:[%s165 + $0x20] sm:$0xff]
      %v224 = vld [vmem:[%s165 + $0x28] sm:$0xff]
      %v225 = vld [vmem:[%s165 + $0x30] sm:$0xff]
      %v226 = vld [vmem:[%s165 + $0x38] sm:$0xff]
      %v227 = vld [vmem:[%s165 + $0x40] sm:$0xff]
      %v228 = vld [vmem:[%s165 + $0x48] sm:$0xff]
      %v229 = vld [vmem:[%s165 + $0x50] sm:$0xff]
      %v230 = vld [vmem:[%s165 + $0x58] sm:$0xff]
      %v231 = vld [vmem:[%s165 + $0x60] sm:$0xff]
      %v232 = vld [vmem:[%s165 + $0x68] sm:$0xff]
      %v233 = vld [vmem:[%s165 + $0x70] sm:$0xff]
      %v234 = vld [vmem:[%s165 + $0x78] sm:$0xff]
      %v235 = vld [vmem:[%s165 + $0x80] sm:$0xff]
      %v236 = vld [vmem:[%s165 + $0x88] sm:$0xff]
      %v237 = vld [vmem:[%s165 + $0x90] sm:$0xff]
      %v238 = vld [vmem:[%s165 + $0x98] sm:$0xff]
      %v239 = vld [vmem:[%s165 + $0xa0] sm:$0xff]
      %v240 = vld [vmem:[%s165 + $0xa8] sm:$0xff]
      %v241 = vld [vmem:[%s165 + $0xb0] sm:$0xff]
      %v242 = vld [vmem:[%s165 + $0xb8] sm:$0xff]
      %v243 = vld [vmem:[%s165 + $0xc0] sm:$0xff]
      %v244 = vld [vmem:[%s165 + $0xc8] sm:$0xff]
      %271 = vrot.lane.b32.xlu0 %v219, 127
      %v272 = vpop.permute.xlu0 %271
      %273 = vrot.lane.b32.xlu0 %v220, 127
      %v274 = vpop.permute.xlu0 %273
      %275 = vrot.lane.b32.xlu0 %v221, 127
      %v276 = vpop.permute.xlu0 %275
      %277 = vrot.lane.b32.xlu0 %v222, 127
      %v278 = vpop.permute.xlu0 %277
      %279 = vrot.lane.b32.xlu0 %v223, 127
      %v280 = vpop.permute.xlu0 %279
      %281 = vrot.lane.b32.xlu0 %v224, 127
      %v282 = vpop.permute.xlu0 %281
      %283 = vrot.lane.b32.xlu0 %v225, 127
      %v284 = vpop.permute.xlu0 %283
      %285 = vrot.lane.b32.xlu0 %v226, 127
      %v286 = vpop.permute.xlu0 %285
      %287 = vrot.lane.b32.xlu0 %v227, 127
      %v288 = vpop.permute.xlu0 %287
      %289 = vrot.lane.b32.xlu0 %v228, 127
      %v290 = vpop.permute.xlu0 %289
      %291 = vrot.lane.b32.xlu0 %v229, 127
      %v292 = vpop.permute.xlu0 %291
      %293 = vrot.lane.b32.xlu0 %v230, 127
      %v294 = vpop.permute.xlu0 %293
      %295 = vrot.lane.b32.xlu0 %v231, 127
      %v296 = vpop.permute.xlu0 %295
      %297 = vrot.lane.b32.xlu0 %v232, 127
      %v298 = vpop.permute.xlu0 %297
      %299 = vrot.lane.b32.xlu0 %v233, 127
      %v300 = vpop.permute.xlu0 %299
      %301 = vrot.lane.b32.xlu0 %v234, 127
      %v302 = vpop.permute.xlu0 %301
      %303 = vrot.lane.b32.xlu0 %v235, 127
      %v304 = vpop.permute.xlu0 %303
      %305 = vrot.lane.b32.xlu0 %v236, 127
      %v306 = vpop.permute.xlu0 %305
      %307 = vrot.lane.b32.xlu0 %v237, 127
      %v308 = vpop.permute.xlu0 %307
      %309 = vrot.lane.b32.xlu0 %v238, 127
      %v310 = vpop.permute.xlu0 %309
      %311 = vrot.lane.b32.xlu0 %v239, 127
      %v312 = vpop.permute.xlu0 %311
      %313 = vrot.lane.b32.xlu0 %v240, 127
      %v314 = vpop.permute.xlu0 %313
      %315 = vrot.lane.b32.xlu0 %v241, 127
      %v316 = vpop.permute.xlu0 %315
      %317 = vrot.lane.b32.xlu0 %v242, 127
      %v318 = vpop.permute.xlu0 %317
      %319 = vrot.lane.b32.xlu0 %v243, 127
      %v320 = vpop.permute.xlu0 %319
      %321 = vrot.lane.b32.xlu0 %v244, 127
      %v322 = vpop.permute.xlu0 %321
      %vm323 = vcmask 1039360
      %v324 = vsel %vm323, %v272, %v274
      %v325 = vsel %vm323, %v274, %v276
      %v326 = vsel %vm323, %v276, %v278
      %v327 = vsel %vm323, %v278, %v280
      %v328 = vsel %vm323, %v280, %v282
      %v329 = vsel %vm323, %v282, %v284
      %v330 = vsel %vm323, %v284, %v286
      %v331 = vsel %vm323, %v286, %v288
      %v332 = vsel %vm323, %v288, %v290
      %v333 = vsel %vm323, %v290, %v292
      %v334 = vsel %vm323, %v292, %v294
      %v335 = vsel %vm323, %v294, %v296
      %v336 = vsel %vm323, %v298, %v300
      %v337 = vsel %vm323, %v300, %v302
      %v338 = vsel %vm323, %v302, %v304
      %v339 = vsel %vm323, %v304, %v306
      %v340 = vsel %vm323, %v306, %v308
      %v341 = vsel %vm323, %v308, %v310
      %v342 = vsel %vm323, %v310, %v312
      %v343 = vsel %vm323, %v312, %v314
      %v344 = vsel %vm323, %v314, %v316
      %v345 = vsel %vm323, %v316, %v318
      %v346 = vsel %vm323, %v318, %v320
      %v347 = vsel %vm323, %v320, %v322
      %372 = vst [vmem:[#allocation2 + $0xc0] sm:$0xff] %v324
      %373 = vst [vmem:[#allocation2 + $0xc8] sm:$0xff] %v325
      %374 = vst [vmem:[#allocation2 + $0xd0] sm:$0xff] %v326
      %375 = vst [vmem:[#allocation2 + $0xd8] sm:$0xff] %v327
      %376 = vst [vmem:[#allocation2 + $0xe0] sm:$0xff] %v328
      %377 = vst [vmem:[#allocation2 + $0xe8] sm:$0xff] %v329
      %378 = vst [vmem:[#allocation2 + $0xf0] sm:$0xff] %v330
      %379 = vst [vmem:[#allocation2 + $0xf8] sm:$0xff] %v331
      %380 = vst [vmem:[#allocation2 + $0x100] sm:$0xff] %v332
      %381 = vst [vmem:[#allocation2 + $0x108] sm:$0xff] %v333
      %382 = vst [vmem:[#allocation2 + $0x110] sm:$0xff] %v334
      %383 = vst [vmem:[#allocation2 + $0x118] sm:$0xff] %v335
      %384 = vst [vmem:[#allocation2 + $0x120] sm:$0xff] %v336
      %385 = vst [vmem:[#allocation2 + $0x128] sm:$0xff] %v337
      %386 = vst [vmem:[#allocation2 + $0x130] sm:$0xff] %v338
      %387 = vst [vmem:[#allocation2 + $0x138] sm:$0xff] %v339
      %388 = vst [vmem:[#allocation2 + $0x140] sm:$0xff] %v340
      %389 = vst [vmem:[#allocation2 + $0x148] sm:$0xff] %v341
      %390 = vst [vmem:[#allocation2 + $0x150] sm:$0xff] %v342
      %391 = vst [vmem:[#allocation2 + $0x158] sm:$0xff] %v343
      %392 = vst [vmem:[#allocation2 + $0x160] sm:$0xff] %v344
      %393 = vst [vmem:[#allocation2 + $0x168] sm:$0xff] %v345
      %394 = vst [vmem:[#allocation2 + $0x170] sm:$0xff] %v346
      %395 = vst [vmem:[#allocation2 + $0x178] sm:$0xff] %v347
      %v396 = vld [vmem:[%s165] sm:$0xff]
      %v397 = vld [vmem:[%s165 + $0x8] sm:$0xff]
      %v398 = vld [vmem:[%s165 + $0x10] sm:$0xff]
      %v399 = vld [vmem:[%s165 + $0x18] sm:$0xff]
      %v400 = vld [vmem:[%s165 + $0x20] sm:$0xff]
      %v401 = vld [vmem:[%s165 + $0x28] sm:$0xff]
      %v402 = vld [vmem:[%s165 + $0x30] sm:$0xff]
      %v403 = vld [vmem:[%s165 + $0x38] sm:$0xff]
      %v404 = vld [vmem:[%s165 + $0x40] sm:$0xff]
      %v405 = vld [vmem:[%s165 + $0x48] sm:$0xff]
      %v406 = vld [vmem:[%s165 + $0x50] sm:$0xff]
      %v407 = vld [vmem:[%s165 + $0x58] sm:$0xff]
      %v408 = vld [vmem:[%s165 + $0x60] sm:$0xff]
      %v409 = vld [vmem:[%s165 + $0x68] sm:$0xff]
      %v410 = vld [vmem:[%s165 + $0x70] sm:$0xff]
      %v411 = vld [vmem:[%s165 + $0x78] sm:$0xff]
      %v412 = vld [vmem:[%s165 + $0x80] sm:$0xff]
      %v413 = vld [vmem:[%s165 + $0x88] sm:$0xff]
      %v414 = vld [vmem:[%s165 + $0x90] sm:$0xff]
      %v415 = vld [vmem:[%s165 + $0x98] sm:$0xff]
      %v416 = vld [vmem:[%s165 + $0xa0] sm:$0xff]
      %v417 = vld [vmem:[%s165 + $0xa8] sm:$0xff]
      %v418 = vld [vmem:[%s165 + $0xb0] sm:$0xff]
      %v419 = vld [vmem:[%s165 + $0xb8] sm:$0xff]
      %v420 = vld [vmem:[%s165 + $0xc0] sm:$0xff]
      %v421 = vld [vmem:[%s165 + $0xc8] sm:$0xff]
      %448 = vrot.lane.b32.xlu0 %v396, 126
      %v449 = vpop.permute.xlu0 %448
      %450 = vrot.lane.b32.xlu0 %v397, 126
      %v451 = vpop.permute.xlu0 %450
      %452 = vrot.lane.b32.xlu0 %v398, 126
      %v453 = vpop.permute.xlu0 %452
      %454 = vrot.lane.b32.xlu0 %v399, 126
      %v455 = vpop.permute.xlu0 %454
      %456 = vrot.lane.b32.xlu0 %v400, 126
      %v457 = vpop.permute.xlu0 %456
      %458 = vrot.lane.b32.xlu0 %v401, 126
      %v459 = vpop.permute.xlu0 %458
      %460 = vrot.lane.b32.xlu0 %v402, 126
      %v461 = vpop.permute.xlu0 %460
      %462 = vrot.lane.b32.xlu0 %v403, 126
      %v463 = vpop.permute.xlu0 %462
      %464 = vrot.lane.b32.xlu0 %v404, 126
      %v465 = vpop.permute.xlu0 %464
      %466 = vrot.lane.b32.xlu0 %v405, 126
      %v467 = vpop.permute.xlu0 %466
      %468 = vrot.lane.b32.xlu0 %v406, 126
      %v469 = vpop.permute.xlu0 %468
      %470 = vrot.lane.b32.xlu0 %v407, 126
      %v471 = vpop.permute.xlu0 %470
      %472 = vrot.lane.b32.xlu0 %v408, 126
      %v473 = vpop.permute.xlu0 %472
      %474 = vrot.lane.b32.xlu0 %v409, 126
      %v475 = vpop.permute.xlu0 %474
      %476 = vrot.lane.b32.xlu0 %v410, 126
      %v477 = vpop.permute.xlu0 %476
      %478 = vrot.lane.b32.xlu0 %v411, 126
      %v479 = vpop.permute.xlu0 %478
      %480 = vrot.lane.b32.xlu0 %v412, 126
      %v481 = vpop.permute.xlu0 %480
      %482 = vrot.lane.b32.xlu0 %v413, 126
      %v483 = vpop.permute.xlu0 %482
      %484 = vrot.lane.b32.xlu0 %v414, 126
      %v485 = vpop.permute.xlu0 %484
      %486 = vrot.lane.b32.xlu0 %v415, 126
      %v487 = vpop.permute.xlu0 %486
      %488 = vrot.lane.b32.xlu0 %v416, 126
      %v489 = vpop.permute.xlu0 %488
      %490 = vrot.lane.b32.xlu0 %v417, 126
      %v491 = vpop.permute.xlu0 %490
      %492 = vrot.lane.b32.xlu0 %v418, 126
      %v493 = vpop.permute.xlu0 %492
      %494 = vrot.lane.b32.xlu0 %v419, 126
      %v495 = vpop.permute.xlu0 %494
      %496 = vrot.lane.b32.xlu0 %v420, 126
      %v497 = vpop.permute.xlu0 %496
      %498 = vrot.lane.b32.xlu0 %v421, 126
      %v499 = vpop.permute.xlu0 %498
      %vm500 = vcmask 1031168
      %v501 = vsel %vm500, %v449, %v451
      %v502 = vsel %vm500, %v451, %v453
      %v503 = vsel %vm500, %v453, %v455
      %v504 = vsel %vm500, %v455, %v457
      %v505 = vsel %vm500, %v457, %v459
      %v506 = vsel %vm500, %v459, %v461
      %v507 = vsel %vm500, %v461, %v463
      %v508 = vsel %vm500, %v463, %v465
      %v509 = vsel %vm500, %v465, %v467
      %v510 = vsel %vm500, %v467, %v469
      %v511 = vsel %vm500, %v469, %v471
      %v512 = vsel %vm500, %v471, %v473
      %v513 = vsel %vm500, %v475, %v477
      %v514 = vsel %vm500, %v477, %v479
      %v515 = vsel %vm500, %v479, %v481
      %v516 = vsel %vm500, %v481, %v483
      %v517 = vsel %vm500, %v483, %v485
      %v518 = vsel %vm500, %v485, %v487
      %v519 = vsel %vm500, %v487, %v489
      %v520 = vsel %vm500, %v489, %v491
      %v521 = vsel %vm500, %v491, %v493
      %v522 = vsel %vm500, %v493, %v495
      %v523 = vsel %vm500, %v495, %v497
      %v524 = vsel %vm500, %v497, %v499
      %549 = vst [vmem:[#allocation2 + $0x180] sm:$0xff] %v501
      %550 = vst [vmem:[#allocation2 + $0x188] sm:$0xff] %v502
      %551 = vst [vmem:[#allocation2 + $0x190] sm:$0xff] %v503
      %552 = vst [vmem:[#allocation2 + $0x198] sm:$0xff] %v504
      %553 = vst [vmem:[#allocation2 + $0x1a0] sm:$0xff] %v505
      %554 = vst [vmem:[#allocation2 + $0x1a8] sm:$0xff] %v506
      %555 = vst [vmem:[#allocation2 + $0x1b0] sm:$0xff] %v507
      %556 = vst [vmem:[#allocation2 + $0x1b8] sm:$0xff] %v508
      %557 = vst [vmem:[#allocation2 + $0x1c0] sm:$0xff] %v509
      %558 = vst [vmem:[#allocation2 + $0x1c8] sm:$0xff] %v510
      %559 = vst [vmem:[#allocation2 + $0x1d0] sm:$0xff] %v511
      %560 = vst [vmem:[#allocation2 + $0x1d8] sm:$0xff] %v512
      %561 = vst [vmem:[#allocation2 + $0x1e0] sm:$0xff] %v513
      %562 = vst [vmem:[#allocation2 + $0x1e8] sm:$0xff] %v514
      %563 = vst [vmem:[#allocation2 + $0x1f0] sm:$0xff] %v515
      %564 = vst [vmem:[#allocation2 + $0x1f8] sm:$0xff] %v516
      %565 = vst [vmem:[#allocation2 + $0x200] sm:$0xff] %v517
      %566 = vst [vmem:[#allocation2 + $0x208] sm:$0xff] %v518
      %567 = vst [vmem:[#allocation2 + $0x210] sm:$0xff] %v519
      %568 = vst [vmem:[#allocation2 + $0x218] sm:$0xff] %v520
      %569 = vst [vmem:[#allocation2 + $0x220] sm:$0xff] %v521
      %570 = vst [vmem:[#allocation2 + $0x228] sm:$0xff] %v522
      %571 = vst [vmem:[#allocation2 + $0x230] sm:$0xff] %v523
      %572 = vst [vmem:[#allocation2 + $0x238] sm:$0xff] %v524
      %v573 = vld [vmem:[%s165] sm:$0xff]
      %v574 = vld [vmem:[%s165 + $0x8] sm:$0xff]
      %v575 = vld [vmem:[%s165 + $0x10] sm:$0xff]
      %v576 = vld [vmem:[%s165 + $0x18] sm:$0xff]
      %v577 = vld [vmem:[%s165 + $0x20] sm:$0xff]
      %v578 = vld [vmem:[%s165 + $0x28] sm:$0xff]
      %v579 = vld [vmem:[%s165 + $0x30] sm:$0xff]
      %v580 = vld [vmem:[%s165 + $0x38] sm:$0xff]
      %v581 = vld [vmem:[%s165 + $0x40] sm:$0xff]
      %v582 = vld [vmem:[%s165 + $0x48] sm:$0xff]
      %v583 = vld [vmem:[%s165 + $0x50] sm:$0xff]
      %v584 = vld [vmem:[%s165 + $0x58] sm:$0xff]
      %v585 = vld [vmem:[%s165 + $0x60] sm:$0xff]
      %v586 = vld [vmem:[%s165 + $0x68] sm:$0xff]
      %v587 = vld [vmem:[%s165 + $0x70] sm:$0xff]
      %v588 = vld [vmem:[%s165 + $0x78] sm:$0xff]
      %v589 = vld [vmem:[%s165 + $0x80] sm:$0xff]
      %v590 = vld [vmem:[%s165 + $0x88] sm:$0xff]
      %v591 = vld [vmem:[%s165 + $0x90] sm:$0xff]
      %v592 = vld [vmem:[%s165 + $0x98] sm:$0xff]
      %v593 = vld [vmem:[%s165 + $0xa0] sm:$0xff]
      %v594 = vld [vmem:[%s165 + $0xa8] sm:$0xff]
      %v595 = vld [vmem:[%s165 + $0xb0] sm:$0xff]
      %v596 = vld [vmem:[%s165 + $0xb8] sm:$0xff]
      %v597 = vld [vmem:[%s165 + $0xc0] sm:$0xff]
      %v598 = vld [vmem:[%s165 + $0xc8] sm:$0xff]
      %625 = vrot.lane.b32.xlu0 %v573, 125
      %v626 = vpop.permute.xlu0 %625
      %627 = vrot.lane.b32.xlu0 %v574, 125
      %v628 = vpop.permute.xlu0 %627
      %629 = vrot.lane.b32.xlu0 %v575, 125
      %v630 = vpop.permute.xlu0 %629
      %631 = vrot.lane.b32.xlu0 %v576, 125
      %v632 = vpop.permute.xlu0 %631
      %633 = vrot.lane.b32.xlu0 %v577, 125
      %v634 = vpop.permute.xlu0 %633
      %635 = vrot.lane.b32.xlu0 %v578, 125
      %v636 = vpop.permute.xlu0 %635
      %637 = vrot.lane.b32.xlu0 %v579, 125
      %v638 = vpop.permute.xlu0 %637
      %639 = vrot.lane.b32.xlu0 %v580, 125
      %v640 = vpop.permute.xlu0 %639
      %641 = vrot.lane.b32.xlu0 %v581, 125
      %v642 = vpop.permute.xlu0 %641
      %643 = vrot.lane.b32.xlu0 %v582, 125
      %v644 = vpop.permute.xlu0 %643
      %645 = vrot.lane.b32.xlu0 %v583, 125
      %v646 = vpop.permute.xlu0 %645
      %647 = vrot.lane.b32.xlu0 %v584, 125
      %v648 = vpop.permute.xlu0 %647
      %649 = vrot.lane.b32.xlu0 %v585, 125
      %v650 = vpop.permute.xlu0 %649
      %651 = vrot.lane.b32.xlu0 %v586, 125
      %v652 = vpop.permute.xlu0 %651
      %653 = vrot.lane.b32.xlu0 %v587, 125
      %v654 = vpop.permute.xlu0 %653
      %655 = vrot.lane.b32.xlu0 %v588, 125
      %v656 = vpop.permute.xlu0 %655
      %657 = vrot.lane.b32.xlu0 %v589, 125
      %v658 = vpop.permute.xlu0 %657
      %659 = vrot.lane.b32.xlu0 %v590, 125
      %v660 = vpop.permute.xlu0 %659
      %661 = vrot.lane.b32.xlu0 %v591, 125
      %v662 = vpop.permute.xlu0 %661
      %663 = vrot.lane.b32.xlu0 %v592, 125
      %v664 = vpop.permute.xlu0 %663
      %665 = vrot.lane.b32.xlu0 %v593, 125
      %v666 = vpop.permute.xlu0 %665
      %667 = vrot.lane.b32.xlu0 %v594, 125
      %v668 = vpop.permute.xlu0 %667
      %669 = vrot.lane.b32.xlu0 %v595, 125
      %v670 = vpop.permute.xlu0 %669
      %671 = vrot.lane.b32.xlu0 %v596, 125
      %v672 = vpop.permute.xlu0 %671
      %673 = vrot.lane.b32.xlu0 %v597, 125
      %v674 = vpop.permute.xlu0 %673
      %675 = vrot.lane.b32.xlu0 %v598, 125
      %v676 = vpop.permute.xlu0 %675
      %vm677 = vcmask 1022976
      %v678 = vsel %vm677, %v626, %v628
      %v679 = vsel %vm677, %v628, %v630
      %v680 = vsel %vm677, %v630, %v632
      %v681 = vsel %vm677, %v632, %v634
      %v682 = vsel %vm677, %v634, %v636
      %v683 = vsel %vm677, %v636, %v638
      %v684 = vsel %vm677, %v638, %v640
      %v685 = vsel %vm677, %v640, %v642
      %v686 = vsel %vm677, %v642, %v644
      %v687 = vsel %vm677, %v644, %v646
      %v688 = vsel %vm677, %v646, %v648
      %v689 = vsel %vm677, %v648, %v650
      %v690 = vsel %vm677, %v652, %v654
      %v691 = vsel %vm677, %v654, %v656
      %v692 = vsel %vm677, %v656, %v658
      %v693 = vsel %vm677, %v658, %v660
      %v694 = vsel %vm677, %v660, %v662
      %v695 = vsel %vm677, %v662, %v664
      %v696 = vsel %vm677, %v664, %v666
      %v697 = vsel %vm677, %v666, %v668
      %v698 = vsel %vm677, %v668, %v670
      %v699 = vsel %vm677, %v670, %v672
      %v700 = vsel %vm677, %v672, %v674
      %v701 = vsel %vm677, %v674, %v676
      %726 = vst [vmem:[#allocation2 + $0x240] sm:$0xff] %v678
      %727 = vst [vmem:[#allocation2 + $0x248] sm:$0xff] %v679
      %728 = vst [vmem:[#allocation2 + $0x250] sm:$0xff] %v680
      %729 = vst [vmem:[#allocation2 + $0x258] sm:$0xff] %v681
      %730 = vst [vmem:[#allocation2 + $0x260] sm:$0xff] %v682
      %731 = vst [vmem:[#allocation2 + $0x268] sm:$0xff] %v683
      %732 = vst [vmem:[#allocation2 + $0x270] sm:$0xff] %v684
      %733 = vst [vmem:[#allocation2 + $0x278] sm:$0xff] %v685
      %734 = vst [vmem:[#allocation2 + $0x280] sm:$0xff] %v686
      %735 = vst [vmem:[#allocation2 + $0x288] sm:$0xff] %v687
      %736 = vst [vmem:[#allocation2 + $0x290] sm:$0xff] %v688
      %737 = vst [vmem:[#allocation2 + $0x298] sm:$0xff] %v689
      %738 = vst [vmem:[#allocation2 + $0x2a0] sm:$0xff] %v690
      %739 = vst [vmem:[#allocation2 + $0x2a8] sm:$0xff] %v691
      %740 = vst [vmem:[#allocation2 + $0x2b0] sm:$0xff] %v692
      %741 = vst [vmem:[#allocation2 + $0x2b8] sm:$0xff] %v693
      %742 = vst [vmem:[#allocation2 + $0x2c0] sm:$0xff] %v694
      %743 = vst [vmem:[#allocation2 + $0x2c8] sm:$0xff] %v695
      %744 = vst [vmem:[#allocation2 + $0x2d0] sm:$0xff] %v696
      %745 = vst [vmem:[#allocation2 + $0x2d8] sm:$0xff] %v697
      %746 = vst [vmem:[#allocation2 + $0x2e0] sm:$0xff] %v698
      %747 = vst [vmem:[#allocation2 + $0x2e8] sm:$0xff] %v699
      %748 = vst [vmem:[#allocation2 + $0x2f0] sm:$0xff] %v700
      %749 = vst [vmem:[#allocation2 + $0x2f8] sm:$0xff] %v701
      %v750 = vld [vmem:[%s165] sm:$0xff]
      %v751 = vld [vmem:[%s165 + $0x8] sm:$0xff]
      %v752 = vld [vmem:[%s165 + $0x10] sm:$0xff]
      %v753 = vld [vmem:[%s165 + $0x18] sm:$0xff]
      %v754 = vld [vmem:[%s165 + $0x20] sm:$0xff]
      %v755 = vld [vmem:[%s165 + $0x28] sm:$0xff]
      %v756 = vld [vmem:[%s165 + $0x30] sm:$0xff]
      %v757 = vld [vmem:[%s165 + $0x38] sm:$0xff]
      %v758 = vld [vmem:[%s165 + $0x40] sm:$0xff]
      %v759 = vld [vmem:[%s165 + $0x48] sm:$0xff]
      %v760 = vld [vmem:[%s165 + $0x50] sm:$0xff]
      %v761 = vld [vmem:[%s165 + $0x58] sm:$0xff]
      %v762 = vld [vmem:[%s165 + $0x60] sm:$0xff]
      %v763 = vld [vmem:[%s165 + $0x68] sm:$0xff]
      %v764 = vld [vmem:[%s165 + $0x70] sm:$0xff]
      %v765 = vld [vmem:[%s165 + $0x78] sm:$0xff]
      %v766 = vld [vmem:[%s165 + $0x80] sm:$0xff]
      %v767 = vld [vmem:[%s165 + $0x88] sm:$0xff]
      %v768 = vld [vmem:[%s165 + $0x90] sm:$0xff]
      %v769 = vld [vmem:[%s165 + $0x98] sm:$0xff]
      %v770 = vld [vmem:[%s165 + $0xa0] sm:$0xff]
      %v771 = vld [vmem:[%s165 + $0xa8] sm:$0xff]
      %v772 = vld [vmem:[%s165 + $0xb0] sm:$0xff]
      %v773 = vld [vmem:[%s165 + $0xb8] sm:$0xff]
      %v774 = vld [vmem:[%s165 + $0xc0] sm:$0xff]
      %v775 = vld [vmem:[%s165 + $0xc8] sm:$0xff]
      %802 = vrot.lane.b32.xlu0 %v750, 124
      %v803 = vpop.permute.xlu0 %802
      %804 = vrot.lane.b32.xlu0 %v751, 124
      %v805 = vpop.permute.xlu0 %804
      %806 = vrot.lane.b32.xlu0 %v752, 124
      %v807 = vpop.permute.xlu0 %806
      %808 = vrot.lane.b32.xlu0 %v753, 124
      %v809 = vpop.permute.xlu0 %808
      %810 = vrot.lane.b32.xlu0 %v754, 124
      %v811 = vpop.permute.xlu0 %810
      %812 = vrot.lane.b32.xlu0 %v755, 124
      %v813 = vpop.permute.xlu0 %812
      %814 = vrot.lane.b32.xlu0 %v756, 124
      %v815 = vpop.permute.xlu0 %814
      %816 = vrot.lane.b32.xlu0 %v757, 124
      %v817 = vpop.permute.xlu0 %816
      %818 = vrot.lane.b32.xlu0 %v758, 124
      %v819 = vpop.permute.xlu0 %818
      %820 = vrot.lane.b32.xlu0 %v759, 124
      %v821 = vpop.permute.xlu0 %820
      %822 = vrot.lane.b32.xlu0 %v760, 124
      %v823 = vpop.permute.xlu0 %822
      %824 = vrot.lane.b32.xlu0 %v761, 124
      %v825 = vpop.permute.xlu0 %824
      %826 = vrot.lane.b32.xlu0 %v762, 124
      %v827 = vpop.permute.xlu0 %826
      %828 = vrot.lane.b32.xlu0 %v763, 124
      %v829 = vpop.permute.xlu0 %828
      %830 = vrot.lane.b32.xlu0 %v764, 124
      %v831 = vpop.permute.xlu0 %830
      %832 = vrot.lane.b32.xlu0 %v765, 124
      %v833 = vpop.permute.xlu0 %832
      %834 = vrot.lane.b32.xlu0 %v766, 124
      %v835 = vpop.permute.xlu0 %834
      %836 = vrot.lane.b32.xlu0 %v767, 124
      %v837 = vpop.permute.xlu0 %836
      %838 = vrot.lane.b32.xlu0 %v768, 124
      %v839 = vpop.permute.xlu0 %838
      %840 = vrot.lane.b32.xlu0 %v769, 124
      %v841 = vpop.permute.xlu0 %840
      %842 = vrot.lane.b32.xlu0 %v770, 124
      %v843 = vpop.permute.xlu0 %842
      %844 = vrot.lane.b32.xlu0 %v771, 124
      %v845 = vpop.permute.xlu0 %844
      %846 = vrot.lane.b32.xlu0 %v772, 124
      %v847 = vpop.permute.xlu0 %846
      %848 = vrot.lane.b32.xlu0 %v773, 124
      %v849 = vpop.permute.xlu0 %848
      %850 = vrot.lane.b32.xlu0 %v774, 124
      %v851 = vpop.permute.xlu0 %850
      %852 = vrot.lane.b32.xlu0 %v775, 124
      %v853 = vpop.permute.xlu0 %852
      %vm854 = vcmask 1014784
      %v855 = vsel %vm854, %v803, %v805
      %v856 = vsel %vm854, %v805, %v807
      %v857 = vsel %vm854, %v807, %v809
      %v858 = vsel %vm854, %v809, %v811
      %v859 = vsel %vm854, %v811, %v813
      %v860 = vsel %vm854, %v813, %v815
      %v861 = vsel %vm854, %v815, %v817
      %v862 = vsel %vm854, %v817, %v819
      %v863 = vsel %vm854, %v819, %v821
      %v864 = vsel %vm854, %v821, %v823
      %v865 = vsel %vm854, %v823, %v825
      %v866 = vsel %vm854, %v825, %v827
      %v867 = vsel %vm854, %v829, %v831
      %v868 = vsel %vm854, %v831, %v833
      %v869 = vsel %vm854, %v833, %v835
      %v870 = vsel %vm854, %v835, %v837
      %v871 = vsel %vm854, %v837, %v839
      %v872 = vsel %vm854, %v839, %v841
      %v873 = vsel %vm854, %v841, %v843
      %v874 = vsel %vm854, %v843, %v845
      %v875 = vsel %vm854, %v845, %v847
      %v876 = vsel %vm854, %v847, %v849
      %v877 = vsel %vm854, %v849, %v851
      %v878 = vsel %vm854, %v851, %v853
      %903 = vst [vmem:[#allocation2 + $0x300] sm:$0xff] %v855
      %904 = vst [vmem:[#allocation2 + $0x308] sm:$0xff] %v856
      %905 = vst [vmem:[#allocation2 + $0x310] sm:$0xff] %v857
      %906 = vst [vmem:[#allocation2 + $0x318] sm:$0xff] %v858
      %907 = vst [vmem:[#allocation2 + $0x320] sm:$0xff] %v859
      %908 = vst [vmem:[#allocation2 + $0x328] sm:$0xff] %v860
      %909 = vst [vmem:[#allocation2 + $0x330] sm:$0xff] %v861
      %910 = vst [vmem:[#allocation2 + $0x338] sm:$0xff] %v862
      %911 = vst [vmem:[#allocation2 + $0x340] sm:$0xff] %v863
      %912 = vst [vmem:[#allocation2 + $0x348] sm:$0xff] %v864
      %913 = vst [vmem:[#allocation2 + $0x350] sm:$0xff] %v865
      %914 = vst [vmem:[#allocation2 + $0x358] sm:$0xff] %v866
      %915 = vst [vmem:[#allocation2 + $0x360] sm:$0xff] %v867
      %916 = vst [vmem:[#allocation2 + $0x368] sm:$0xff] %v868
      %917 = vst [vmem:[#allocation2 + $0x370] sm:$0xff] %v869
      %918 = vst [vmem:[#allocation2 + $0x378] sm:$0xff] %v870
      %919 = vst [vmem:[#allocation2 + $0x380] sm:$0xff] %v871
      %920 = vst [vmem:[#allocation2 + $0x388] sm:$0xff] %v872
      %921 = vst [vmem:[#allocation2 + $0x390] sm:$0xff] %v873
      %922 = vst [vmem:[#allocation2 + $0x398] sm:$0xff] %v874
      %923 = vst [vmem:[#allocation2 + $0x3a0] sm:$0xff] %v875
      %924 = vst [vmem:[#allocation2 + $0x3a8] sm:$0xff] %v876
      %925 = vst [vmem:[#allocation2 + $0x3b0] sm:$0xff] %v877
      %926 = vst [vmem:[#allocation2 + $0x3b8] sm:$0xff] %v878
      %v927 = vld [vmem:[%s165] sm:$0xff]
      %v928 = vld [vmem:[%s165 + $0x8] sm:$0xff]
      %v929 = vld [vmem:[%s165 + $0x10] sm:$0xff]
      %v930 = vld [vmem:[%s165 + $0x18] sm:$0xff]
      %v931 = vld [vmem:[%s165 + $0x20] sm:$0xff]
      %v932 = vld [vmem:[%s165 + $0x28] sm:$0xff]
      %v933 = vld [vmem:[%s165 + $0x30] sm:$0xff]
      %v934 = vld [vmem:[%s165 + $0x38] sm:$0xff]
      %v935 = vld [vmem:[%s165 + $0x40] sm:$0xff]
      %v936 = vld [vmem:[%s165 + $0x48] sm:$0xff]
      %v937 = vld [vmem:[%s165 + $0x50] sm:$0xff]
      %v938 = vld [vmem:[%s165 + $0x58] sm:$0xff]
      %v939 = vld [vmem:[%s165 + $0x60] sm:$0xff]
      %v940 = vld [vmem:[%s165 + $0x68] sm:$0xff]
      %v941 = vld [vmem:[%s165 + $0x70] sm:$0xff]
      %v942 = vld [vmem:[%s165 + $0x78] sm:$0xff]
      %v943 = vld [vmem:[%s165 + $0x80] sm:$0xff]
      %v944 = vld [vmem:[%s165 + $0x88] sm:$0xff]
      %v945 = vld [vmem:[%s165 + $0x90] sm:$0xff]
      %v946 = vld [vmem:[%s165 + $0x98] sm:$0xff]
      %v947 = vld [vmem:[%s165 + $0xa0] sm:$0xff]
      %v948 = vld [vmem:[%s165 + $0xa8] sm:$0xff]
      %v949 = vld [vmem:[%s165 + $0xb0] sm:$0xff]
      %v950 = vld [vmem:[%s165 + $0xb8] sm:$0xff]
      %v951 = vld [vmem:[%s165 + $0xc0] sm:$0xff]
      %v952 = vld [vmem:[%s165 + $0xc8] sm:$0xff]
      %979 = vrot.lane.b32.xlu0 %v927, 123
      %v980 = vpop.permute.xlu0 %979
      %981 = vrot.lane.b32.xlu0 %v928, 123
      %v982 = vpop.permute.xlu0 %981
      %983 = vrot.lane.b32.xlu0 %v929, 123
      %v984 = vpop.permute.xlu0 %983
      %985 = vrot.lane.b32.xlu0 %v930, 123
      %v986 = vpop.permute.xlu0 %985
      %987 = vrot.lane.b32.xlu0 %v931, 123
      %v988 = vpop.permute.xlu0 %987
      %989 = vrot.lane.b32.xlu0 %v932, 123
      %v990 = vpop.permute.xlu0 %989
      %991 = vrot.lane.b32.xlu0 %v933, 123
      %v992 = vpop.permute.xlu0 %991
      %993 = vrot.lane.b32.xlu0 %v934, 123
      %v994 = vpop.permute.xlu0 %993
      %995 = vrot.lane.b32.xlu0 %v935, 123
      %v996 = vpop.permute.xlu0 %995
      %997 = vrot.lane.b32.xlu0 %v936, 123
      %v998 = vpop.permute.xlu0 %997
      %999 = vrot.lane.b32.xlu0 %v937, 123
      %v1000 = vpop.permute.xlu0 %999
      %1001 = vrot.lane.b32.xlu0 %v938, 123
      %v1002 = vpop.permute.xlu0 %1001
      %1003 = vrot.lane.b32.xlu0 %v939, 123
      %v1004 = vpop.permute.xlu0 %1003
      %1005 = vrot.lane.b32.xlu0 %v940, 123
      %v1006 = vpop.permute.xlu0 %1005
      %1007 = vrot.lane.b32.xlu0 %v941, 123
      %v1008 = vpop.permute.xlu0 %1007
      %1009 = vrot.lane.b32.xlu0 %v942, 123
      %v1010 = vpop.permute.xlu0 %1009
      %1011 = vrot.lane.b32.xlu0 %v943, 123
      %v1012 = vpop.permute.xlu0 %1011
      %1013 = vrot.lane.b32.xlu0 %v944, 123
      %v1014 = vpop.permute.xlu0 %1013
      %1015 = vrot.lane.b32.xlu0 %v945, 123
      %v1016 = vpop.permute.xlu0 %1015
      %1017 = vrot.lane.b32.xlu0 %v946, 123
      %v1018 = vpop.permute.xlu0 %1017
      %1019 = vrot.lane.b32.xlu0 %v947, 123
      %v1020 = vpop.permute.xlu0 %1019
      %1021 = vrot.lane.b32.xlu0 %v948, 123
      %v1022 = vpop.permute.xlu0 %1021
      %1023 = vrot.lane.b32.xlu0 %v949, 123
      %v1024 = vpop.permute.xlu0 %1023
      %1025 = vrot.lane.b32.xlu0 %v950, 123
      %v1026 = vpop.permute.xlu0 %1025
      %1027 = vrot.lane.b32.xlu0 %v951, 123
      %v1028 = vpop.permute.xlu0 %1027
      %1029 = vrot.lane.b32.xlu0 %v952, 123
      %v1030 = vpop.permute.xlu0 %1029
      %vm1031 = vcmask 1006592
      %v1032 = vsel %vm1031, %v980, %v982
      %v1033 = vsel %vm1031, %v982, %v984
      %v1034 = vsel %vm1031, %v984, %v986
      %v1035 = vsel %vm1031, %v986, %v988
      %v1036 = vsel %vm1031, %v988, %v990
      %v1037 = vsel %vm1031, %v990, %v992
      %v1038 = vsel %vm1031, %v992, %v994
      %v1039 = vsel %vm1031, %v994, %v996
      %v1040 = vsel %vm1031, %v996, %v998
      %v1041 = vsel %vm1031, %v998, %v1000
      %v1042 = vsel %vm1031, %v1000, %v1002
      %v1043 = vsel %vm1031, %v1002, %v1004
      %v1044 = vsel %vm1031, %v1006, %v1008
      %v1045 = vsel %vm1031, %v1008, %v1010
      %v1046 = vsel %vm1031, %v1010, %v1012
      %v1047 = vsel %vm1031, %v1012, %v1014
      %v1048 = vsel %vm1031, %v1014, %v1016
      %v1049 = vsel %vm1031, %v1016, %v1018
      %v1050 = vsel %vm1031, %v1018, %v1020
      %v1051 = vsel %vm1031, %v1020, %v1022
      %v1052 = vsel %vm1031, %v1022, %v1024
      %v1053 = vsel %vm1031, %v1024, %v1026
      %v1054 = vsel %vm1031, %v1026, %v1028
      %v1055 = vsel %vm1031, %v1028, %v1030
      %1080 = vst [vmem:[#allocation2 + $0x3c0] sm:$0xff] %v1032
      %1081 = vst [vmem:[#allocation2 + $0x3c8] sm:$0xff] %v1033
      %1082 = vst [vmem:[#allocation2 + $0x3d0] sm:$0xff] %v1034
      %1083 = vst [vmem:[#allocation2 + $0x3d8] sm:$0xff] %v1035
      %1084 = vst [vmem:[#allocation2 + $0x3e0] sm:$0xff] %v1036
      %1085 = vst [vmem:[#allocation2 + $0x3e8] sm:$0xff] %v1037
      %1086 = vst [vmem:[#allocation2 + $0x3f0] sm:$0xff] %v1038
      %1087 = vst [vmem:[#allocation2 + $0x3f8] sm:$0xff] %v1039
      %1088 = vst [vmem:[#allocation2 + $0x400] sm:$0xff] %v1040
      %1089 = vst [vmem:[#allocation2 + $0x408] sm:$0xff] %v1041
      %1090 = vst [vmem:[#allocation2 + $0x410] sm:$0xff] %v1042
      %1091 = vst [vmem:[#allocation2 + $0x418] sm:$0xff] %v1043
      %1092 = vst [vmem:[#allocation2 + $0x420] sm:$0xff] %v1044
      %1093 = vst [vmem:[#allocation2 + $0x428] sm:$0xff] %v1045
      %1094 = vst [vmem:[#allocation2 + $0x430] sm:$0xff] %v1046
      %1095 = vst [vmem:[#allocation2 + $0x438] sm:$0xff] %v1047
      %1096 = vst [vmem:[#allocation2 + $0x440] sm:$0xff] %v1048
      %1097 = vst [vmem:[#allocation2 + $0x448] sm:$0xff] %v1049
      %1098 = vst [vmem:[#allocation2 + $0x450] sm:$0xff] %v1050
      %1099 = vst [vmem:[#allocation2 + $0x458] sm:$0xff] %v1051
      %1100 = vst [vmem:[#allocation2 + $0x460] sm:$0xff] %v1052
      %1101 = vst [vmem:[#allocation2 + $0x468] sm:$0xff] %v1053
      %1102 = vst [vmem:[#allocation2 + $0x470] sm:$0xff] %v1054
      %1103 = vst [vmem:[#allocation2 + $0x478] sm:$0xff] %v1055
      %v1104 = vld [vmem:[%s165] sm:$0xff]
      %v1105 = vld [vmem:[%s165 + $0x8] sm:$0xff]
      %v1106 = vld [vmem:[%s165 + $0x10] sm:$0xff]
      %v1107 = vld [vmem:[%s165 + $0x18] sm:$0xff]
      %v1108 = vld [vmem:[%s165 + $0x20] sm:$0xff]
      %v1109 = vld [vmem:[%s165 + $0x28] sm:$0xff]
      %v1110 = vld [vmem:[%s165 + $0x30] sm:$0xff]
      %v1111 = vld [vmem:[%s165 + $0x38] sm:$0xff]
      %v1112 = vld [vmem:[%s165 + $0x40] sm:$0xff]
      %v1113 = vld [vmem:[%s165 + $0x48] sm:$0xff]
      %v1114 = vld [vmem:[%s165 + $0x50] sm:$0xff]
      %v1115 = vld [vmem:[%s165 + $0x58] sm:$0xff]
      %v1116 = vld [vmem:[%s165 + $0x60] sm:$0xff]
      %v1117 = vld [vmem:[%s165 + $0x68] sm:$0xff]
      %v1118 = vld [vmem:[%s165 + $0x70] sm:$0xff]
      %v1119 = vld [vmem:[%s165 + $0x78] sm:$0xff]
      %v1120 = vld [vmem:[%s165 + $0x80] sm:$0xff]
      %v1121 = vld [vmem:[%s165 + $0x88] sm:$0xff]
      %v1122 = vld [vmem:[%s165 + $0x90] sm:$0xff]
      %v1123 = vld [vmem:[%s165 + $0x98] sm:$0xff]
      %v1124 = vld [vmem:[%s165 + $0xa0] sm:$0xff]
      %v1125 = vld [vmem:[%s165 + $0xa8] sm:$0xff]
      %v1126 = vld [vmem:[%s165 + $0xb0] sm:$0xff]
      %v1127 = vld [vmem:[%s165 + $0xb8] sm:$0xff]
      %v1128 = vld [vmem:[%s165 + $0xc0] sm:$0xff]
      %v1129 = vld [vmem:[%s165 + $0xc8] sm:$0xff]
      %1156 = vrot.lane.b32.xlu0 %v1104, 122
      %v1157 = vpop.permute.xlu0 %1156
      %1158 = vrot.lane.b32.xlu0 %v1105, 122
      %v1159 = vpop.permute.xlu0 %1158
      %1160 = vrot.lane.b32.xlu0 %v1106, 122
      %v1161 = vpop.permute.xlu0 %1160
      %1162 = vrot.lane.b32.xlu0 %v1107, 122
      %v1163 = vpop.permute.xlu0 %1162
      %1164 = vrot.lane.b32.xlu0 %v1108, 122
      %v1165 = vpop.permute.xlu0 %1164
      %1166 = vrot.lane.b32.xlu0 %v1109, 122
      %v1167 = vpop.permute.xlu0 %1166
      %1168 = vrot.lane.b32.xlu0 %v1110, 122
      %v1169 = vpop.permute.xlu0 %1168
      %1170 = vrot.lane.b32.xlu0 %v1111, 122
      %v1171 = vpop.permute.xlu0 %1170
      %1172 = vrot.lane.b32.xlu0 %v1112, 122
      %v1173 = vpop.permute.xlu0 %1172
      %1174 = vrot.lane.b32.xlu0 %v1113, 122
      %v1175 = vpop.permute.xlu0 %1174
      %1176 = vrot.lane.b32.xlu0 %v1114, 122
      %v1177 = vpop.permute.xlu0 %1176
      %1178 = vrot.lane.b32.xlu0 %v1115, 122
      %v1179 = vpop.permute.xlu0 %1178
      %1180 = vrot.lane.b32.xlu0 %v1116, 122
      %v1181 = vpop.permute.xlu0 %1180
      %1182 = vrot.lane.b32.xlu0 %v1117, 122
      %v1183 = vpop.permute.xlu0 %1182
      %1184 = vrot.lane.b32.xlu0 %v1118, 122
      %v1185 = vpop.permute.xlu0 %1184
      %1186 = vrot.lane.b32.xlu0 %v1119, 122
      %v1187 = vpop.permute.xlu0 %1186
      %1188 = vrot.lane.b32.xlu0 %v1120, 122
      %v1189 = vpop.permute.xlu0 %1188
      %1190 = vrot.lane.b32.xlu0 %v1121, 122
      %v1191 = vpop.permute.xlu0 %1190
      %1192 = vrot.lane.b32.xlu0 %v1122, 122
      %v1193 = vpop.permute.xlu0 %1192
      %1194 = vrot.lane.b32.xlu0 %v1123, 122
      %v1195 = vpop.permute.xlu0 %1194
      %1196 = vrot.lane.b32.xlu0 %v1124, 122
      %v1197 = vpop.permute.xlu0 %1196
      %1198 = vrot.lane.b32.xlu0 %v1125, 122
      %v1199 = vpop.permute.xlu0 %1198
      %1200 = vrot.lane.b32.xlu0 %v1126, 122
      %v1201 = vpop.permute.xlu0 %1200
      %1202 = vrot.lane.b32.xlu0 %v1127, 122
      %v1203 = vpop.permute.xlu0 %1202
      %1204 = vrot.lane.b32.xlu0 %v1128, 122
      %v1205 = vpop.permute.xlu0 %1204
      %1206 = vrot.lane.b32.xlu0 %v1129, 122
      %v1207 = vpop.permute.xlu0 %1206
      %vm1208 = vcmask 998400
      %v1209 = vsel %vm1208, %v1157, %v1159
      %v1210 = vsel %vm1208, %v1159, %v1161
      %v1211 = vsel %vm1208, %v1161, %v1163
      %v1212 = vsel %vm1208, %v1163, %v1165
      %v1213 = vsel %vm1208, %v1165, %v1167
      %v1214 = vsel %vm1208, %v1167, %v1169
      %v1215 = vsel %vm1208, %v1169, %v1171
      %v1216 = vsel %vm1208, %v1171, %v1173
      %v1217 = vsel %vm1208, %v1173, %v1175
      %v1218 = vsel %vm1208, %v1175, %v1177
      %v1219 = vsel %vm1208, %v1177, %v1179
      %v1220 = vsel %vm1208, %v1179, %v1181
      %v1221 = vsel %vm1208, %v1183, %v1185
      %v1222 = vsel %vm1208, %v1185, %v1187
      %v1223 = vsel %vm1208, %v1187, %v1189
      %v1224 = vsel %vm1208, %v1189, %v1191
      %v1225 = vsel %vm1208, %v1191, %v1193
      %v1226 = vsel %vm1208, %v1193, %v1195
      %v1227 = vsel %vm1208, %v1195, %v1197
      %v1228 = vsel %vm1208, %v1197, %v1199
      %v1229 = vsel %vm1208, %v1199, %v1201
      %v1230 = vsel %vm1208, %v1201, %v1203
      %v1231 = vsel %vm1208, %v1203, %v1205
      %v1232 = vsel %vm1208, %v1205, %v1207
      %1257 = vst [vmem:[#allocation2 + $0x480] sm:$0xff] %v1209
      %1258 = vst [vmem:[#allocation2 + $0x488] sm:$0xff] %v1210
      %1259 = vst [vmem:[#allocation2 + $0x490] sm:$0xff] %v1211
      %1260 = vst [vmem:[#allocation2 + $0x498] sm:$0xff] %v1212
      %1261 = vst [vmem:[#allocation2 + $0x4a0] sm:$0xff] %v1213
      %1262 = vst [vmem:[#allocation2 + $0x4a8] sm:$0xff] %v1214
      %1263 = vst [vmem:[#allocation2 + $0x4b0] sm:$0xff] %v1215
      %1264 = vst [vmem:[#allocation2 + $0x4b8] sm:$0xff] %v1216
      %1265 = vst [vmem:[#allocation2 + $0x4c0] sm:$0xff] %v1217
      %1266 = vst [vmem:[#allocation2 + $0x4c8] sm:$0xff] %v1218
      %1267 = vst [vmem:[#allocation2 + $0x4d0] sm:$0xff] %v1219
      %1268 = vst [vmem:[#allocation2 + $0x4d8] sm:$0xff] %v1220
      %1269 = vst [vmem:[#allocation2 + $0x4e0] sm:$0xff] %v1221
      %1270 = vst [vmem:[#allocation2 + $0x4e8] sm:$0xff] %v1222
      %1271 = vst [vmem:[#allocation2 + $0x4f0] sm:$0xff] %v1223
      %1272 = vst [vmem:[#allocation2 + $0x4f8] sm:$0xff] %v1224
      %1273 = vst [vmem:[#allocation2 + $0x500] sm:$0xff] %v1225
      %1274 = vst [vmem:[#allocation2 + $0x508] sm:$0xff] %v1226
      %1275 = vst [vmem:[#allocation2 + $0x510] sm:$0xff] %v1227
      %1276 = vst [vmem:[#allocation2 + $0x518] sm:$0xff] %v1228
      %1277 = vst [vmem:[#allocation2 + $0x520] sm:$0xff] %v1229
      %1278 = vst [vmem:[#allocation2 + $0x528] sm:$0xff] %v1230
      %1279 = vst [vmem:[#allocation2 + $0x530] sm:$0xff] %v1231
      %1280 = vst [vmem:[#allocation2 + $0x538] sm:$0xff] %v1232
      %v1281 = vld [vmem:[%s1] sm:$0xff]
      %v1282 = vld [vmem:[%s1 + $0x8] sm:$0xff]
      %v1283 = vld [vmem:[%s1 + $0x10] sm:$0xff]
      %v1284 = vld [vmem:[%s1 + $0x18] sm:$0xff]
      %v1285 = vld [vmem:[%s1 + $0x20] sm:$0xff]
      %v1286 = vld [vmem:[%s1 + $0x28] sm:$0xff]
      %v1287 = vld [vmem:[%s1 + $0x30] sm:$0xff]
      %v1288 = vld [vmem:[%s1 + $0x38] sm:$0xff]
      %v1289 = vld [vmem:[%s1 + $0x40] sm:$0xff]
      %v1290 = vld [vmem:[%s1 + $0x48] sm:$0xff]
      %v1291 = vld [vmem:[%s1 + $0x50] sm:$0xff]
      %v1292 = vld [vmem:[%s1 + $0x58] sm:$0xff]
      %v1293 = vld [vmem:[%s1 + $0x60] sm:$0xff]
      %v1294 = vld [vmem:[%s1 + $0x68] sm:$0xff]
      %v1295 = vld [vmem:[#allocation2] sm:$0xff]
      %v1296 = vld [vmem:[#allocation2 + $0x8] sm:$0xff]
      %v1297 = vld [vmem:[#allocation2 + $0x10] sm:$0xff]
      %v1298 = vld [vmem:[#allocation2 + $0x18] sm:$0xff]
      %v1299 = vld [vmem:[#allocation2 + $0x20] sm:$0xff]
      %v1300 = vld [vmem:[#allocation2 + $0x28] sm:$0xff]
      %v1301 = vld [vmem:[#allocation2 + $0x30] sm:$0xff]
      %v1302 = vld [vmem:[#allocation2 + $0x38] sm:$0xff]
      %v1303 = vld [vmem:[#allocation2 + $0x40] sm:$0xff]
      %v1304 = vld [vmem:[#allocation2 + $0x48] sm:$0xff]
      %v1305 = vld [vmem:[#allocation2 + $0x50] sm:$0xff]
      %v1306 = vld [vmem:[#allocation2 + $0x58] sm:$0xff]
      %v1307 = vld [vmem:[#allocation2 + $0x60] sm:$0xff]
      %v1308 = vld [vmem:[#allocation2 + $0x68] sm:$0xff]
      %v1309 = vld [vmem:[#allocation2 + $0x70] sm:$0xff]
      %v1310 = vld [vmem:[#allocation2 + $0x78] sm:$0xff]
      %v1311 = vld [vmem:[#allocation2 + $0x80] sm:$0xff]
      %v1312 = vld [vmem:[#allocation2 + $0x88] sm:$0xff]
      %v1313 = vld [vmem:[#allocation2 + $0x90] sm:$0xff]
      %v1314 = vld [vmem:[#allocation2 + $0x98] sm:$0xff]
      %v1315 = vld [vmem:[#allocation2 + $0xa0] sm:$0xff]
      %v1316 = vld [vmem:[#allocation2 + $0xa8] sm:$0xff]
      %v1317 = vld [vmem:[#allocation2 + $0xb0] sm:$0xff]
      %v1318 = vld [vmem:[#allocation2 + $0xb8] sm:$0xff]
      %v1319 = vld [vmem:[#allocation2 + $0xc0] sm:$0xff]
      %v1320 = vld [vmem:[#allocation2 + $0xc8] sm:$0xff]
      %v1321 = vld [vmem:[#allocation2 + $0xd0] sm:$0xff]
      %v1322 = vld [vmem:[#allocation2 + $0xd8] sm:$0xff]
      %v1323 = vld [vmem:[#allocation2 + $0xe0] sm:$0xff]
      %v1324 = vld [vmem:[#allocation2 + $0xe8] sm:$0xff]
      %v1325 = vld [vmem:[#allocation2 + $0xf0] sm:$0xff]
      %v1326 = vld [vmem:[#allocation2 + $0xf8] sm:$0xff]
      %v1327 = vld [vmem:[#allocation2 + $0x100] sm:$0xff]
      %v1328 = vld [vmem:[#allocation2 + $0x108] sm:$0xff]
      %v1329 = vld [vmem:[#allocation2 + $0x110] sm:$0xff]
      %v1330 = vld [vmem:[#allocation2 + $0x118] sm:$0xff]
      %v1331 = vld [vmem:[#allocation2 + $0x120] sm:$0xff]
      %v1332 = vld [vmem:[#allocation2 + $0x128] sm:$0xff]
      %v1333 = vld [vmem:[#allocation2 + $0x130] sm:$0xff]
      %v1334 = vld [vmem:[#allocation2 + $0x138] sm:$0xff]
      %v1335 = vld [vmem:[#allocation2 + $0x140] sm:$0xff]
      %v1336 = vld [vmem:[#allocation2 + $0x148] sm:$0xff]
      %v1337 = vld [vmem:[#allocation2 + $0x150] sm:$0xff]
      %v1338 = vld [vmem:[#allocation2 + $0x158] sm:$0xff]
      %v1339 = vld [vmem:[#allocation2 + $0x160] sm:$0xff]
      %v1340 = vld [vmem:[#allocation2 + $0x168] sm:$0xff]
      %v1341 = vld [vmem:[#allocation2 + $0x170] sm:$0xff]
      %v1342 = vld [vmem:[#allocation2 + $0x178] sm:$0xff]
      %v1343 = vld [vmem:[#allocation2 + $0x180] sm:$0xff]
      %v1344 = vld [vmem:[#allocation2 + $0x188] sm:$0xff]
      %v1345 = vld [vmem:[#allocation2 + $0x190] sm:$0xff]
      %v1346 = vld [vmem:[#allocation2 + $0x198] sm:$0xff]
      %v1347 = vld [vmem:[#allocation2 + $0x1a0] sm:$0xff]
      %v1348 = vld [vmem:[#allocation2 + $0x1a8] sm:$0xff]
      %v1349 = vld [vmem:[#allocation2 + $0x1b0] sm:$0xff]
      %v1350 = vld [vmem:[#allocation2 + $0x1b8] sm:$0xff]
      %v1351 = vld [vmem:[#allocation2 + $0x1c0] sm:$0xff]
      %v1352 = vld [vmem:[#allocation2 + $0x1c8] sm:$0xff]
      %v1353 = vld [vmem:[#allocation2 + $0x1d0] sm:$0xff]
      %v1354 = vld [vmem:[#allocation2 + $0x1d8] sm:$0xff]
      %v1355 = vld [vmem:[#allocation2 + $0x1e0] sm:$0xff]
      %v1356 = vld [vmem:[#allocation2 + $0x1e8] sm:$0xff]
      %v1357 = vld [vmem:[#allocation2 + $0x1f0] sm:$0xff]
      %v1358 = vld [vmem:[#allocation2 + $0x1f8] sm:$0xff]
      %v1359 = vld [vmem:[#allocation2 + $0x200] sm:$0xff]
      %v1360 = vld [vmem:[#allocation2 + $0x208] sm:$0xff]
      %v1361 = vld [vmem:[#allocation2 + $0x210] sm:$0xff]
      %v1362 = vld [vmem:[#allocation2 + $0x218] sm:$0xff]
      %v1363 = vld [vmem:[#allocation2 + $0x220] sm:$0xff]
      %v1364 = vld [vmem:[#allocation2 + $0x228] sm:$0xff]
      %v1365 = vld [vmem:[#allocation2 + $0x230] sm:$0xff]
      %v1366 = vld [vmem:[#allocation2 + $0x238] sm:$0xff]
      %v1367 = vld [vmem:[#allocation2 + $0x240] sm:$0xff]
      %v1368 = vld [vmem:[#allocation2 + $0x248] sm:$0xff]
      %v1369 = vld [vmem:[#allocation2 + $0x250] sm:$0xff]
      %v1370 = vld [vmem:[#allocation2 + $0x258] sm:$0xff]
      %v1371 = vld [vmem:[#allocation2 + $0x260] sm:$0xff]
      %v1372 = vld [vmem:[#allocation2 + $0x268] sm:$0xff]
      %v1373 = vld [vmem:[#allocation2 + $0x270] sm:$0xff]
      %v1374 = vld [vmem:[#allocation2 + $0x278] sm:$0xff]
      %v1375 = vld [vmem:[#allocation2 + $0x280] sm:$0xff]
      %v1376 = vld [vmem:[#allocation2 + $0x288] sm:$0xff]
      %v1377 = vld [vmem:[#allocation2 + $0x290] sm:$0xff]
      %v1378 = vld [vmem:[#allocation2 + $0x298] sm:$0xff]
      %v1379 = vld [vmem:[#allocation2 + $0x2a0] sm:$0xff]
      %v1380 = vld [vmem:[#allocation2 + $0x2a8] sm:$0xff]
      %v1381 = vld [vmem:[#allocation2 + $0x2b0] sm:$0xff]
      %v1382 = vld [vmem:[#allocation2 + $0x2b8] sm:$0xff]
      %v1383 = vld [vmem:[#allocation2 + $0x2c0] sm:$0xff]
      %v1384 = vld [vmem:[#allocation2 + $0x2c8] sm:$0xff]
      %v1385 = vld [vmem:[#allocation2 + $0x2d0] sm:$0xff]
      %v1386 = vld [vmem:[#allocation2 + $0x2d8] sm:$0xff]
      %v1387 = vld [vmem:[#allocation2 + $0x2e0] sm:$0xff]
      %v1388 = vld [vmem:[#allocation2 + $0x2e8] sm:$0xff]
      %v1389 = vld [vmem:[#allocation2 + $0x2f0] sm:$0xff]
      %v1390 = vld [vmem:[#allocation2 + $0x2f8] sm:$0xff]
      %v1391 = vld [vmem:[#allocation2 + $0x300] sm:$0xff]
      %v1392 = vld [vmem:[#allocation2 + $0x308] sm:$0xff]
      %v1393 = vld [vmem:[#allocation2 + $0x310] sm:$0xff]
      %v1394 = vld [vmem:[#allocation2 + $0x318] sm:$0xff]
      %v1395 = vld [vmem:[#allocation2 + $0x320] sm:$0xff]
      %v1396 = vld [vmem:[#allocation2 + $0x328] sm:$0xff]
      %v1397 = vld [vmem:[#allocation2 + $0x330] sm:$0xff]
      %v1398 = vld [vmem:[#allocation2 + $0x338] sm:$0xff]
      %v1399 = vld [vmem:[#allocation2 + $0x340] sm:$0xff]
      %v1400 = vld [vmem:[#allocation2 + $0x348] sm:$0xff]
      %v1401 = vld [vmem:[#allocation2 + $0x350] sm:$0xff]
      %v1402 = vld [vmem:[#allocation2 + $0x358] sm:$0xff]
      %v1403 = vld [vmem:[#allocation2 + $0x360] sm:$0xff]
      %v1404 = vld [vmem:[#allocation2 + $0x368] sm:$0xff]
      %v1405 = vld [vmem:[#allocation2 + $0x370] sm:$0xff]
      %v1406 = vld [vmem:[#allocation2 + $0x378] sm:$0xff]
      %v1407 = vld [vmem:[#allocation2 + $0x380] sm:$0xff]
      %v1408 = vld [vmem:[#allocation2 + $0x388] sm:$0xff]
      %v1409 = vld [vmem:[#allocation2 + $0x390] sm:$0xff]
      %v1410 = vld [vmem:[#allocation2 + $0x398] sm:$0xff]
      %v1411 = vld [vmem:[#allocation2 + $0x3a0] sm:$0xff]
      %v1412 = vld [vmem:[#allocation2 + $0x3a8] sm:$0xff]
      %v1413 = vld [vmem:[#allocation2 + $0x3b0] sm:$0xff]
      %v1414 = vld [vmem:[#allocation2 + $0x3b8] sm:$0xff]
      %v1415 = vld [vmem:[#allocation2 + $0x3c0] sm:$0xff]
      %v1416 = vld [vmem:[#allocation2 + $0x3c8] sm:$0xff]
      %v1417 = vld [vmem:[#allocation2 + $0x3d0] sm:$0xff]
      %v1418 = vld [vmem:[#allocation2 + $0x3d8] sm:$0xff]
      %v1419 = vld [vmem:[#allocation2 + $0x3e0] sm:$0xff]
      %v1420 = vld [vmem:[#allocation2 + $0x3e8] sm:$0xff]
      %v1421 = vld [vmem:[#allocation2 + $0x3f0] sm:$0xff]
      %v1422 = vld [vmem:[#allocation2 + $0x3f8] sm:$0xff]
      %v1423 = vld [vmem:[#allocation2 + $0x400] sm:$0xff]
      %v1424 = vld [vmem:[#allocation2 + $0x408] sm:$0xff]
      %v1425 = vld [vmem:[#allocation2 + $0x410] sm:$0xff]
      %v1426 = vld [vmem:[#allocation2 + $0x418] sm:$0xff]
      %v1427 = vld [vmem:[#allocation2 + $0x420] sm:$0xff]
      %v1428 = vld [vmem:[#allocation2 + $0x428] sm:$0xff]
      %v1429 = vld [vmem:[#allocation2 + $0x430] sm:$0xff]
      %v1430 = vld [vmem:[#allocation2 + $0x438] sm:$0xff]
      %v1431 = vld [vmem:[#allocation2 + $0x440] sm:$0xff]
      %v1432 = vld [vmem:[#allocation2 + $0x448] sm:$0xff]
      %v1433 = vld [vmem:[#allocation2 + $0x450] sm:$0xff]
      %v1434 = vld [vmem:[#allocation2 + $0x458] sm:$0xff]
      %v1435 = vld [vmem:[#allocation2 + $0x460] sm:$0xff]
      %v1436 = vld [vmem:[#allocation2 + $0x468] sm:$0xff]
      %v1437 = vld [vmem:[#allocation2 + $0x470] sm:$0xff]
      %v1438 = vld [vmem:[#allocation2 + $0x478] sm:$0xff]
      %v1439 = vld [vmem:[#allocation2 + $0x480] sm:$0xff]
      %v1440 = vld [vmem:[#allocation2 + $0x488] sm:$0xff]
      %v1441 = vld [vmem:[#allocation2 + $0x490] sm:$0xff]
      %v1442 = vld [vmem:[#allocation2 + $0x498] sm:$0xff]
      %v1443 = vld [vmem:[#allocation2 + $0x4a0] sm:$0xff]
      %v1444 = vld [vmem:[#allocation2 + $0x4a8] sm:$0xff]
      %v1445 = vld [vmem:[#allocation2 + $0x4b0] sm:$0xff]
      %v1446 = vld [vmem:[#allocation2 + $0x4b8] sm:$0xff]
      %v1447 = vld [vmem:[#allocation2 + $0x4c0] sm:$0xff]
      %v1448 = vld [vmem:[#allocation2 + $0x4c8] sm:$0xff]
      %v1449 = vld [vmem:[#allocation2 + $0x4d0] sm:$0xff]
      %v1450 = vld [vmem:[#allocation2 + $0x4d8] sm:$0xff]
      %v1451 = vld [vmem:[#allocation2 + $0x4e0] sm:$0xff]
      %v1452 = vld [vmem:[#allocation2 + $0x4e8] sm:$0xff]
      %v1453 = vld [vmem:[#allocation2 + $0x4f0] sm:$0xff]
      %v1454 = vld [vmem:[#allocation2 + $0x4f8] sm:$0xff]
      %v1455 = vld [vmem:[#allocation2 + $0x500] sm:$0xff]
      %v1456 = vld [vmem:[#allocation2 + $0x508] sm:$0xff]
      %v1457 = vld [vmem:[#allocation2 + $0x510] sm:$0xff]
      %v1458 = vld [vmem:[#allocation2 + $0x518] sm:$0xff]
      %v1459 = vld [vmem:[#allocation2 + $0x520] sm:$0xff]
      %v1460 = vld [vmem:[#allocation2 + $0x528] sm:$0xff]
      %v1461 = vld [vmem:[#allocation2 + $0x530] sm:$0xff]
      %v1462 = vld [vmem:[#allocation2 + $0x538] sm:$0xff]
      %vm1463 = vcmask 916480
      %v1465 = vsel %vm1463, %v1281, 0
      %v1468 = vsel %vm1463, %v1282, 0
      %v1471 = vsel %vm1463, %v1283, 0
      %v1474 = vsel %vm1463, %v1284, 0
      %v1477 = vsel %vm1463, %v1285, 0
      %v1480 = vsel %vm1463, %v1286, 0
      %v1483 = vsel %vm1463, %v1287, 0
      %v1486 = vsel %vm1463, %v1288, 0
      %v1489 = vsel %vm1463, %v1289, 0
      %v1492 = vsel %vm1463, %v1290, 0
      %v1495 = vsel %vm1463, %v1291, 0
      %v1498 = vsel %vm1463, %v1292, 0
      %v1501 = vsel %vm1463, %v1293, 0
      %v1504 = vsel %vm1463, %v1294, 0
      %1506 = vmatprep.subr.mxu0 %v1296
      %1507 = vmatpush1.msra.mxu0 %v1295
      %1508 = vmatprep.subr.mxu0 %v1308
      %1509 = vmatpush1.msra.mxu0 %v1307
      %1510 = vmatprep.subr.mxu0 %v1320
      %1511 = vmatpush1.msra.mxu0 %v1319
      %1512 = vmatprep.subr.mxu0 %v1332
      %1513 = vmatpush1.msra.mxu0 %v1331
      %1514 = vmatprep.subr.mxu0 %v1344
      %1515 = vmatpush1.msra.mxu0 %v1343
      %1516 = vmatprep.subr.mxu0 %v1356
      %1517 = vmatpush1.msra.mxu0 %v1355
      %1518 = vmatprep.subr.mxu0 %v1368
      %1519 = vmatpush1.msra.mxu0 %v1367
      %1520 = vmatprep.subr.mxu0 %v1380
      %1521 = vmatpush1.msra.mxu0 %v1379
      %1522 = vmatprep.subr.mxu0 %v1392
      %1523 = vmatpush1.msra.mxu0 %v1391
      %1524 = vmatprep.subr.mxu0 %v1404
      %1525 = vmatpush1.msra.mxu0 %v1403
      %1526 = vmatprep.subr.mxu0 %v1416
      %1527 = vmatpush1.msra.mxu0 %v1415
      %1528 = vmatprep.subr.mxu0 %v1428
      %1529 = vmatpush1.msra.mxu0 %v1427
      %1530 = vmatprep.subr.mxu0 %v1440
      %1531 = vmatpush1.msra.mxu0 %v1439
      %1532 = vmatprep.subr.mxu0 %v1452
      %1533 = vmatpush1.msra.mxu0 %v1451
      %1534 = vmatprep.subr.mxu0 0.0
      %1535 = vmatpush1.msra.mxu0 0.0
      %1536 = vmatprep.subr.mxu0 0.0
      %1537 = vmatpush1.msra.mxu0 0.0
      %1538 = vmatprep.subr.mxu0 0.0
      %1539 = vmatpush1.msra.mxu0 0.0
      %1540 = vmatprep.subr.mxu0 0.0
      %1541 = vmatpush1.msra.mxu0 0.0
      %1542 = vmatprep.subr.mxu0 0.0
      %1543 = vmatpush1.msra.mxu0 0.0
      %1544 = vmatprep.subr.mxu0 0.0
      %1545 = vmatpush1.msra.mxu0 0.0
      %1546 = vmatprep.subr.mxu0 0.0
      %1547 = vmatpush1.msra.mxu0 0.0
      %1548 = vmatprep.subr.mxu0 0.0
      %1549 = vmatpush1.msra.mxu0 0.0
      %1550 = vmatprep.subr.mxu0 0.0
      %1551 = vmatpush1.msra.mxu0 0.0
      %1552 = vmatprep.subr.mxu0 0.0
      %1553 = vmatpush1.msra.mxu0 0.0
      %1554 = vmatprep.subr.mxu0 0.0
      %1555 = vmatpush1.msra.mxu0 0.0
      %1556 = vmatprep.subr.mxu0 0.0
      %1557 = vmatpush1.msra.mxu0 0.0
      %1558 = vmatprep.subr.mxu0 0.0
      %1559 = vmatpush1.msra.mxu0 0.0
      %1560 = vmatprep.subr.mxu0 0.0
      %1561 = vmatpush1.msra.mxu0 0.0
      %1562 = vmatprep.subr.mxu0 0.0
      %1563 = vmatpush1.msra.mxu0 0.0
      %1564 = vmatprep.subr.mxu0 0.0
      %1565 = vmatpush1.msra.mxu0 0.0
      %1566 = vmatprep.subr.mxu0 0.0
      %1567 = vmatpush1.msra.mxu0 0.0
      %1568 = vmatprep.subr.mxu0 0.0
      %1569 = vmatpush1.msra.mxu0 0.0
      %1570 = vmatprep.mubr.f32.mxu0 0.0
      %1571 = vmatmul.mubr.f32.gmra.mrb[0].mxu0 %v1465
      %v1572 = vpop.f32.mrb[0].mxu0
      %v1573 = vadd.f32 0.0, %v1572
      %v1574 = vpop.f32.mrb[0].mxu0
      %v1575 = vadd.f32 0.0, %v1574
      %1576 = vmatprep.mubr.f32.mxu0 0.0
      %1577 = vmatmul.mubr.f32.gmra.mrb[0].mxu0 %v1468
      %v1578 = vpop.f32.mrb[0].mxu0
      %v1579 = vadd.f32 0.0, %v1578
      %v1580 = vpop.f32.mrb[0].mxu0
      %v1581 = vadd.f32 0.0, %v1580
      %1582 = vmatprep.mubr.f32.mxu0 0.0
      %1583 = vmatmul.mubr.f32.gmra.mrb[0].mxu0 %v1471
      %v1584 = vpop.f32.mrb[0].mxu0
      %v1585 = vadd.f32 0.0, %v1584
      %v1586 = vpop.f32.mrb[0].mxu0
      %v1587 = vadd.f32 0.0, %v1586
      %1588 = vmatprep.mubr.f32.mxu0 0.0
      %1589 = vmatmul.mubr.f32.gmra.mrb[0].mxu0 %v1474
      %v1590 = vpop.f32.mrb[0].mxu0
      %v1591 = vadd.f32 0.0, %v1590
      %v1592 = vpop.f32.mrb[0].mxu0
      %v1593 = vadd.f32 0.0, %v1592
      %1594 = vmatprep.mubr.f32.mxu0 0.0
      %1595 = vmatmul.mubr.f32.gmra.mrb[0].mxu0 %v1477
      %v1596 = vpop.f32.mrb[0].mxu0
      %v1597 = vadd.f32 0.0, %v1596
      %v1598 = vpop.f32.mrb[0].mxu0
      %v1599 = vadd.f32 0.0, %v1598
      %1600 = vmatprep.mubr.f32.mxu0 0.0
      %1601 = vmatmul.mubr.f32.gmra.mrb[0].mxu0 %v1480
      %v1602 = vpop.f32.mrb[0].mxu0
      %v1603 = vadd.f32 0.0, %v1602
      %v1604 = vpop.f32.mrb[0].mxu0
      %v1605 = vadd.f32 0.0, %v1604
      %1606 = vmatprep.mubr.f32.mxu0 0.0
      %1607 = vmatmul.mubr.f32.gmra.mrb[0].mxu0 %v1483
      %v1608 = vpop.f32.mrb[0].mxu0
      %v1609 = vadd.f32 0.0, %v1608
      %v1610 = vpop.f32.mrb[0].mxu0
      %v1611 = vadd.f32 0.0, %v1610
      %1612 = vmatprep.mubr.f32.mxu0 0.0
      %1613 = vmatmul.mubr.f32.gmra.mrb[0].mxu0 %v1486
      %v1614 = vpop.f32.mrb[0].mxu0
      %v1615 = vadd.f32 0.0, %v1614
      %v1616 = vpop.f32.mrb[0].mxu0
      %v1617 = vadd.f32 0.0, %v1616
      %1618 = vmatprep.mubr.f32.mxu0 0.0
      %1619 = vmatmul.mubr.f32.gmra.mrb[0].mxu0 %v1489
      %v1620 = vpop.f32.mrb[0].mxu0
      %v1621 = vadd.f32 0.0, %v1620
      %v1622 = vpop.f32.mrb[0].mxu0
      %v1623 = vadd.f32 0.0, %v1622
      %1624 = vmatprep.mubr.f32.mxu0 0.0
      %1625 = vmatmul.mubr.f32.gmra.mrb[0].mxu0 %v1492
      %v1626 = vpop.f32.mrb[0].mxu0
      %v1627 = vadd.f32 0.0, %v1626
      %v1628 = vpop.f32.mrb[0].mxu0
      %v1629 = vadd.f32 0.0, %v1628
      %1630 = vmatprep.mubr.f32.mxu0 0.0
      %1631 = vmatmul.mubr.f32.gmra.mrb[0].mxu0 %v1495
      %v1632 = vpop.f32.mrb[0].mxu0
      %v1633 = vadd.f32 0.0, %v1632
      %v1634 = vpop.f32.mrb[0].mxu0
      %v1635 = vadd.f32 0.0, %v1634
      %1636 = vmatprep.mubr.f32.mxu0 0.0
      %1637 = vmatmul.mubr.f32.gmra.mrb[0].mxu0 %v1498
      %v1638 = vpop.f32.mrb[0].mxu0
      %v1639 = vadd.f32 0.0, %v1638
      %v1640 = vpop.f32.mrb[0].mxu0
      %v1641 = vadd.f32 0.0, %v1640
      %1642 = vmatprep.mubr.f32.mxu0 0.0
      %1643 = vmatmul.mubr.f32.gmra.mrb[0].mxu0 %v1501
      %v1644 = vpop.f32.mrb[0].mxu0
      %v1645 = vadd.f32 0.0, %v1644
      %v1646 = vpop.f32.mrb[0].mxu0
      %v1647 = vadd.f32 0.0, %v1646
      %1648 = vmatprep.mubr.f32.mxu0 0.0
      %1649 = vmatmul.mubr.f32.gmra.mrb[0].mxu0 %v1504
      %v1650 = vpop.f32.mrb[0].mxu0
      %v1651 = vadd.f32 0.0, %v1650
      %v1652 = vpop.f32.mrb[0].mxu0
      %v1653 = vadd.f32 0.0, %v1652
      %1654 = vdwg.mxu0
      %1655 = vmatprep.subr.mxu0 %v1298
      %1656 = vmatpush1.msra.mxu0 %v1297
      %1657 = vmatprep.subr.mxu0 %v1310
      %1658 = vmatpush1.msra.mxu0 %v1309
      %1659 = vmatprep.subr.mxu0 %v1322
      %1660 = vmatpush1.msra.mxu0 %v1321
      %1661 = vmatprep.subr.mxu0 %v1334
      %1662 = vmatpush1.msra.mxu0 %v1333
      %1663 = vmatprep.subr.mxu0 %v1346
      %1664 = vmatpush1.msra.mxu0 %v1345
      %1665 = vmatprep.subr.mxu0 %v1358
      %1666 = vmatpush1.msra.mxu0 %v1357
      %1667 = vmatprep.subr.mxu0 %v1370
      %1668 = vmatpush1.msra.mxu0 %v1369
      %1669 = vmatprep.subr.mxu0 %v1382
      %1670 = vmatpush1.msra.mxu0 %v1381
      %1671 = vmatprep.subr.mxu0 %v1394
      %1672 = vmatpush1.msra.mxu0 %v1393
      %1673 = vmatprep.subr.mxu0 %v1406
      %1674 = vmatpush1.msra.mxu0 %v1405
      %1675 = vmatprep.subr.mxu0 %v1418
      %1676 = vmatpush1.msra.mxu0 %v1417
      %1677 = vmatprep.subr.mxu0 %v1430
      %1678 = vmatpush1.msra.mxu0 %v1429
      %1679 = vmatprep.subr.mxu0 %v1442
      %1680 = vmatpush1.msra.mxu0 %v1441
      %1681 = vmatprep.subr.mxu0 %v1454
      %1682 = vmatpush1.msra.mxu0 %v1453
      %1683 = vmatprep.subr.mxu0 0.0
      %1684 = vmatpush1.msra.mxu0 0.0
      %1685 = vmatprep.subr.mxu0 0.0
      %1686 = vmatpush1.msra.mxu0 0.0
      %1687 = vmatprep.subr.mxu0 0.0
      %1688 = vmatpush1.msra.mxu0 0.0
      %1689 = vmatprep.subr.mxu0 0.0
      %1690 = vmatpush1.msra.mxu0 0.0
      %1691 = vmatprep.subr.mxu0 0.0
      %1692 = vmatpush1.msra.mxu0 0.0
      %1693 = vmatprep.subr.mxu0 0.0
      %1694 = vmatpush1.msra.mxu0 0.0
      %1695 = vmatprep.subr.mxu0 0.0
      %1696 = vmatpush1.msra.mxu0 0.0
      %1697 = vmatprep.subr.mxu0 0.0
      %1698 = vmatpush1.msra.mxu0 0.0
      %1699 = vmatprep.subr.mxu0 0.0
      %1700 = vmatpush1.msra.mxu0 0.0
      %1701 = vmatprep.subr.mxu0 0.0
      %1702 = vmatpush1.msra.mxu0 0.0
      %1703 = vmatprep.subr.mxu0 0.0
      %1704 = vmatpush1.msra.mxu0 0.0
      %1705 = vmatprep.subr.mxu0 0.0
      %1706 = vmatpush1.msra.mxu0 0.0
      %1707 = vmatprep.subr.mxu0 0.0
      %1708 = vmatpush1.msra.mxu0 0.0
      %1709 = vmatprep.subr.mxu0 0.0
      %1710 = vmatpush1.msra.mxu0 0.0
      %1711 = vmatprep.subr.mxu0 0.0
      %1712 = vmatpush1.msra.mxu0 0.0
      %1713 = vmatprep.subr.mxu0 0.0
      %1714 = vmatpush1.msra.mxu0 0.0
      %1715 = vmatprep.subr.mxu0 0.0
      %1716 = vmatpush1.msra.mxu0 0.0
      %1717 = vmatprep.subr.mxu0 0.0
      %1718 = vmatpush1.msra.mxu0 0.0
      %1719 = vmatprep.mubr.f32.mxu0 0.0
      %1720 = vmatmul.mubr.f32.gmra.mrb[0].mxu0 %v1465
      %v1721 = vpop.f32.mrb[0].mxu0
      %v1722 = vadd.f32 0.0, %v1721
      %v1723 = vpop.f32.mrb[0].mxu0
      %v1724 = vadd.f32 0.0, %v1723
      %1725 = vmatprep.mubr.f32.mxu0 0.0
      %1726 = vmatmul.mubr.f32.gmra.mrb[0].mxu0 %v1468
      %v1727 = vpop.f32.mrb[0].mxu0
      %v1728 = vadd.f32 0.0, %v1727
      %v1729 = vpop.f32.mrb[0].mxu0
      %v1730 = vadd.f32 0.0, %v1729
      %1731 = vmatprep.mubr.f32.mxu0 0.0
      %1732 = vmatmul.mubr.f32.gmra.mrb[0].mxu0 %v1471
      %v1733 = vpop.f32.mrb[0].mxu0
      %v1734 = vadd.f32 0.0, %v1733
      %v1735 = vpop.f32.mrb[0].mxu0
      %v1736 = vadd.f32 0.0, %v1735
      %1737 = vmatprep.mubr.f32.mxu0 0.0
      %1738 = vmatmul.mubr.f32.gmra.mrb[0].mxu0 %v1474
      %v1739 = vpop.f32.mrb[0].mxu0
      %v1740 = vadd.f32 0.0, %v1739
      %v1741 = vpop.f32.mrb[0].mxu0
      %v1742 = vadd.f32 0.0, %v1741
      %1743 = vmatprep.mubr.f32.mxu0 0.0
      %1744 = vmatmul.mubr.f32.gmra.mrb[0].mxu0 %v1477
      %v1745 = vpop.f32.mrb[0].mxu0
      %v1746 = vadd.f32 0.0, %v1745
      %v1747 = vpop.f32.mrb[0].mxu0
      %v1748 = vadd.f32 0.0, %v1747
      %1749 = vmatprep.mubr.f32.mxu0 0.0
      %1750 = vmatmul.mubr.f32.gmra.mrb[0].mxu0 %v1480
      %v1751 = vpop.f32.mrb[0].mxu0
      %v1752 = vadd.f32 0.0, %v1751
      %v1753 = vpop.f32.mrb[0].mxu0
      %v1754 = vadd.f32 0.0, %v1753
      %1755 = vmatprep.mubr.f32.mxu0 0.0
      %1756 = vmatmul.mubr.f32.gmra.mrb[0].mxu0 %v1483
      %v1757 = vpop.f32.mrb[0].mxu0
      %v1758 = vadd.f32 0.0, %v1757
      %v1759 = vpop.f32.mrb[0].mxu0
      %v1760 = vadd.f32 0.0, %v1759
      %1761 = vmatprep.mubr.f32.mxu0 0.0
      %1762 = vmatmul.mubr.f32.gmra.mrb[0].mxu0 %v1486
      %v1763 = vpop.f32.mrb[0].mxu0
      %v1764 = vadd.f32 0.0, %v1763
      %v1765 = vpop.f32.mrb[0].mxu0
      %v1766 = vadd.f32 0.0, %v1765
      %1767 = vmatprep.mubr.f32.mxu0 0.0
      %1768 = vmatmul.mubr.f32.gmra.mrb[0].mxu0 %v1489
      %v1769 = vpop.f32.mrb[0].mxu0
      %v1770 = vadd.f32 0.0, %v1769
      %v1771 = vpop.f32.mrb[0].mxu0
      %v1772 = vadd.f32 0.0, %v1771
      %1773 = vmatprep.mubr.f32.mxu0 0.0
      %1774 = vmatmul.mubr.f32.gmra.mrb[0].mxu0 %v1492
      %v1775 = vpop.f32.mrb[0].mxu0
      %v1776 = vadd.f32 0.0, %v1775
      %v1777 = vpop.f32.mrb[0].mxu0
      %v1778 = vadd.f32 0.0, %v1777
      %1779 = vmatprep.mubr.f32.mxu0 0.0
      %1780 = vmatmul.mubr.f32.gmra.mrb[0].mxu0 %v1495
      %v1781 = vpop.f32.mrb[0].mxu0
      %v1782 = vadd.f32 0.0, %v1781
      %v1783 = vpop.f32.mrb[0].mxu0
      %v1784 = vadd.f32 0.0, %v1783
      %1785 = vmatprep.mubr.f32.mxu0 0.0
      %1786 = vmatmul.mubr.f32.gmra.mrb[0].mxu0 %v1498
      %v1787 = vpop.f32.mrb[0].mxu0
      %v1788 = vadd.f32 0.0, %v1787
      %v1789 = vpop.f32.mrb[0].mxu0
      %v1790 = vadd.f32 0.0, %v1789
      %1791 = vmatprep.mubr.f32.mxu0 0.0
      %1792 = vmatmul.mubr.f32.gmra.mrb[0].mxu0 %v1501
      %v1793 = vpop.f32.mrb[0].mxu0
      %v1794 = vadd.f32 0.0, %v1793
      %v1795 = vpop.f32.mrb[0].mxu0
      %v1796 = vadd.f32 0.0, %v1795
      %1797 = vmatprep.mubr.f32.mxu0 0.0
      %1798 = vmatmul.mubr.f32.gmra.mrb[0].mxu0 %v1504
      %v1799 = vpop.f32.mrb[0].mxu0
      %v1800 = vadd.f32 0.0, %v1799
      %v1801 = vpop.f32.mrb[0].mxu0
      %v1802 = vadd.f32 0.0, %v1801
      %1803 = vdwg.mxu0
      %1804 = vmatprep.subr.mxu0 %v1300
      %1805 = vmatpush1.msra.mxu0 %v1299
      %1806 = vmatprep.subr.mxu0 %v1312
      %1807 = vmatpush1.msra.mxu0 %v1311
      %1808 = vmatprep.subr.mxu0 %v1324
      %1809 = vmatpush1.msra.mxu0 %v1323
      %1810 = vmatprep.subr.mxu0 %v1336
      %1811 = vmatpush1.msra.mxu0 %v1335
      %1812 = vmatprep.subr.mxu0 %v1348
      %1813 = vmatpush1.msra.mxu0 %v1347
      %1814 = vmatprep.subr.mxu0 %v1360
      %1815 = vmatpush1.msra.mxu0 %v1359
      %1816 = vmatprep.subr.mxu0 %v1372
      %1817 = vmatpush1.msra.mxu0 %v1371
      %1818 = vmatprep.subr.mxu0 %v1384
      %1819 = vmatpush1.msra.mxu0 %v1383
      %1820 = vmatprep.subr.mxu0 %v1396
      %1821 = vmatpush1.msra.mxu0 %v1395
      %1822 = vmatprep.subr.mxu0 %v1408
      %1823 = vmatpush1.msra.mxu0 %v1407
      %1824 = vmatprep.subr.mxu0 %v1420
      %1825 = vmatpush1.msra.mxu0 %v1419
      %1826 = vmatprep.subr.mxu0 %v1432
      %1827 = vmatpush1.msra.mxu0 %v1431
      %1828 = vmatprep.subr.mxu0 %v1444
      %1829 = vmatpush1.msra.mxu0 %v1443
      %1830 = vmatprep.subr.mxu0 %v1456
      %1831 = vmatpush1.msra.mxu0 %v1455
      %1832 = vmatprep.subr.mxu0 0.0
      %1833 = vmatpush1.msra.mxu0 0.0
      %1834 = vmatprep.subr.mxu0 0.0
      %1835 = vmatpush1.msra.mxu0 0.0
      %1836 = vmatprep.subr.mxu0 0.0
      %1837 = vmatpush1.msra.mxu0 0.0
      %1838 = vmatprep.subr.mxu0 0.0
      %1839 = vmatpush1.msra.mxu0 0.0
      %1840 = vmatprep.subr.mxu0 0.0
      %1841 = vmatpush1.msra.mxu0 0.0
      %1842 = vmatprep.subr.mxu0 0.0
      %1843 = vmatpush1.msra.mxu0 0.0
      %1844 = vmatprep.subr.mxu0 0.0
      %1845 = vmatpush1.msra.mxu0 0.0
      %1846 = vmatprep.subr.mxu0 0.0
      %1847 = vmatpush1.msra.mxu0 0.0
      %1848 = vmatprep.subr.mxu0 0.0
      %1849 = vmatpush1.msra.mxu0 0.0
      %1850 = vmatprep.subr.mxu0 0.0
      %1851 = vmatpush1.msra.mxu0 0.0
      %1852 = vmatprep.subr.mxu0 0.0
      %1853 = vmatpush1.msra.mxu0 0.0
      %1854 = vmatprep.subr.mxu0 0.0
      %1855 = vmatpush1.msra.mxu0 0.0
      %1856 = vmatprep.subr.mxu0 0.0
      %1857 = vmatpush1.msra.mxu0 0.0
      %1858 = vmatprep.subr.mxu0 0.0
      %1859 = vmatpush1.msra.mxu0 0.0
      %1860 = vmatprep.subr.mxu0 0.0
      %1861 = vmatpush1.msra.mxu0 0.0
      %1862 = vmatprep.subr.mxu0 0.0
      %1863 = vmatpush1.msra.mxu0 0.0
      %1864 = vmatprep.subr.mxu0 0.0
      %1865 = vmatpush1.msra.mxu0 0.0
      %1866 = vmatprep.subr.mxu0 0.0
      %1867 = vmatpush1.msra.mxu0 0.0
      %1868 = vmatprep.mubr.f32.mxu0 0.0
      %1869 = vmatmul.mubr.f32.gmra.mrb[0].mxu0 %v1465
      %v1870 = vpop.f32.mrb[0].mxu0
      %v1871 = vadd.f32 0.0, %v1870
      %v1872 = vpop.f32.mrb[0].mxu0
      %v1873 = vadd.f32 0.0, %v1872
      %1874 = vmatprep.mubr.f32.mxu0 0.0
      %1875 = vmatmul.mubr.f32.gmra.mrb[0].mxu0 %v1468
      %v1876 = vpop.f32.mrb[0].mxu0
      %v1877 = vadd.f32 0.0, %v1876
      %v1878 = vpop.f32.mrb[0].mxu0
      %v1879 = vadd.f32 0.0, %v1878
      %1880 = vmatprep.mubr.f32.mxu0 0.0
      %1881 = vmatmul.mubr.f32.gmra.mrb[0].mxu0 %v1471
      %v1882 = vpop.f32.mrb[0].mxu0
      %v1883 = vadd.f32 0.0, %v1882
      %v1884 = vpop.f32.mrb[0].mxu0
      %v1885 = vadd.f32 0.0, %v1884
      %1886 = vmatprep.mubr.f32.mxu0 0.0
      %1887 = vmatmul.mubr.f32.gmra.mrb[0].mxu0 %v1474
      %v1888 = vpop.f32.mrb[0].mxu0
      %v1889 = vadd.f32 0.0, %v1888
      %v1890 = vpop.f32.mrb[0].mxu0
      %v1891 = vadd.f32 0.0, %v1890
      %1892 = vmatprep.mubr.f32.mxu0 0.0
      %1893 = vmatmul.mubr.f32.gmra.mrb[0].mxu0 %v1477
      %v1894 = vpop.f32.mrb[0].mxu0
      %v1895 = vadd.f32 0.0, %v1894
      %v1896 = vpop.f32.mrb[0].mxu0
      %v1897 = vadd.f32 0.0, %v1896
      %1898 = vmatprep.mubr.f32.mxu0 0.0
      %1899 = vmatmul.mubr.f32.gmra.mrb[0].mxu0 %v1480
      %v1900 = vpop.f32.mrb[0].mxu0
      %v1901 = vadd.f32 0.0, %v1900
      %v1902 = vpop.f32.mrb[0].mxu0
      %v1903 = vadd.f32 0.0, %v1902
      %1904 = vmatprep.mubr.f32.mxu0 0.0
      %1905 = vmatmul.mubr.f32.gmra.mrb[0].mxu0 %v1483
      %v1906 = vpop.f32.mrb[0].mxu0
      %v1907 = vadd.f32 0.0, %v1906
      %v1908 = vpop.f32.mrb[0].mxu0
      %v1909 = vadd.f32 0.0, %v1908
      %1910 = vmatprep.mubr.f32.mxu0 0.0
      %1911 = vmatmul.mubr.f32.gmra.mrb[0].mxu0 %v1486
      %v1912 = vpop.f32.mrb[0].mxu0
      %v1913 = vadd.f32 0.0, %v1912
      %v1914 = vpop.f32.mrb[0].mxu0
      %v1915 = vadd.f32 0.0, %v1914
      %1916 = vmatprep.mubr.f32.mxu0 0.0
      %1917 = vmatmul.mubr.f32.gmra.mrb[0].mxu0 %v1489
      %v1918 = vpop.f32.mrb[0].mxu0
      %v1919 = vadd.f32 0.0, %v1918
      %v1920 = vpop.f32.mrb[0].mxu0
      %v1921 = vadd.f32 0.0, %v1920
      %1922 = vmatprep.mubr.f32.mxu0 0.0
      %1923 = vmatmul.mubr.f32.gmra.mrb[0].mxu0 %v1492
      %v1924 = vpop.f32.mrb[0].mxu0
      %v1925 = vadd.f32 0.0, %v1924
      %v1926 = vpop.f32.mrb[0].mxu0
      %v1927 = vadd.f32 0.0, %v1926
      %1928 = vmatprep.mubr.f32.mxu0 0.0
      %1929 = vmatmul.mubr.f32.gmra.mrb[0].mxu0 %v1495
      %v1930 = vpop.f32.mrb[0].mxu0
      %v1931 = vadd.f32 0.0, %v1930
      %v1932 = vpop.f32.mrb[0].mxu0
      %v1933 = vadd.f32 0.0, %v1932
      %1934 = vmatprep.mubr.f32.mxu0 0.0
      %1935 = vmatmul.mubr.f32.gmra.mrb[0].mxu0 %v1498
      %v1936 = vpop.f32.mrb[0].mxu0
      %v1937 = vadd.f32 0.0, %v1936
      %v1938 = vpop.f32.mrb[0].mxu0
      %v1939 = vadd.f32 0.0, %v1938
      %1940 = vmatprep.mubr.f32.mxu0 0.0
      %1941 = vmatmul.mubr.f32.gmra.mrb[0].mxu0 %v1501
      %v1942 = vpop.f32.mrb[0].mxu0
      %v1943 = vadd.f32 0.0, %v1942
      %v1944 = vpop.f32.mrb[0].mxu0
      %v1945 = vadd.f32 0.0, %v1944
      %1946 = vmatprep.mubr.f32.mxu0 0.0
      %1947 = vmatmul.mubr.f32.gmra.mrb[0].mxu0 %v1504
      %v1948 = vpop.f32.mrb[0].mxu0
      %v1949 = vadd.f32 0.0, %v1948
      %v1950 = vpop.f32.mrb[0].mxu0
      %v1951 = vadd.f32 0.0, %v1950
      %1952 = vdwg.mxu0
      %1953 = vmatprep.subr.mxu0 %v1302
      %1954 = vmatpush1.msra.mxu0 %v1301
      %1955 = vmatprep.subr.mxu0 %v1314
      %1956 = vmatpush1.msra.mxu0 %v1313
      %1957 = vmatprep.subr.mxu0 %v1326
      %1958 = vmatpush1.msra.mxu0 %v1325
      %1959 = vmatprep.subr.mxu0 %v1338
      %1960 = vmatpush1.msra.mxu0 %v1337
      %1961 = vmatprep.subr.mxu0 %v1350
      %1962 = vmatpush1.msra.mxu0 %v1349
      %1963 = vmatprep.subr.mxu0 %v1362
      %1964 = vmatpush1.msra.mxu0 %v1361
      %1965 = vmatprep.subr.mxu0 %v1374
      %1966 = vmatpush1.msra.mxu0 %v1373
      %1967 = vmatprep.subr.mxu0 %v1386
      %1968 = vmatpush1.msra.mxu0 %v1385
      %1969 = vmatprep.subr.mxu0 %v1398
      %1970 = vmatpush1.msra.mxu0 %v1397
      %1971 = vmatprep.subr.mxu0 %v1410
      %1972 = vmatpush1.msra.mxu0 %v1409
      %1973 = vmatprep.subr.mxu0 %v1422
      %1974 = vmatpush1.msra.mxu0 %v1421
      %1975 = vmatprep.subr.mxu0 %v1434
      %1976 = vmatpush1.msra.mxu0 %v1433
      %1977 = vmatprep.subr.mxu0 %v1446
      %1978 = vmatpush1.msra.mxu0 %v1445
      %1979 = vmatprep.subr.mxu0 %v1458
      %1980 = vmatpush1.msra.mxu0 %v1457
      %1981 = vmatprep.subr.mxu0 0.0
      %1982 = vmatpush1.msra.mxu0 0.0
      %1983 = vmatprep.subr.mxu0 0.0
      %1984 = vmatpush1.msra.mxu0 0.0
      %1985 = vmatprep.subr.mxu0 0.0
      %1986 = vmatpush1.msra.mxu0 0.0
      %1987 = vmatprep.subr.mxu0 0.0
      %1988 = vmatpush1.msra.mxu0 0.0
      %1989 = vmatprep.subr.mxu0 0.0
      %1990 = vmatpush1.msra.mxu0 0.0
      %1991 = vmatprep.subr.mxu0 0.0
      %1992 = vmatpush1.msra.mxu0 0.0
      %1993 = vmatprep.subr.mxu0 0.0
      %1994 = vmatpush1.msra.mxu0 0.0
      %1995 = vmatprep.subr.mxu0 0.0
      %1996 = vmatpush1.msra.mxu0 0.0
      %1997 = vmatprep.subr.mxu0 0.0
      %1998 = vmatpush1.msra.mxu0 0.0
      %1999 = vmatprep.subr.mxu0 0.0
      %2000 = vmatpush1.msra.mxu0 0.0
      %2001 = vmatprep.subr.mxu0 0.0
      %2002 = vmatpush1.msra.mxu0 0.0
      %2003 = vmatprep.subr.mxu0 0.0
      %2004 = vmatpush1.msra.mxu0 0.0
      %2005 = vmatprep.subr.mxu0 0.0
      %2006 = vmatpush1.msra.mxu0 0.0
      %2007 = vmatprep.subr.mxu0 0.0
      %2008 = vmatpush1.msra.mxu0 0.0
      %2009 = vmatprep.subr.mxu0 0.0
      %2010 = vmatpush1.msra.mxu0 0.0
      %2011 = vmatprep.subr.mxu0 0.0
      %2012 = vmatpush1.msra.mxu0 0.0
      %2013 = vmatprep.subr.mxu0 0.0
      %2014 = vmatpush1.msra.mxu0 0.0
      %2015 = vmatprep.subr.mxu0 0.0
      %2016 = vmatpush1.msra.mxu0 0.0
      %2017 = vmatprep.mubr.f32.mxu0 0.0
      %2018 = vmatmul.mubr.f32.gmra.mrb[0].mxu0 %v1465
      %v2019 = vpop.f32.mrb[0].mxu0
      %v2020 = vadd.f32 0.0, %v2019
      %v2021 = vpop.f32.mrb[0].mxu0
      %v2022 = vadd.f32 0.0, %v2021
      %2023 = vmatprep.mubr.f32.mxu0 0.0
      %2024 = vmatmul.mubr.f32.gmra.mrb[0].mxu0 %v1468
      %v2025 = vpop.f32.mrb[0].mxu0
      %v2026 = vadd.f32 0.0, %v2025
      %v2027 = vpop.f32.mrb[0].mxu0
      %v2028 = vadd.f32 0.0, %v2027
      %2029 = vmatprep.mubr.f32.mxu0 0.0
      %2030 = vmatmul.mubr.f32.gmra.mrb[0].mxu0 %v1471
      %v2031 = vpop.f32.mrb[0].mxu0
      %v2032 = vadd.f32 0.0, %v2031
      %v2033 = vpop.f32.mrb[0].mxu0
      %v2034 = vadd.f32 0.0, %v2033
      %2035 = vmatprep.mubr.f32.mxu0 0.0
      %2036 = vmatmul.mubr.f32.gmra.mrb[0].mxu0 %v1474
      %v2037 = vpop.f32.mrb[0].mxu0
      %v2038 = vadd.f32 0.0, %v2037
      %v2039 = vpop.f32.mrb[0].mxu0
      %v2040 = vadd.f32 0.0, %v2039
      %2041 = vmatprep.mubr.f32.mxu0 0.0
      %2042 = vmatmul.mubr.f32.gmra.mrb[0].mxu0 %v1477
      %v2043 = vpop.f32.mrb[0].mxu0
      %v2044 = vadd.f32 0.0, %v2043
      %v2045 = vpop.f32.mrb[0].mxu0
      %v2046 = vadd.f32 0.0, %v2045
      %2047 = vmatprep.mubr.f32.mxu0 0.0
      %2048 = vmatmul.mubr.f32.gmra.mrb[0].mxu0 %v1480
      %v2049 = vpop.f32.mrb[0].mxu0
      %v2050 = vadd.f32 0.0, %v2049
      %v2051 = vpop.f32.mrb[0].mxu0
      %v2052 = vadd.f32 0.0, %v2051
      %2053 = vmatprep.mubr.f32.mxu0 0.0
      %2054 = vmatmul.mubr.f32.gmra.mrb[0].mxu0 %v1483
      %v2055 = vpop.f32.mrb[0].mxu0
      %v2056 = vadd.f32 0.0, %v2055
      %v2057 = vpop.f32.mrb[0].mxu0
      %v2058 = vadd.f32 0.0, %v2057
      %2059 = vmatprep.mubr.f32.mxu0 0.0
      %2060 = vmatmul.mubr.f32.gmra.mrb[0].mxu0 %v1486
      %v2061 = vpop.f32.mrb[0].mxu0
      %v2062 = vadd.f32 0.0, %v2061
      %v2063 = vpop.f32.mrb[0].mxu0
      %v2064 = vadd.f32 0.0, %v2063
      %2065 = vmatprep.mubr.f32.mxu0 0.0
      %2066 = vmatmul.mubr.f32.gmra.mrb[0].mxu0 %v1489
      %v2067 = vpop.f32.mrb[0].mxu0
      %v2068 = vadd.f32 0.0, %v2067
      %v2069 = vpop.f32.mrb[0].mxu0
      %v2070 = vadd.f32 0.0, %v2069
      %2071 = vmatprep.mubr.f32.mxu0 0.0
      %2072 = vmatmul.mubr.f32.gmra.mrb[0].mxu0 %v1492
      %v2073 = vpop.f32.mrb[0].mxu0
      %v2074 = vadd.f32 0.0, %v2073
      %v2075 = vpop.f32.mrb[0].mxu0
      %v2076 = vadd.f32 0.0, %v2075
      %2077 = vmatprep.mubr.f32.mxu0 0.0
      %2078 = vmatmul.mubr.f32.gmra.mrb[0].mxu0 %v1495
      %v2079 = vpop.f32.mrb[0].mxu0
      %v2080 = vadd.f32 0.0, %v2079
      %v2081 = vpop.f32.mrb[0].mxu0
      %v2082 = vadd.f32 0.0, %v2081
      %2083 = vmatprep.mubr.f32.mxu0 0.0
      %2084 = vmatmul.mubr.f32.gmra.mrb[0].mxu0 %v1498
      %v2085 = vpop.f32.mrb[0].mxu0
      %v2086 = vadd.f32 0.0, %v2085
      %v2087 = vpop.f32.mrb[0].mxu0
      %v2088 = vadd.f32 0.0, %v2087
      %2089 = vmatprep.mubr.f32.mxu0 0.0
      %2090 = vmatmul.mubr.f32.gmra.mrb[0].mxu0 %v1501
      %v2091 = vpop.f32.mrb[0].mxu0
      %v2092 = vadd.f32 0.0, %v2091
      %v2093 = vpop.f32.mrb[0].mxu0
      %v2094 = vadd.f32 0.0, %v2093
      %2095 = vmatprep.mubr.f32.mxu0 0.0
      %2096 = vmatmul.mubr.f32.gmra.mrb[0].mxu0 %v1504
      %v2097 = vpop.f32.mrb[0].mxu0
      %v2098 = vadd.f32 0.0, %v2097
      %v2099 = vpop.f32.mrb[0].mxu0
      %v2100 = vadd.f32 0.0, %v2099
      %2101 = vdwg.mxu0
      %2102 = vmatprep.subr.mxu0 %v1304
      %2103 = vmatpush1.msra.mxu0 %v1303
      %2104 = vmatprep.subr.mxu0 %v1316
      %2105 = vmatpush1.msra.mxu0 %v1315
      %2106 = vmatprep.subr.mxu0 %v1328
      %2107 = vmatpush1.msra.mxu0 %v1327
      %2108 = vmatprep.subr.mxu0 %v1340
      %2109 = vmatpush1.msra.mxu0 %v1339
      %2110 = vmatprep.subr.mxu0 %v1352
      %2111 = vmatpush1.msra.mxu0 %v1351
      %2112 = vmatprep.subr.mxu0 %v1364
      %2113 = vmatpush1.msra.mxu0 %v1363
      %2114 = vmatprep.subr.mxu0 %v1376
      %2115 = vmatpush1.msra.mxu0 %v1375
      %2116 = vmatprep.subr.mxu0 %v1388
      %2117 = vmatpush1.msra.mxu0 %v1387
      %2118 = vmatprep.subr.mxu0 %v1400
      %2119 = vmatpush1.msra.mxu0 %v1399
      %2120 = vmatprep.subr.mxu0 %v1412
      %2121 = vmatpush1.msra.mxu0 %v1411
      %2122 = vmatprep.subr.mxu0 %v1424
      %2123 = vmatpush1.msra.mxu0 %v1423
      %2124 = vmatprep.subr.mxu0 %v1436
      %2125 = vmatpush1.msra.mxu0 %v1435
      %2126 = vmatprep.subr.mxu0 %v1448
      %2127 = vmatpush1.msra.mxu0 %v1447
      %2128 = vmatprep.subr.mxu0 %v1460
      %2129 = vmatpush1.msra.mxu0 %v1459
      %2130 = vmatprep.subr.mxu0 0.0
      %2131 = vmatpush1.msra.mxu0 0.0
      %2132 = vmatprep.subr.mxu0 0.0
      %2133 = vmatpush1.msra.mxu0 0.0
      %2134 = vmatprep.subr.mxu0 0.0
      %2135 = vmatpush1.msra.mxu0 0.0
      %2136 = vmatprep.subr.mxu0 0.0
      %2137 = vmatpush1.msra.mxu0 0.0
      %2138 = vmatprep.subr.mxu0 0.0
      %2139 = vmatpush1.msra.mxu0 0.0
      %2140 = vmatprep.subr.mxu0 0.0
      %2141 = vmatpush1.msra.mxu0 0.0
      %2142 = vmatprep.subr.mxu0 0.0
      %2143 = vmatpush1.msra.mxu0 0.0
      %2144 = vmatprep.subr.mxu0 0.0
      %2145 = vmatpush1.msra.mxu0 0.0
      %2146 = vmatprep.subr.mxu0 0.0
      %2147 = vmatpush1.msra.mxu0 0.0
      %2148 = vmatprep.subr.mxu0 0.0
      %2149 = vmatpush1.msra.mxu0 0.0
      %2150 = vmatprep.subr.mxu0 0.0
      %2151 = vmatpush1.msra.mxu0 0.0
      %2152 = vmatprep.subr.mxu0 0.0
      %2153 = vmatpush1.msra.mxu0 0.0
      %2154 = vmatprep.subr.mxu0 0.0
      %2155 = vmatpush1.msra.mxu0 0.0
      %2156 = vmatprep.subr.mxu0 0.0
      %2157 = vmatpush1.msra.mxu0 0.0
      %2158 = vmatprep.subr.mxu0 0.0
      %2159 = vmatpush1.msra.mxu0 0.0
      %2160 = vmatprep.subr.mxu0 0.0
      %2161 = vmatpush1.msra.mxu0 0.0
      %2162 = vmatprep.subr.mxu0 0.0
      %2163 = vmatpush1.msra.mxu0 0.0
      %2164 = vmatprep.subr.mxu0 0.0
      %2165 = vmatpush1.msra.mxu0 0.0
      %2166 = vmatprep.mubr.f32.mxu0 0.0
      %2167 = vmatmul.mubr.f32.gmra.mrb[0].mxu0 %v1465
      %v2168 = vpop.f32.mrb[0].mxu0
      %v2169 = vadd.f32 0.0, %v2168
      %v2170 = vpop.f32.mrb[0].mxu0
      %v2171 = vadd.f32 0.0, %v2170
      %2172 = vmatprep.mubr.f32.mxu0 0.0
      %2173 = vmatmul.mubr.f32.gmra.mrb[0].mxu0 %v1468
      %v2174 = vpop.f32.mrb[0].mxu0
      %v2175 = vadd.f32 0.0, %v2174
      %v2176 = vpop.f32.mrb[0].mxu0
      %v2177 = vadd.f32 0.0, %v2176
      %2178 = vmatprep.mubr.f32.mxu0 0.0
      %2179 = vmatmul.mubr.f32.gmra.mrb[0].mxu0 %v1471
      %v2180 = vpop.f32.mrb[0].mxu0
      %v2181 = vadd.f32 0.0, %v2180
      %v2182 = vpop.f32.mrb[0].mxu0
      %v2183 = vadd.f32 0.0, %v2182
      %2184 = vmatprep.mubr.f32.mxu0 0.0
      %2185 = vmatmul.mubr.f32.gmra.mrb[0].mxu0 %v1474
      %v2186 = vpop.f32.mrb[0].mxu0
      %v2187 = vadd.f32 0.0, %v2186
      %v2188 = vpop.f32.mrb[0].mxu0
      %v2189 = vadd.f32 0.0, %v2188
      %2190 = vmatprep.mubr.f32.mxu0 0.0
      %2191 = vmatmul.mubr.f32.gmra.mrb[0].mxu0 %v1477
      %v2192 = vpop.f32.mrb[0].mxu0
      %v2193 = vadd.f32 0.0, %v2192
      %v2194 = vpop.f32.mrb[0].mxu0
      %v2195 = vadd.f32 0.0, %v2194
      %2196 = vmatprep.mubr.f32.mxu0 0.0
      %2197 = vmatmul.mubr.f32.gmra.mrb[0].mxu0 %v1480
      %v2198 = vpop.f32.mrb[0].mxu0
      %v2199 = vadd.f32 0.0, %v2198
      %v2200 = vpop.f32.mrb[0].mxu0
      %v2201 = vadd.f32 0.0, %v2200
      %2202 = vmatprep.mubr.f32.mxu0 0.0
      %2203 = vmatmul.mubr.f32.gmra.mrb[0].mxu0 %v1483
      %v2204 = vpop.f32.mrb[0].mxu0
      %v2205 = vadd.f32 0.0, %v2204
      %v2206 = vpop.f32.mrb[0].mxu0
      %v2207 = vadd.f32 0.0, %v2206
      %2208 = vmatprep.mubr.f32.mxu0 0.0
      %2209 = vmatmul.mubr.f32.gmra.mrb[0].mxu0 %v1486
      %v2210 = vpop.f32.mrb[0].mxu0
      %v2211 = vadd.f32 0.0, %v2210
      %v2212 = vpop.f32.mrb[0].mxu0
      %v2213 = vadd.f32 0.0, %v2212
      %2214 = vmatprep.mubr.f32.mxu0 0.0
      %2215 = vmatmul.mubr.f32.gmra.mrb[0].mxu0 %v1489
      %v2216 = vpop.f32.mrb[0].mxu0
      %v2217 = vadd.f32 0.0, %v2216
      %v2218 = vpop.f32.mrb[0].mxu0
      %v2219 = vadd.f32 0.0, %v2218
      %2220 = vmatprep.mubr.f32.mxu0 0.0
      %2221 = vmatmul.mubr.f32.gmra.mrb[0].mxu0 %v1492
      %v2222 = vpop.f32.mrb[0].mxu0
      %v2223 = vadd.f32 0.0, %v2222
      %v2224 = vpop.f32.mrb[0].mxu0
      %v2225 = vadd.f32 0.0, %v2224
      %2226 = vmatprep.mubr.f32.mxu0 0.0
      %2227 = vmatmul.mubr.f32.gmra.mrb[0].mxu0 %v1495
      %v2228 = vpop.f32.mrb[0].mxu0
      %v2229 = vadd.f32 0.0, %v2228
      %v2230 = vpop.f32.mrb[0].mxu0
      %v2231 = vadd.f32 0.0, %v2230
      %2232 = vmatprep.mubr.f32.mxu0 0.0
      %2233 = vmatmul.mubr.f32.gmra.mrb[0].mxu0 %v1498
      %v2234 = vpop.f32.mrb[0].mxu0
      %v2235 = vadd.f32 0.0, %v2234
      %v2236 = vpop.f32.mrb[0].mxu0
      %v2237 = vadd.f32 0.0, %v2236
      %2238 = vmatprep.mubr.f32.mxu0 0.0
      %2239 = vmatmul.mubr.f32.gmra.mrb[0].mxu0 %v1501
      %v2240 = vpop.f32.mrb[0].mxu0
      %v2241 = vadd.f32 0.0, %v2240
      %v2242 = vpop.f32.mrb[0].mxu0
      %v2243 = vadd.f32 0.0, %v2242
      %2244 = vmatprep.mubr.f32.mxu0 0.0
      %2245 = vmatmul.mubr.f32.gmra.mrb[0].mxu0 %v1504
      %v2246 = vpop.f32.mrb[0].mxu0
      %v2247 = vadd.f32 0.0, %v2246
      %v2248 = vpop.f32.mrb[0].mxu0
      %v2249 = vadd.f32 0.0, %v2248
      %2250 = vdwg.mxu0
      %2251 = vmatprep.subr.mxu0 %v1306
      %2252 = vmatpush1.msra.mxu0 %v1305
      %2253 = vmatprep.subr.mxu0 %v1318
      %2254 = vmatpush1.msra.mxu0 %v1317
      %2255 = vmatprep.subr.mxu0 %v1330
      %2256 = vmatpush1.msra.mxu0 %v1329
      %2257 = vmatprep.subr.mxu0 %v1342
      %2258 = vmatpush1.msra.mxu0 %v1341
      %2259 = vmatprep.subr.mxu0 %v1354
      %2260 = vmatpush1.msra.mxu0 %v1353
      %2261 = vmatprep.subr.mxu0 %v1366
      %2262 = vmatpush1.msra.mxu0 %v1365
      %2263 = vmatprep.subr.mxu0 %v1378
      %2264 = vmatpush1.msra.mxu0 %v1377
      %2265 = vmatprep.subr.mxu0 %v1390
      %2266 = vmatpush1.msra.mxu0 %v1389
      %2267 = vmatprep.subr.mxu0 %v1402
      %2268 = vmatpush1.msra.mxu0 %v1401
      %2269 = vmatprep.subr.mxu0 %v1414
      %2270 = vmatpush1.msra.mxu0 %v1413
      %2271 = vmatprep.subr.mxu0 %v1426
      %2272 = vmatpush1.msra.mxu0 %v1425
      %2273 = vmatprep.subr.mxu0 %v1438
      %2274 = vmatpush1.msra.mxu0 %v1437
      %2275 = vmatprep.subr.mxu0 %v1450
      %2276 = vmatpush1.msra.mxu0 %v1449
      %2277 = vmatprep.subr.mxu0 %v1462
      %2278 = vmatpush1.msra.mxu0 %v1461
      %2279 = vmatprep.subr.mxu0 0.0
      %2280 = vmatpush1.msra.mxu0 0.0
      %2281 = vmatprep.subr.mxu0 0.0
      %2282 = vmatpush1.msra.mxu0 0.0
      %2283 = vmatprep.subr.mxu0 0.0
      %2284 = vmatpush1.msra.mxu0 0.0
      %2285 = vmatprep.subr.mxu0 0.0
      %2286 = vmatpush1.msra.mxu0 0.0
      %2287 = vmatprep.subr.mxu0 0.0
      %2288 = vmatpush1.msra.mxu0 0.0
      %2289 = vmatprep.subr.mxu0 0.0
      %2290 = vmatpush1.msra.mxu0 0.0
      %2291 = vmatprep.subr.mxu0 0.0
      %2292 = vmatpush1.msra.mxu0 0.0
      %2293 = vmatprep.subr.mxu0 0.0
      %2294 = vmatpush1.msra.mxu0 0.0
      %2295 = vmatprep.subr.mxu0 0.0
      %2296 = vmatpush1.msra.mxu0 0.0
      %2297 = vmatprep.subr.mxu0 0.0
      %2298 = vmatpush1.msra.mxu0 0.0
      %2299 = vmatprep.subr.mxu0 0.0
      %2300 = vmatpush1.msra.mxu0 0.0
      %2301 = vmatprep.subr.mxu0 0.0
      %2302 = vmatpush1.msra.mxu0 0.0
      %2303 = vmatprep.subr.mxu0 0.0
      %2304 = vmatpush1.msra.mxu0 0.0
      %2305 = vmatprep.subr.mxu0 0.0
      %2306 = vmatpush1.msra.mxu0 0.0
      %2307 = vmatprep.subr.mxu0 0.0
      %2308 = vmatpush1.msra.mxu0 0.0
      %2309 = vmatprep.subr.mxu0 0.0
      %2310 = vmatpush1.msra.mxu0 0.0
      %2311 = vmatprep.subr.mxu0 0.0
      %2312 = vmatpush1.msra.mxu0 0.0
      %2313 = vmatprep.subr.mxu0 0.0
      %2314 = vmatpush1.msra.mxu0 0.0
      %2315 = vmatprep.mubr.f32.mxu0 0.0
      %2316 = vmatmul.mubr.f32.gmra.mrb[0].mxu0 %v1465
      %v2317 = vpop.f32.mrb[0].mxu0
      %v2318 = vadd.f32 0.0, %v2317
      %v2319 = vpop.f32.mrb[0].mxu0
      %v2320 = vadd.f32 0.0, %v2319
      %2321 = vmatprep.mubr.f32.mxu0 0.0
      %2322 = vmatmul.mubr.f32.gmra.mrb[0].mxu0 %v1468
      %v2323 = vpop.f32.mrb[0].mxu0
      %v2324 = vadd.f32 0.0, %v2323
      %v2325 = vpop.f32.mrb[0].mxu0
      %v2326 = vadd.f32 0.0, %v2325
      %2327 = vmatprep.mubr.f32.mxu0 0.0
      %2328 = vmatmul.mubr.f32.gmra.mrb[0].mxu0 %v1471
      %v2329 = vpop.f32.mrb[0].mxu0
      %v2330 = vadd.f32 0.0, %v2329
      %v2331 = vpop.f32.mrb[0].mxu0
      %v2332 = vadd.f32 0.0, %v2331
      %2333 = vmatprep.mubr.f32.mxu0 0.0
      %2334 = vmatmul.mubr.f32.gmra.mrb[0].mxu0 %v1474
      %v2335 = vpop.f32.mrb[0].mxu0
      %v2336 = vadd.f32 0.0, %v2335
      %v2337 = vpop.f32.mrb[0].mxu0
      %v2338 = vadd.f32 0.0, %v2337
      %2339 = vmatprep.mubr.f32.mxu0 0.0
      %2340 = vmatmul.mubr.f32.gmra.mrb[0].mxu0 %v1477
      %v2341 = vpop.f32.mrb[0].mxu0
      %v2342 = vadd.f32 0.0, %v2341
      %v2343 = vpop.f32.mrb[0].mxu0
      %v2344 = vadd.f32 0.0, %v2343
      %2345 = vmatprep.mubr.f32.mxu0 0.0
      %2346 = vmatmul.mubr.f32.gmra.mrb[0].mxu0 %v1480
      %v2347 = vpop.f32.mrb[0].mxu0
      %v2348 = vadd.f32 0.0, %v2347
      %v2349 = vpop.f32.mrb[0].mxu0
      %v2350 = vadd.f32 0.0, %v2349
      %2351 = vmatprep.mubr.f32.mxu0 0.0
      %2352 = vmatmul.mubr.f32.gmra.mrb[0].mxu0 %v1483
      %v2353 = vpop.f32.mrb[0].mxu0
      %v2354 = vadd.f32 0.0, %v2353
      %v2355 = vpop.f32.mrb[0].mxu0
      %v2356 = vadd.f32 0.0, %v2355
      %2357 = vmatprep.mubr.f32.mxu0 0.0
      %2358 = vmatmul.mubr.f32.gmra.mrb[0].mxu0 %v1486
      %v2359 = vpop.f32.mrb[0].mxu0
      %v2360 = vadd.f32 0.0, %v2359
      %v2361 = vpop.f32.mrb[0].mxu0
      %v2362 = vadd.f32 0.0, %v2361
      %2363 = vmatprep.mubr.f32.mxu0 0.0
      %2364 = vmatmul.mubr.f32.gmra.mrb[0].mxu0 %v1489
      %v2365 = vpop.f32.mrb[0].mxu0
      %v2366 = vadd.f32 0.0, %v2365
      %v2367 = vpop.f32.mrb[0].mxu0
      %v2368 = vadd.f32 0.0, %v2367
      %2369 = vmatprep.mubr.f32.mxu0 0.0
      %2370 = vmatmul.mubr.f32.gmra.mrb[0].mxu0 %v1492
      %v2371 = vpop.f32.mrb[0].mxu0
      %v2372 = vadd.f32 0.0, %v2371
      %v2373 = vpop.f32.mrb[0].mxu0
      %v2374 = vadd.f32 0.0, %v2373
      %2375 = vmatprep.mubr.f32.mxu0 0.0
      %2376 = vmatmul.mubr.f32.gmra.mrb[0].mxu0 %v1495
      %v2377 = vpop.f32.mrb[0].mxu0
      %v2378 = vadd.f32 0.0, %v2377
      %v2379 = vpop.f32.mrb[0].mxu0
      %v2380 = vadd.f32 0.0, %v2379
      %2381 = vmatprep.mubr.f32.mxu0 0.0
      %2382 = vmatmul.mubr.f32.gmra.mrb[0].mxu0 %v1498
      %v2383 = vpop.f32.mrb[0].mxu0
      %v2384 = vadd.f32 0.0, %v2383
      %v2385 = vpop.f32.mrb[0].mxu0
      %v2386 = vadd.f32 0.0, %v2385
      %2387 = vmatprep.mubr.f32.mxu0 0.0
      %2388 = vmatmul.mubr.f32.gmra.mrb[0].mxu0 %v1501
      %v2389 = vpop.f32.mrb[0].mxu0
      %v2390 = vadd.f32 0.0, %v2389
      %v2391 = vpop.f32.mrb[0].mxu0
      %v2392 = vadd.f32 0.0, %v2391
      %2393 = vmatprep.mubr.f32.mxu0 0.0
      %2394 = vmatmul.mubr.f32.gmra.mrb[0].mxu0 %v1504
      %v2395 = vpop.f32.mrb[0].mxu0
      %v2396 = vadd.f32 0.0, %v2395
      %v2397 = vpop.f32.mrb[0].mxu0
      %v2398 = vadd.f32 0.0, %v2397
      %2399 = vdwg.mxu0
      %2400 = vst [vmem:[#allocation3] sm:$0xff] %v1573
      %2401 = vst [vmem:[#allocation3 + $0x8] sm:$0xff] %v1575
      %2402 = vst [vmem:[#allocation3 + $0x10] sm:$0xff] %v1722
      %2403 = vst [vmem:[#allocation3 + $0x18] sm:$0xff] %v1724
      %2404 = vst [vmem:[#allocation3 + $0x20] sm:$0xff] %v1871
      %2405 = vst [vmem:[#allocation3 + $0x28] sm:$0xff] %v1873
      %2406 = vst [vmem:[#allocation3 + $0x30] sm:$0xff] %v2020
      %2407 = vst [vmem:[#allocation3 + $0x38] sm:$0xff] %v2022
      %2408 = vst [vmem:[#allocation3 + $0x40] sm:$0xff] %v2169
      %2409 = vst [vmem:[#allocation3 + $0x48] sm:$0xff] %v2171
      %2410 = vst [vmem:[#allocation3 + $0x50] sm:$0xff] %v2318
      %2411 = vst [vmem:[#allocation3 + $0x58] sm:$0xff] %v2320
      %2412 = vst [vmem:[#allocation3 + $0x60] sm:$0xff] %v1579
      %2413 = vst [vmem:[#allocation3 + $0x68] sm:$0xff] %v1581
      %2414 = vst [vmem:[#allocation3 + $0x70] sm:$0xff] %v1728
      %2415 = vst [vmem:[#allocation3 + $0x78] sm:$0xff] %v1730
      %2416 = vst [vmem:[#allocation3 + $0x80] sm:$0xff] %v1877
      %2417 = vst [vmem:[#allocation3 + $0x88] sm:$0xff] %v1879
      %2418 = vst [vmem:[#allocation3 + $0x90] sm:$0xff] %v2026
      %2419 = vst [vmem:[#allocation3 + $0x98] sm:$0xff] %v2028
      %2420 = vst [vmem:[#allocation3 + $0xa0] sm:$0xff] %v2175
      %2421 = vst [vmem:[#allocation3 + $0xa8] sm:$0xff] %v2177
      %2422 = vst [vmem:[#allocation3 + $0xb0] sm:$0xff] %v2324
      %2423 = vst [vmem:[#allocation3 + $0xb8] sm:$0xff] %v2326
      %2424 = vst [vmem:[#allocation3 + $0xc0] sm:$0xff] %v1585
      %2425 = vst [vmem:[#allocation3 + $0xc8] sm:$0xff] %v1587
      %2426 = vst [vmem:[#allocation3 + $0xd0] sm:$0xff] %v1734
      %2427 = vst [vmem:[#allocation3 + $0xd8] sm:$0xff] %v1736
      %2428 = vst [vmem:[#allocation3 + $0xe0] sm:$0xff] %v1883
      %2429 = vst [vmem:[#allocation3 + $0xe8] sm:$0xff] %v1885
      %2430 = vst [vmem:[#allocation3 + $0xf0] sm:$0xff] %v2032
      %2431 = vst [vmem:[#allocation3 + $0xf8] sm:$0xff] %v2034
      %2432 = vst [vmem:[#allocation3 + $0x100] sm:$0xff] %v2181
      %2433 = vst [vmem:[#allocation3 + $0x108] sm:$0xff] %v2183
      %2434 = vst [vmem:[#allocation3 + $0x110] sm:$0xff] %v2330
      %2435 = vst [vmem:[#allocation3 + $0x118] sm:$0xff] %v2332
      %2436 = vst [vmem:[#allocation3 + $0x120] sm:$0xff] %v1591
      %2437 = vst [vmem:[#allocation3 + $0x128] sm:$0xff] %v1593
      %2438 = vst [vmem:[#allocation3 + $0x130] sm:$0xff] %v1740
      %2439 = vst [vmem:[#allocation3 + $0x138] sm:$0xff] %v1742
      %2440 = vst [vmem:[#allocation3 + $0x140] sm:$0xff] %v1889
      %2441 = vst [vmem:[#allocation3 + $0x148] sm:$0xff] %v1891
      %2442 = vst [vmem:[#allocation3 + $0x150] sm:$0xff] %v2038
      %2443 = vst [vmem:[#allocation3 + $0x158] sm:$0xff] %v2040
      %2444 = vst [vmem:[#allocation3 + $0x160] sm:$0xff] %v2187
      %2445 = vst [vmem:[#allocation3 + $0x168] sm:$0xff] %v2189
      %2446 = vst [vmem:[#allocation3 + $0x170] sm:$0xff] %v2336
      %2447 = vst [vmem:[#allocation3 + $0x178] sm:$0xff] %v2338
      %2448 = vst [vmem:[#allocation3 + $0x180] sm:$0xff] %v1597
      %2449 = vst [vmem:[#allocation3 + $0x188] sm:$0xff] %v1599
      %2450 = vst [vmem:[#allocation3 + $0x190] sm:$0xff] %v1746
      %2451 = vst [vmem:[#allocation3 + $0x198] sm:$0xff] %v1748
      %2452 = vst [vmem:[#allocation3 + $0x1a0] sm:$0xff] %v1895
      %2453 = vst [vmem:[#allocation3 + $0x1a8] sm:$0xff] %v1897
      %2454 = vst [vmem:[#allocation3 + $0x1b0] sm:$0xff] %v2044
      %2455 = vst [vmem:[#allocation3 + $0x1b8] sm:$0xff] %v2046
      %2456 = vst [vmem:[#allocation3 + $0x1c0] sm:$0xff] %v2193
      %2457 = vst [vmem:[#allocation3 + $0x1c8] sm:$0xff] %v2195
      %2458 = vst [vmem:[#allocation3 + $0x1d0] sm:$0xff] %v2342
      %2459 = vst [vmem:[#allocation3 + $0x1d8] sm:$0xff] %v2344
      %2460 = vst [vmem:[#allocation3 + $0x1e0] sm:$0xff] %v1603
      %2461 = vst [vmem:[#allocation3 + $0x1e8] sm:$0xff] %v1605
      %2462 = vst [vmem:[#allocation3 + $0x1f0] sm:$0xff] %v1752
      %2463 = vst [vmem:[#allocation3 + $0x1f8] sm:$0xff] %v1754
      %2464 = vst [vmem:[#allocation3 + $0x200] sm:$0xff] %v1901
      %2465 = vst [vmem:[#allocation3 + $0x208] sm:$0xff] %v1903
      %2466 = vst [vmem:[#allocation3 + $0x210] sm:$0xff] %v2050
      %2467 = vst [vmem:[#allocation3 + $0x218] sm:$0xff] %v2052
      %2468 = vst [vmem:[#allocation3 + $0x220] sm:$0xff] %v2199
      %2469 = vst [vmem:[#allocation3 + $0x228] sm:$0xff] %v2201
      %2470 = vst [vmem:[#allocation3 + $0x230] sm:$0xff] %v2348
      %2471 = vst [vmem:[#allocation3 + $0x238] sm:$0xff] %v2350
      %2472 = vst [vmem:[#allocation3 + $0x240] sm:$0xff] %v1609
      %2473 = vst [vmem:[#allocation3 + $0x248] sm:$0xff] %v1611
      %2474 = vst [vmem:[#allocation3 + $0x250] sm:$0xff] %v1758
      %2475 = vst [vmem:[#allocation3 + $0x258] sm:$0xff] %v1760
      %2476 = vst [vmem:[#allocation3 + $0x260] sm:$0xff] %v1907
      %2477 = vst [vmem:[#allocation3 + $0x268] sm:$0xff] %v1909
      %2478 = vst [vmem:[#allocation3 + $0x270] sm:$0xff] %v2056
      %2479 = vst [vmem:[#allocation3 + $0x278] sm:$0xff] %v2058
      %2480 = vst [vmem:[#allocation3 + $0x280] sm:$0xff] %v2205
      %2481 = vst [vmem:[#allocation3 + $0x288] sm:$0xff] %v2207
      %2482 = vst [vmem:[#allocation3 + $0x290] sm:$0xff] %v2354
      %2483 = vst [vmem:[#allocation3 + $0x298] sm:$0xff] %v2356
      %2484 = vst [vmem:[#allocation3 + $0x2a0] sm:$0xff] %v1615
      %2485 = vst [vmem:[#allocation3 + $0x2a8] sm:$0xff] %v1617
      %2486 = vst [vmem:[#allocation3 + $0x2b0] sm:$0xff] %v1764
      %2487 = vst [vmem:[#allocation3 + $0x2b8] sm:$0xff] %v1766
      %2488 = vst [vmem:[#allocation3 + $0x2c0] sm:$0xff] %v1913
      %2489 = vst [vmem:[#allocation3 + $0x2c8] sm:$0xff] %v1915
      %2490 = vst [vmem:[#allocation3 + $0x2d0] sm:$0xff] %v2062
      %2491 = vst [vmem:[#allocation3 + $0x2d8] sm:$0xff] %v2064
      %2492 = vst [vmem:[#allocation3 + $0x2e0] sm:$0xff] %v2211
      %2493 = vst [vmem:[#allocation3 + $0x2e8] sm:$0xff] %v2213
      %2494 = vst [vmem:[#allocation3 + $0x2f0] sm:$0xff] %v2360
      %2495 = vst [vmem:[#allocation3 + $0x2f8] sm:$0xff] %v2362
      %2496 = vst [vmem:[#allocation3 + $0x300] sm:$0xff] %v1621
      %2497 = vst [vmem:[#allocation3 + $0x308] sm:$0xff] %v1623
      %2498 = vst [vmem:[#allocation3 + $0x310] sm:$0xff] %v1770
      %2499 = vst [vmem:[#allocation3 + $0x318] sm:$0xff] %v1772
      %2500 = vst [vmem:[#allocation3 + $0x320] sm:$0xff] %v1919
      %2501 = vst [vmem:[#allocation3 + $0x328] sm:$0xff] %v1921
      %2502 = vst [vmem:[#allocation3 + $0x330] sm:$0xff] %v2068
      %2503 = vst [vmem:[#allocation3 + $0x338] sm:$0xff] %v2070
      %2504 = vst [vmem:[#allocation3 + $0x340] sm:$0xff] %v2217
      %2505 = vst [vmem:[#allocation3 + $0x348] sm:$0xff] %v2219
      %2506 = vst [vmem:[#allocation3 + $0x350] sm:$0xff] %v2366
      %2507 = vst [vmem:[#allocation3 + $0x358] sm:$0xff] %v2368
      %2508 = vst [vmem:[#allocation3 + $0x360] sm:$0xff] %v1627
      %2509 = vst [vmem:[#allocation3 + $0x368] sm:$0xff] %v1629
      %2510 = vst [vmem:[#allocation3 + $0x370] sm:$0xff] %v1776
      %2511 = vst [vmem:[#allocation3 + $0x378] sm:$0xff] %v1778
      %2512 = vst [vmem:[#allocation3 + $0x380] sm:$0xff] %v1925
      %2513 = vst [vmem:[#allocation3 + $0x388] sm:$0xff] %v1927
      %2514 = vst [vmem:[#allocation3 + $0x390] sm:$0xff] %v2074
      %2515 = vst [vmem:[#allocation3 + $0x398] sm:$0xff] %v2076
      %2516 = vst [vmem:[#allocation3 + $0x3a0] sm:$0xff] %v2223
      %2517 = vst [vmem:[#allocation3 + $0x3a8] sm:$0xff] %v2225
      %2518 = vst [vmem:[#allocation3 + $0x3b0] sm:$0xff] %v2372
      %2519 = vst [vmem:[#allocation3 + $0x3b8] sm:$0xff] %v2374
      %2520 = vst [vmem:[#allocation3 + $0x3c0] sm:$0xff] %v1633
      %2521 = vst [vmem:[#allocation3 + $0x3c8] sm:$0xff] %v1635
      %2522 = vst [vmem:[#allocation3 + $0x3d0] sm:$0xff] %v1782
      %2523 = vst [vmem:[#allocation3 + $0x3d8] sm:$0xff] %v1784
      %2524 = vst [vmem:[#allocation3 + $0x3e0] sm:$0xff] %v1931
      %2525 = vst [vmem:[#allocation3 + $0x3e8] sm:$0xff] %v1933
      %2526 = vst [vmem:[#allocation3 + $0x3f0] sm:$0xff] %v2080
      %2527 = vst [vmem:[#allocation3 + $0x3f8] sm:$0xff] %v2082
      %2528 = vst [vmem:[#allocation3 + $0x400] sm:$0xff] %v2229
      %2529 = vst [vmem:[#allocation3 + $0x408] sm:$0xff] %v2231
      %2530 = vst [vmem:[#allocation3 + $0x410] sm:$0xff] %v2378
      %2531 = vst [vmem:[#allocation3 + $0x418] sm:$0xff] %v2380
      %2532 = vst [vmem:[#allocation3 + $0x420] sm:$0xff] %v1639
      %2533 = vst [vmem:[#allocation3 + $0x428] sm:$0xff] %v1641
      %2534 = vst [vmem:[#allocation3 + $0x430] sm:$0xff] %v1788
      %2535 = vst [vmem:[#allocation3 + $0x438] sm:$0xff] %v1790
      %2536 = vst [vmem:[#allocation3 + $0x440] sm:$0xff] %v1937
      %2537 = vst [vmem:[#allocation3 + $0x448] sm:$0xff] %v1939
      %2538 = vst [vmem:[#allocation3 + $0x450] sm:$0xff] %v2086
      %2539 = vst [vmem:[#allocation3 + $0x458] sm:$0xff] %v2088
      %2540 = vst [vmem:[#allocation3 + $0x460] sm:$0xff] %v2235
      %2541 = vst [vmem:[#allocation3 + $0x468] sm:$0xff] %v2237
      %2542 = vst [vmem:[#allocation3 + $0x470] sm:$0xff] %v2384
      %2543 = vst [vmem:[#allocation3 + $0x478] sm:$0xff] %v2386
      %2544 = vst [vmem:[#allocation3 + $0x480] sm:$0xff] %v1645
      %2545 = vst [vmem:[#allocation3 + $0x488] sm:$0xff] %v1647
      %2546 = vst [vmem:[#allocation3 + $0x490] sm:$0xff] %v1794
      %2547 = vst [vmem:[#allocation3 + $0x498] sm:$0xff] %v1796
      %2548 = vst [vmem:[#allocation3 + $0x4a0] sm:$0xff] %v1943
      %2549 = vst [vmem:[#allocation3 + $0x4a8] sm:$0xff] %v1945
      %2550 = vst [vmem:[#allocation3 + $0x4b0] sm:$0xff] %v2092
      %2551 = vst [vmem:[#allocation3 + $0x4b8] sm:$0xff] %v2094
      %2552 = vst [vmem:[#allocation3 + $0x4c0] sm:$0xff] %v2241
      %2553 = vst [vmem:[#allocation3 + $0x4c8] sm:$0xff] %v2243
      %2554 = vst [vmem:[#allocation3 + $0x4d0] sm:$0xff] %v2390
      %2555 = vst [vmem:[#allocation3 + $0x4d8] sm:$0xff] %v2392
      %2556 = vst [vmem:[#allocation3 + $0x4e0] sm:$0xff] %v1651
      %2557 = vst [vmem:[#allocation3 + $0x4e8] sm:$0xff] %v1653
      %2558 = vst [vmem:[#allocation3 + $0x4f0] sm:$0xff] %v1800
      %2559 = vst [vmem:[#allocation3 + $0x4f8] sm:$0xff] %v1802
      %2560 = vst [vmem:[#allocation3 + $0x500] sm:$0xff] %v1949
      %2561 = vst [vmem:[#allocation3 + $0x508] sm:$0xff] %v1951
      %2562 = vst [vmem:[#allocation3 + $0x510] sm:$0xff] %v2098
      %2563 = vst [vmem:[#allocation3 + $0x518] sm:$0xff] %v2100
      %2564 = vst [vmem:[#allocation3 + $0x520] sm:$0xff] %v2247
      %2565 = vst [vmem:[#allocation3 + $0x528] sm:$0xff] %v2249
      %2566 = vst [vmem:[#allocation3 + $0x530] sm:$0xff] %v2396
      %2567 = vst [vmem:[#allocation3 + $0x538] sm:$0xff] %v2398
      %v2568 = vld [vmem:[#allocation3] sm:$0xff]
      %v2569 = vld [vmem:[#allocation3 + $0x8] sm:$0xff]
      %v2570 = vld [vmem:[#allocation3 + $0x10] sm:$0xff]
      %v2571 = vld [vmem:[#allocation3 + $0x18] sm:$0xff]
      %v2572 = vld [vmem:[#allocation3 + $0x20] sm:$0xff]
      %v2573 = vld [vmem:[#allocation3 + $0x28] sm:$0xff]
      %v2574 = vld [vmem:[#allocation3 + $0x30] sm:$0xff]
      %v2575 = vld [vmem:[#allocation3 + $0x38] sm:$0xff]
      %v2576 = vld [vmem:[#allocation3 + $0x40] sm:$0xff]
      %v2577 = vld [vmem:[#allocation3 + $0x48] sm:$0xff]
      %v2578 = vld [vmem:[#allocation3 + $0x60] sm:$0xff]
      %v2579 = vld [vmem:[#allocation3 + $0x68] sm:$0xff]
      %v2580 = vld [vmem:[#allocation3 + $0x70] sm:$0xff]
      %v2581 = vld [vmem:[#allocation3 + $0x78] sm:$0xff]
      %v2582 = vld [vmem:[#allocation3 + $0x80] sm:$0xff]
      %v2583 = vld [vmem:[#allocation3 + $0x88] sm:$0xff]
      %v2584 = vld [vmem:[#allocation3 + $0x90] sm:$0xff]
      %v2585 = vld [vmem:[#allocation3 + $0x98] sm:$0xff]
      %v2586 = vld [vmem:[#allocation3 + $0xa0] sm:$0xff]
      %v2587 = vld [vmem:[#allocation3 + $0xa8] sm:$0xff]
      %v2588 = vld [vmem:[#allocation3 + $0xc0] sm:$0xff]
      %v2589 = vld [vmem:[#allocation3 + $0xc8] sm:$0xff]
      %v2590 = vld [vmem:[#allocation3 + $0xd0] sm:$0xff]
      %v2591 = vld [vmem:[#allocation3 + $0xd8] sm:$0xff]
      %v2592 = vld [vmem:[#allocation3 + $0xe0] sm:$0xff]
      %v2593 = vld [vmem:[#allocation3 + $0xe8] sm:$0xff]
      %v2594 = vld [vmem:[#allocation3 + $0xf0] sm:$0xff]
      %v2595 = vld [vmem:[#allocation3 + $0xf8] sm:$0xff]
      %v2596 = vld [vmem:[#allocation3 + $0x100] sm:$0xff]
      %v2597 = vld [vmem:[#allocation3 + $0x108] sm:$0xff]
      %v2598 = vld [vmem:[#allocation3 + $0x110] sm:$0xff]
      %v2599 = vld [vmem:[#allocation3 + $0x120] sm:$0xff]
      %v2600 = vld [vmem:[#allocation3 + $0x128] sm:$0xff]
      %v2601 = vld [vmem:[#allocation3 + $0x130] sm:$0xff]
      %v2602 = vld [vmem:[#allocation3 + $0x138] sm:$0xff]
      %v2603 = vld [vmem:[#allocation3 + $0x140] sm:$0xff]
      %v2604 = vld [vmem:[#allocation3 + $0x148] sm:$0xff]
      %v2605 = vld [vmem:[#allocation3 + $0x150] sm:$0xff]
      %v2606 = vld [vmem:[#allocation3 + $0x158] sm:$0xff]
      %v2607 = vld [vmem:[#allocation3 + $0x160] sm:$0xff]
      %v2608 = vld [vmem:[#allocation3 + $0x168] sm:$0xff]
      %v2609 = vld [vmem:[#allocation3 + $0x170] sm:$0xff]
      %2632 = vrot.lane.b32.xlu0 %v2588, 88
      %v2633 = vpop.permute.xlu0 %2632
      %2634 = vrot.lane.b32.xlu0 %v2589, 88
      %v2635 = vpop.permute.xlu0 %2634
      %2636 = vrot.lane.b32.xlu0 %v2590, 88
      %v2637 = vpop.permute.xlu0 %2636
      %2638 = vrot.lane.b32.xlu0 %v2591, 88
      %v2639 = vpop.permute.xlu0 %2638
      %2640 = vrot.lane.b32.xlu0 %v2592, 88
      %v2641 = vpop.permute.xlu0 %2640
      %2642 = vrot.lane.b32.xlu0 %v2593, 88
      %v2643 = vpop.permute.xlu0 %2642
      %2644 = vrot.lane.b32.xlu0 %v2594, 88
      %v2645 = vpop.permute.xlu0 %2644
      %2646 = vrot.lane.b32.xlu0 %v2595, 88
      %v2647 = vpop.permute.xlu0 %2646
      %2648 = vrot.lane.b32.xlu0 %v2596, 88
      %v2649 = vpop.permute.xlu0 %2648
      %2650 = vrot.lane.b32.xlu0 %v2597, 88
      %v2651 = vpop.permute.xlu0 %2650
      %2652 = vrot.lane.b32.xlu0 %v2598, 88
      %v2653 = vpop.permute.xlu0 %2652
      %2654 = vrot.lane.b32.xlu0 %v2599, 88
      %v2655 = vpop.permute.xlu0 %2654
      %2656 = vrot.lane.b32.xlu0 %v2600, 88
      %v2657 = vpop.permute.xlu0 %2656
      %2658 = vrot.lane.b32.xlu0 %v2601, 88
      %v2659 = vpop.permute.xlu0 %2658
      %2660 = vrot.lane.b32.xlu0 %v2602, 88
      %v2661 = vpop.permute.xlu0 %2660
      %2662 = vrot.lane.b32.xlu0 %v2603, 88
      %v2663 = vpop.permute.xlu0 %2662
      %2664 = vrot.lane.b32.xlu0 %v2604, 88
      %v2665 = vpop.permute.xlu0 %2664
      %2666 = vrot.lane.b32.xlu0 %v2605, 88
      %v2667 = vpop.permute.xlu0 %2666
      %2668 = vrot.lane.b32.xlu0 %v2606, 88
      %v2669 = vpop.permute.xlu0 %2668
      %2670 = vrot.lane.b32.xlu0 %v2607, 88
      %v2671 = vpop.permute.xlu0 %2670
      %2672 = vrot.lane.b32.xlu0 %v2608, 88
      %v2673 = vpop.permute.xlu0 %2672
      %2674 = vrot.lane.b32.xlu0 %v2609, 88
      %v2675 = vpop.permute.xlu0 %2674
      %vm2676 = vcmask 719872
      %v2677 = vsel %vm2676, %v2633, %v2635
      %v2678 = vsel %vm2676, %v2635, %v2637
      %v2679 = vsel %vm2676, %v2637, %v2639
      %v2680 = vsel %vm2676, %v2639, %v2641
      %v2681 = vsel %vm2676, %v2641, %v2643
      %v2682 = vsel %vm2676, %v2643, %v2645
      %v2683 = vsel %vm2676, %v2645, %v2647
      %v2684 = vsel %vm2676, %v2647, %v2649
      %v2685 = vsel %vm2676, %v2649, %v2651
      %v2686 = vsel %vm2676, %v2651, %v2653
      %v2687 = vsel %vm2676, %v2655, %v2657
      %v2688 = vsel %vm2676, %v2657, %v2659
      %v2689 = vsel %vm2676, %v2659, %v2661
      %v2690 = vsel %vm2676, %v2661, %v2663
      %v2691 = vsel %vm2676, %v2663, %v2665
      %v2692 = vsel %vm2676, %v2665, %v2667
      %v2693 = vsel %vm2676, %v2667, %v2669
      %v2694 = vsel %vm2676, %v2669, %v2671
      %v2695 = vsel %vm2676, %v2671, %v2673
      %v2696 = vsel %vm2676, %v2673, %v2675
      %v2717 = vadd.f32 %v2568, %v2677
      %v2718 = vadd.f32 %v2569, %v2678
      %v2719 = vadd.f32 %v2570, %v2679
      %v2720 = vadd.f32 %v2571, %v2680
      %v2721 = vadd.f32 %v2572, %v2681
      %v2722 = vadd.f32 %v2573, %v2682
      %v2723 = vadd.f32 %v2574, %v2683
      %v2724 = vadd.f32 %v2575, %v2684
      %v2725 = vadd.f32 %v2576, %v2685
      %v2726 = vadd.f32 %v2577, %v2686
      %v2727 = vadd.f32 %v2578, %v2687
      %v2728 = vadd.f32 %v2579, %v2688
      %v2729 = vadd.f32 %v2580, %v2689
      %v2730 = vadd.f32 %v2581, %v2690
      %v2731 = vadd.f32 %v2582, %v2691
      %v2732 = vadd.f32 %v2583, %v2692
      %v2733 = vadd.f32 %v2584, %v2693
      %v2734 = vadd.f32 %v2585, %v2694
      %v2735 = vadd.f32 %v2586, %v2695
      %v2736 = vadd.f32 %v2587, %v2696
      %v2737 = vld [vmem:[#allocation3 + $0x180] sm:$0xff]
      %v2738 = vld [vmem:[#allocation3 + $0x188] sm:$0xff]
      %v2739 = vld [vmem:[#allocation3 + $0x190] sm:$0xff]
      %v2740 = vld [vmem:[#allocation3 + $0x198] sm:$0xff]
      %v2741 = vld [vmem:[#allocation3 + $0x1a0] sm:$0xff]
      %v2742 = vld [vmem:[#allocation3 + $0x1a8] sm:$0xff]
      %v2743 = vld [vmem:[#allocation3 + $0x1b0] sm:$0xff]
      %v2744 = vld [vmem:[#allocation3 + $0x1b8] sm:$0xff]
      %v2745 = vld [vmem:[#allocation3 + $0x1c0] sm:$0xff]
      %v2746 = vld [vmem:[#allocation3 + $0x1c8] sm:$0xff]
      %v2747 = vld [vmem:[#allocation3 + $0x1d0] sm:$0xff]
      %v2748 = vld [vmem:[#allocation3 + $0x1e0] sm:$0xff]
      %v2749 = vld [vmem:[#allocation3 + $0x1e8] sm:$0xff]
      %v2750 = vld [vmem:[#allocation3 + $0x1f0] sm:$0xff]
      %v2751 = vld [vmem:[#allocation3 + $0x1f8] sm:$0xff]
      %v2752 = vld [vmem:[#allocation3 + $0x200] sm:$0xff]
      %v2753 = vld [vmem:[#allocation3 + $0x208] sm:$0xff]
      %v2754 = vld [vmem:[#allocation3 + $0x210] sm:$0xff]
      %v2755 = vld [vmem:[#allocation3 + $0x218] sm:$0xff]
      %v2756 = vld [vmem:[#allocation3 + $0x220] sm:$0xff]
      %v2757 = vld [vmem:[#allocation3 + $0x228] sm:$0xff]
      %v2758 = vld [vmem:[#allocation3 + $0x230] sm:$0xff]
      %2781 = vrot.lane.b32.xlu0 %v2737, 48
      %v2782 = vpop.permute.xlu0 %2781
      %2783 = vrot.lane.b32.xlu0 %v2738, 48
      %v2784 = vpop.permute.xlu0 %2783
      %2785 = vrot.lane.b32.xlu0 %v2739, 48
      %v2786 = vpop.permute.xlu0 %2785
      %2787 = vrot.lane.b32.xlu0 %v2740, 48
      %v2788 = vpop.permute.xlu0 %2787
      %2789 = vrot.lane.b32.xlu0 %v2741, 48
      %v2790 = vpop.permute.xlu0 %2789
      %2791 = vrot.lane.b32.xlu0 %v2742, 48
      %v2792 = vpop.permute.xlu0 %2791
      %2793 = vrot.lane.b32.xlu0 %v2743, 48
      %v2794 = vpop.permute.xlu0 %2793
      %2795 = vrot.lane.b32.xlu0 %v2744, 48
      %v2796 = vpop.permute.xlu0 %2795
      %2797 = vrot.lane.b32.xlu0 %v2745, 48
      %v2798 = vpop.permute.xlu0 %2797
      %2799 = vrot.lane.b32.xlu0 %v2746, 48
      %v2800 = vpop.permute.xlu0 %2799
      %2801 = vrot.lane.b32.xlu0 %v2747, 48
      %v2802 = vpop.permute.xlu0 %2801
      %2803 = vrot.lane.b32.xlu0 %v2748, 48
      %v2804 = vpop.permute.xlu0 %2803
      %2805 = vrot.lane.b32.xlu0 %v2749, 48
      %v2806 = vpop.permute.xlu0 %2805
      %2807 = vrot.lane.b32.xlu0 %v2750, 48
      %v2808 = vpop.permute.xlu0 %2807
      %2809 = vrot.lane.b32.xlu0 %v2751, 48
      %v2810 = vpop.permute.xlu0 %2809
      %2811 = vrot.lane.b32.xlu0 %v2752, 48
      %v2812 = vpop.permute.xlu0 %2811
      %2813 = vrot.lane.b32.xlu0 %v2753, 48
      %v2814 = vpop.permute.xlu0 %2813
      %2815 = vrot.lane.b32.xlu0 %v2754, 48
      %v2816 = vpop.permute.xlu0 %2815
      %2817 = vrot.lane.b32.xlu0 %v2755, 48
      %v2818 = vpop.permute.xlu0 %2817
      %2819 = vrot.lane.b32.xlu0 %v2756, 48
      %v2820 = vpop.permute.xlu0 %2819
      %2821 = vrot.lane.b32.xlu0 %v2757, 48
      %v2822 = vpop.permute.xlu0 %2821
      %2823 = vrot.lane.b32.xlu0 %v2758, 48
      %v2824 = vpop.permute.xlu0 %2823
      %vm2825 = vcmask 392192
      %v2826 = vsel %vm2825, %v2782, %v2784
      %v2827 = vsel %vm2825, %v2784, %v2786
      %v2828 = vsel %vm2825, %v2786, %v2788
      %v2829 = vsel %vm2825, %v2788, %v2790
      %v2830 = vsel %vm2825, %v2790, %v2792
      %v2831 = vsel %vm2825, %v2792, %v2794
      %v2832 = vsel %vm2825, %v2794, %v2796
      %v2833 = vsel %vm2825, %v2796, %v2798
      %v2834 = vsel %vm2825, %v2798, %v2800
      %v2835 = vsel %vm2825, %v2800, %v2802
      %v2836 = vsel %vm2825, %v2804, %v2806
      %v2837 = vsel %vm2825, %v2806, %v2808
      %v2838 = vsel %vm2825, %v2808, %v2810
      %v2839 = vsel %vm2825, %v2810, %v2812
      %v2840 = vsel %vm2825, %v2812, %v2814
      %v2841 = vsel %vm2825, %v2814, %v2816
      %v2842 = vsel %vm2825, %v2816, %v2818
      %v2843 = vsel %vm2825, %v2818, %v2820
      %v2844 = vsel %vm2825, %v2820, %v2822
      %v2845 = vsel %vm2825, %v2822, %v2824
      %v2866 = vadd.f32 %v2717, %v2826
      %v2867 = vadd.f32 %v2718, %v2827
      %v2868 = vadd.f32 %v2719, %v2828
      %v2869 = vadd.f32 %v2720, %v2829
      %v2870 = vadd.f32 %v2721, %v2830
      %v2871 = vadd.f32 %v2722, %v2831
      %v2872 = vadd.f32 %v2723, %v2832
      %v2873 = vadd.f32 %v2724, %v2833
      %v2874 = vadd.f32 %v2725, %v2834
      %v2875 = vadd.f32 %v2726, %v2835
      %v2876 = vadd.f32 %v2727, %v2836
      %v2877 = vadd.f32 %v2728, %v2837
      %v2878 = vadd.f32 %v2729, %v2838
      %v2879 = vadd.f32 %v2730, %v2839
      %v2880 = vadd.f32 %v2731, %v2840
      %v2881 = vadd.f32 %v2732, %v2841
      %v2882 = vadd.f32 %v2733, %v2842
      %v2883 = vadd.f32 %v2734, %v2843
      %v2884 = vadd.f32 %v2735, %v2844
      %v2885 = vadd.f32 %v2736, %v2845
      %v2886 = vld [vmem:[#allocation3 + $0x240] sm:$0xff]
      %v2887 = vld [vmem:[#allocation3 + $0x248] sm:$0xff]
      %v2888 = vld [vmem:[#allocation3 + $0x250] sm:$0xff]
      %v2889 = vld [vmem:[#allocation3 + $0x258] sm:$0xff]
      %v2890 = vld [vmem:[#allocation3 + $0x260] sm:$0xff]
      %v2891 = vld [vmem:[#allocation3 + $0x268] sm:$0xff]
      %v2892 = vld [vmem:[#allocation3 + $0x270] sm:$0xff]
      %v2893 = vld [vmem:[#allocation3 + $0x278] sm:$0xff]
      %v2894 = vld [vmem:[#allocation3 + $0x280] sm:$0xff]
      %v2895 = vld [vmem:[#allocation3 + $0x288] sm:$0xff]
      %v2896 = vld [vmem:[#allocation3 + $0x290] sm:$0xff]
      %v2897 = vld [vmem:[#allocation3 + $0x2a0] sm:$0xff]
      %v2898 = vld [vmem:[#allocation3 + $0x2a8] sm:$0xff]
      %v2899 = vld [vmem:[#allocation3 + $0x2b0] sm:$0xff]
      %v2900 = vld [vmem:[#allocation3 + $0x2b8] sm:$0xff]
      %v2901 = vld [vmem:[#allocation3 + $0x2c0] sm:$0xff]
      %v2902 = vld [vmem:[#allocation3 + $0x2c8] sm:$0xff]
      %v2903 = vld [vmem:[#allocation3 + $0x2d0] sm:$0xff]
      %v2904 = vld [vmem:[#allocation3 + $0x2d8] sm:$0xff]
      %v2905 = vld [vmem:[#allocation3 + $0x2e0] sm:$0xff]
      %v2906 = vld [vmem:[#allocation3 + $0x2e8] sm:$0xff]
      %v2907 = vld [vmem:[#allocation3 + $0x2f0] sm:$0xff]
      %2930 = vrot.lane.b32.xlu0 %v2886, 8
      %v2931 = vpop.permute.xlu0 %2930
      %2932 = vrot.lane.b32.xlu0 %v2887, 8
      %v2933 = vpop.permute.xlu0 %2932
      %2934 = vrot.lane.b32.xlu0 %v2888, 8
      %v2935 = vpop.permute.xlu0 %2934
      %2936 = vrot.lane.b32.xlu0 %v2889, 8
      %v2937 = vpop.permute.xlu0 %2936
      %2938 = vrot.lane.b32.xlu0 %v2890, 8
      %v2939 = vpop.permute.xlu0 %2938
      %2940 = vrot.lane.b32.xlu0 %v2891, 8
      %v2941 = vpop.permute.xlu0 %2940
      %2942 = vrot.lane.b32.xlu0 %v2892, 8
      %v2943 = vpop.permute.xlu0 %2942
      %2944 = vrot.lane.b32.xlu0 %v2893, 8
      %v2945 = vpop.permute.xlu0 %2944
      %2946 = vrot.lane.b32.xlu0 %v2894, 8
      %v2947 = vpop.permute.xlu0 %2946
      %2948 = vrot.lane.b32.xlu0 %v2895, 8
      %v2949 = vpop.permute.xlu0 %2948
      %2950 = vrot.lane.b32.xlu0 %v2896, 8
      %v2951 = vpop.permute.xlu0 %2950
      %2952 = vrot.lane.b32.xlu0 %v2897, 8
      %v2953 = vpop.permute.xlu0 %2952
      %2954 = vrot.lane.b32.xlu0 %v2898, 8
      %v2955 = vpop.permute.xlu0 %2954
      %2956 = vrot.lane.b32.xlu0 %v2899, 8
      %v2957 = vpop.permute.xlu0 %2956
      %2958 = vrot.lane.b32.xlu0 %v2900, 8
      %v2959 = vpop.permute.xlu0 %2958
      %2960 = vrot.lane.b32.xlu0 %v2901, 8
      %v2961 = vpop.permute.xlu0 %2960
      %2962 = vrot.lane.b32.xlu0 %v2902, 8
      %v2963 = vpop.permute.xlu0 %2962
      %2964 = vrot.lane.b32.xlu0 %v2903, 8
      %v2965 = vpop.permute.xlu0 %2964
      %2966 = vrot.lane.b32.xlu0 %v2904, 8
      %v2967 = vpop.permute.xlu0 %2966
      %2968 = vrot.lane.b32.xlu0 %v2905, 8
      %v2969 = vpop.permute.xlu0 %2968
      %2970 = vrot.lane.b32.xlu0 %v2906, 8
      %v2971 = vpop.permute.xlu0 %2970
      %2972 = vrot.lane.b32.xlu0 %v2907, 8
      %v2973 = vpop.permute.xlu0 %2972
      %vm2974 = vcmask 64512
      %v2975 = vsel %vm2974, %v2931, %v2933
      %v2976 = vsel %vm2974, %v2933, %v2935
      %v2977 = vsel %vm2974, %v2935, %v2937
      %v2978 = vsel %vm2974, %v2937, %v2939
      %v2979 = vsel %vm2974, %v2939, %v2941
      %v2980 = vsel %vm2974, %v2941, %v2943
      %v2981 = vsel %vm2974, %v2943, %v2945
      %v2982 = vsel %vm2974, %v2945, %v2947
      %v2983 = vsel %vm2974, %v2947, %v2949
      %v2984 = vsel %vm2974, %v2949, %v2951
      %v2985 = vsel %vm2974, %v2953, %v2955
      %v2986 = vsel %vm2974, %v2955, %v2957
      %v2987 = vsel %vm2974, %v2957, %v2959
      %v2988 = vsel %vm2974, %v2959, %v2961
      %v2989 = vsel %vm2974, %v2961, %v2963
      %v2990 = vsel %vm2974, %v2963, %v2965
      %v2991 = vsel %vm2974, %v2965, %v2967
      %v2992 = vsel %vm2974, %v2967, %v2969
      %v2993 = vsel %vm2974, %v2969, %v2971
      %v2994 = vsel %vm2974, %v2971, %v2973
      %v3015 = vadd.f32 %v2866, %v2975
      %v3016 = vadd.f32 %v2867, %v2976
      %v3017 = vadd.f32 %v2868, %v2977
      %v3018 = vadd.f32 %v2869, %v2978
      %v3019 = vadd.f32 %v2870, %v2979
      %v3020 = vadd.f32 %v2871, %v2980
      %v3021 = vadd.f32 %v2872, %v2981
      %v3022 = vadd.f32 %v2873, %v2982
      %v3023 = vadd.f32 %v2874, %v2983
      %v3024 = vadd.f32 %v2875, %v2984
      %v3025 = vadd.f32 %v2876, %v2985
      %v3026 = vadd.f32 %v2877, %v2986
      %v3027 = vadd.f32 %v2878, %v2987
      %v3028 = vadd.f32 %v2879, %v2988
      %v3029 = vadd.f32 %v2880, %v2989
      %v3030 = vadd.f32 %v2881, %v2990
      %v3031 = vadd.f32 %v2882, %v2991
      %v3032 = vadd.f32 %v2883, %v2992
      %v3033 = vadd.f32 %v2884, %v2993
      %v3034 = vadd.f32 %v2885, %v2994
      %v3035 = vld [vmem:[#allocation3 + $0x308] sm:$0xff]
      %v3036 = vld [vmem:[#allocation3 + $0x310] sm:$0xff]
      %v3037 = vld [vmem:[#allocation3 + $0x318] sm:$0xff]
      %v3038 = vld [vmem:[#allocation3 + $0x320] sm:$0xff]
      %v3039 = vld [vmem:[#allocation3 + $0x328] sm:$0xff]
      %v3040 = vld [vmem:[#allocation3 + $0x330] sm:$0xff]
      %v3041 = vld [vmem:[#allocation3 + $0x338] sm:$0xff]
      %v3042 = vld [vmem:[#allocation3 + $0x340] sm:$0xff]
      %v3043 = vld [vmem:[#allocation3 + $0x348] sm:$0xff]
      %v3044 = vld [vmem:[#allocation3 + $0x350] sm:$0xff]
      %v3045 = vld [vmem:[#allocation3 + $0x358] sm:$0xff]
      %v3046 = vld [vmem:[#allocation3 + $0x368] sm:$0xff]
      %v3047 = vld [vmem:[#allocation3 + $0x370] sm:$0xff]
      %v3048 = vld [vmem:[#allocation3 + $0x378] sm:$0xff]
      %v3049 = vld [vmem:[#allocation3 + $0x380] sm:$0xff]
      %v3050 = vld [vmem:[#allocation3 + $0x388] sm:$0xff]
      %v3051 = vld [vmem:[#allocation3 + $0x390] sm:$0xff]
      %v3052 = vld [vmem:[#allocation3 + $0x398] sm:$0xff]
      %v3053 = vld [vmem:[#allocation3 + $0x3a0] sm:$0xff]
      %v3054 = vld [vmem:[#allocation3 + $0x3a8] sm:$0xff]
      %v3055 = vld [vmem:[#allocation3 + $0x3b0] sm:$0xff]
      %v3056 = vld [vmem:[#allocation3 + $0x3b8] sm:$0xff]
      %3079 = vrot.lane.b32.xlu0 %v3035, 96
      %v3080 = vpop.permute.xlu0 %3079
      %3081 = vrot.lane.b32.xlu0 %v3036, 96
      %v3082 = vpop.permute.xlu0 %3081
      %3083 = vrot.lane.b32.xlu0 %v3037, 96
      %v3084 = vpop.permute.xlu0 %3083
      %3085 = vrot.lane.b32.xlu0 %v3038, 96
      %v3086 = vpop.permute.xlu0 %3085
      %3087 = vrot.lane.b32.xlu0 %v3039, 96
      %v3088 = vpop.permute.xlu0 %3087
      %3089 = vrot.lane.b32.xlu0 %v3040, 96
      %v3090 = vpop.permute.xlu0 %3089
      %3091 = vrot.lane.b32.xlu0 %v3041, 96
      %v3092 = vpop.permute.xlu0 %3091
      %3093 = vrot.lane.b32.xlu0 %v3042, 96
      %v3094 = vpop.permute.xlu0 %3093
      %3095 = vrot.lane.b32.xlu0 %v3043, 96
      %v3096 = vpop.permute.xlu0 %3095
      %3097 = vrot.lane.b32.xlu0 %v3044, 96
      %v3098 = vpop.permute.xlu0 %3097
      %3099 = vrot.lane.b32.xlu0 %v3045, 96
      %v3100 = vpop.permute.xlu0 %3099
      %3101 = vrot.lane.b32.xlu0 %v3046, 96
      %v3102 = vpop.permute.xlu0 %3101
      %3103 = vrot.lane.b32.xlu0 %v3047, 96
      %v3104 = vpop.permute.xlu0 %3103
      %3105 = vrot.lane.b32.xlu0 %v3048, 96
      %v3106 = vpop.permute.xlu0 %3105
      %3107 = vrot.lane.b32.xlu0 %v3049, 96
      %v3108 = vpop.permute.xlu0 %3107
      %3109 = vrot.lane.b32.xlu0 %v3050, 96
      %v3110 = vpop.permute.xlu0 %3109
      %3111 = vrot.lane.b32.xlu0 %v3051, 96
      %v3112 = vpop.permute.xlu0 %3111
      %3113 = vrot.lane.b32.xlu0 %v3052, 96
      %v3114 = vpop.permute.xlu0 %3113
      %3115 = vrot.lane.b32.xlu0 %v3053, 96
      %v3116 = vpop.permute.xlu0 %3115
      %3117 = vrot.lane.b32.xlu0 %v3054, 96
      %v3118 = vpop.permute.xlu0 %3117
      %3119 = vrot.lane.b32.xlu0 %v3055, 96
      %v3120 = vpop.permute.xlu0 %3119
      %3121 = vrot.lane.b32.xlu0 %v3056, 96
      %v3122 = vpop.permute.xlu0 %3121
      %vm3123 = vcmask 785408
      %v3124 = vsel %vm3123, %v3080, %v3082
      %v3125 = vsel %vm3123, %v3082, %v3084
      %v3126 = vsel %vm3123, %v3084, %v3086
      %v3127 = vsel %vm3123, %v3086, %v3088
      %v3128 = vsel %vm3123, %v3088, %v3090
      %v3129 = vsel %vm3123, %v3090, %v3092
      %v3130 = vsel %vm3123, %v3092, %v3094
      %v3131 = vsel %vm3123, %v3094, %v3096
      %v3132 = vsel %vm3123, %v3096, %v3098
      %v3133 = vsel %vm3123, %v3098, %v3100
      %v3134 = vsel %vm3123, %v3102, %v3104
      %v3135 = vsel %vm3123, %v3104, %v3106
      %v3136 = vsel %vm3123, %v3106, %v3108
      %v3137 = vsel %vm3123, %v3108, %v3110
      %v3138 = vsel %vm3123, %v3110, %v3112
      %v3139 = vsel %vm3123, %v3112, %v3114
      %v3140 = vsel %vm3123, %v3114, %v3116
      %v3141 = vsel %vm3123, %v3116, %v3118
      %v3142 = vsel %vm3123, %v3118, %v3120
      %v3143 = vsel %vm3123, %v3120, %v3122
      %v3164 = vadd.f32 %v3015, %v3124
      %v3165 = vadd.f32 %v3016, %v3125
      %v3166 = vadd.f32 %v3017, %v3126
      %v3167 = vadd.f32 %v3018, %v3127
      %v3168 = vadd.f32 %v3019, %v3128
      %v3169 = vadd.f32 %v3020, %v3129
      %v3170 = vadd.f32 %v3021, %v3130
      %v3171 = vadd.f32 %v3022, %v3131
      %v3172 = vadd.f32 %v3023, %v3132
      %v3173 = vadd.f32 %v3024, %v3133
      %v3174 = vadd.f32 %v3025, %v3134
      %v3175 = vadd.f32 %v3026, %v3135
      %v3176 = vadd.f32 %v3027, %v3136
      %v3177 = vadd.f32 %v3028, %v3137
      %v3178 = vadd.f32 %v3029, %v3138
      %v3179 = vadd.f32 %v3030, %v3139
      %v3180 = vadd.f32 %v3031, %v3140
      %v3181 = vadd.f32 %v3032, %v3141
      %v3182 = vadd.f32 %v3033, %v3142
      %v3183 = vadd.f32 %v3034, %v3143
      %v3184 = vld [vmem:[#allocation3 + $0x3c8] sm:$0xff]
      %v3185 = vld [vmem:[#allocation3 + $0x3d0] sm:$0xff]
      %v3186 = vld [vmem:[#allocation3 + $0x3d8] sm:$0xff]
      %v3187 = vld [vmem:[#allocation3 + $0x3e0] sm:$0xff]
      %v3188 = vld [vmem:[#allocation3 + $0x3e8] sm:$0xff]
      %v3189 = vld [vmem:[#allocation3 + $0x3f0] sm:$0xff]
      %v3190 = vld [vmem:[#allocation3 + $0x3f8] sm:$0xff]
      %v3191 = vld [vmem:[#allocation3 + $0x400] sm:$0xff]
      %v3192 = vld [vmem:[#allocation3 + $0x408] sm:$0xff]
      %v3193 = vld [vmem:[#allocation3 + $0x410] sm:$0xff]
      %v3194 = vld [vmem:[#allocation3 + $0x418] sm:$0xff]
      %v3195 = vld [vmem:[#allocation3 + $0x428] sm:$0xff]
      %v3196 = vld [vmem:[#allocation3 + $0x430] sm:$0xff]
      %v3197 = vld [vmem:[#allocation3 + $0x438] sm:$0xff]
      %v3198 = vld [vmem:[#allocation3 + $0x440] sm:$0xff]
      %v3199 = vld [vmem:[#allocation3 + $0x448] sm:$0xff]
      %v3200 = vld [vmem:[#allocation3 + $0x450] sm:$0xff]
      %v3201 = vld [vmem:[#allocation3 + $0x458] sm:$0xff]
      %v3202 = vld [vmem:[#allocation3 + $0x460] sm:$0xff]
      %v3203 = vld [vmem:[#allocation3 + $0x468] sm:$0xff]
      %v3204 = vld [vmem:[#allocation3 + $0x470] sm:$0xff]
      %v3205 = vld [vmem:[#allocation3 + $0x478] sm:$0xff]
      %3228 = vrot.lane.b32.xlu0 %v3184, 56
      %v3229 = vpop.permute.xlu0 %3228
      %3230 = vrot.lane.b32.xlu0 %v3185, 56
      %v3231 = vpop.permute.xlu0 %3230
      %3232 = vrot.lane.b32.xlu0 %v3186, 56
      %v3233 = vpop.permute.xlu0 %3232
      %3234 = vrot.lane.b32.xlu0 %v3187, 56
      %v3235 = vpop.permute.xlu0 %3234
      %3236 = vrot.lane.b32.xlu0 %v3188, 56
      %v3237 = vpop.permute.xlu0 %3236
      %3238 = vrot.lane.b32.xlu0 %v3189, 56
      %v3239 = vpop.permute.xlu0 %3238
      %3240 = vrot.lane.b32.xlu0 %v3190, 56
      %v3241 = vpop.permute.xlu0 %3240
      %3242 = vrot.lane.b32.xlu0 %v3191, 56
      %v3243 = vpop.permute.xlu0 %3242
      %3244 = vrot.lane.b32.xlu0 %v3192, 56
      %v3245 = vpop.permute.xlu0 %3244
      %3246 = vrot.lane.b32.xlu0 %v3193, 56
      %v3247 = vpop.permute.xlu0 %3246
      %3248 = vrot.lane.b32.xlu0 %v3194, 56
      %v3249 = vpop.permute.xlu0 %3248
      %3250 = vrot.lane.b32.xlu0 %v3195, 56
      %v3251 = vpop.permute.xlu0 %3250
      %3252 = vrot.lane.b32.xlu0 %v3196, 56
      %v3253 = vpop.permute.xlu0 %3252
      %3254 = vrot.lane.b32.xlu0 %v3197, 56
      %v3255 = vpop.permute.xlu0 %3254
      %3256 = vrot.lane.b32.xlu0 %v3198, 56
      %v3257 = vpop.permute.xlu0 %3256
      %3258 = vrot.lane.b32.xlu0 %v3199, 56
      %v3259 = vpop.permute.xlu0 %3258
      %3260 = vrot.lane.b32.xlu0 %v3200, 56
      %v3261 = vpop.permute.xlu0 %3260
      %3262 = vrot.lane.b32.xlu0 %v3201, 56
      %v3263 = vpop.permute.xlu0 %3262
      %3264 = vrot.lane.b32.xlu0 %v3202, 56
      %v3265 = vpop.permute.xlu0 %3264
      %3266 = vrot.lane.b32.xlu0 %v3203, 56
      %v3267 = vpop.permute.xlu0 %3266
      %3268 = vrot.lane.b32.xlu0 %v3204, 56
      %v3269 = vpop.permute.xlu0 %3268
      %3270 = vrot.lane.b32.xlu0 %v3205, 56
      %v3271 = vpop.permute.xlu0 %3270
      %vm3272 = vcmask 457728
      %v3273 = vsel %vm3272, %v3229, %v3231
      %v3274 = vsel %vm3272, %v3231, %v3233
      %v3275 = vsel %vm3272, %v3233, %v3235
      %v3276 = vsel %vm3272, %v3235, %v3237
      %v3277 = vsel %vm3272, %v3237, %v3239
      %v3278 = vsel %vm3272, %v3239, %v3241
      %v3279 = vsel %vm3272, %v3241, %v3243
      %v3280 = vsel %vm3272, %v3243, %v3245
      %v3281 = vsel %vm3272, %v3245, %v3247
      %v3282 = vsel %vm3272, %v3247, %v3249
      %v3283 = vsel %vm3272, %v3251, %v3253
      %v3284 = vsel %vm3272, %v3253, %v3255
      %v3285 = vsel %vm3272, %v3255, %v3257
      %v3286 = vsel %vm3272, %v3257, %v3259
      %v3287 = vsel %vm3272, %v3259, %v3261
      %v3288 = vsel %vm3272, %v3261, %v3263
      %v3289 = vsel %vm3272, %v3263, %v3265
      %v3290 = vsel %vm3272, %v3265, %v3267
      %v3291 = vsel %vm3272, %v3267, %v3269
      %v3292 = vsel %vm3272, %v3269, %v3271
      %v3313 = vadd.f32 %v3164, %v3273
      %v3314 = vadd.f32 %v3165, %v3274
      %v3315 = vadd.f32 %v3166, %v3275
      %v3316 = vadd.f32 %v3167, %v3276
      %v3317 = vadd.f32 %v3168, %v3277
      %v3318 = vadd.f32 %v3169, %v3278
      %v3319 = vadd.f32 %v3170, %v3279
      %v3320 = vadd.f32 %v3171, %v3280
      %v3321 = vadd.f32 %v3172, %v3281
      %v3322 = vadd.f32 %v3173, %v3282
      %v3323 = vadd.f32 %v3174, %v3283
      %v3324 = vadd.f32 %v3175, %v3284
      %v3325 = vadd.f32 %v3176, %v3285
      %v3326 = vadd.f32 %v3177, %v3286
      %v3327 = vadd.f32 %v3178, %v3287
      %v3328 = vadd.f32 %v3179, %v3288
      %v3329 = vadd.f32 %v3180, %v3289
      %v3330 = vadd.f32 %v3181, %v3290
      %v3331 = vadd.f32 %v3182, %v3291
      %v3332 = vadd.f32 %v3183, %v3292
      %v3333 = vld [vmem:[#allocation3 + $0x488] sm:$0xff]
      %v3334 = vld [vmem:[#allocation3 + $0x490] sm:$0xff]
      %v3335 = vld [vmem:[#allocation3 + $0x498] sm:$0xff]
      %v3336 = vld [vmem:[#allocation3 + $0x4a0] sm:$0xff]
      %v3337 = vld [vmem:[#allocation3 + $0x4a8] sm:$0xff]
      %v3338 = vld [vmem:[#allocation3 + $0x4b0] sm:$0xff]
      %v3339 = vld [vmem:[#allocation3 + $0x4b8] sm:$0xff]
      %v3340 = vld [vmem:[#allocation3 + $0x4c0] sm:$0xff]
      %v3341 = vld [vmem:[#allocation3 + $0x4c8] sm:$0xff]
      %v3342 = vld [vmem:[#allocation3 + $0x4d0] sm:$0xff]
      %v3343 = vld [vmem:[#allocation3 + $0x4d8] sm:$0xff]
      %v3344 = vld [vmem:[#allocation3 + $0x4e8] sm:$0xff]
      %v3345 = vld [vmem:[#allocation3 + $0x4f0] sm:$0xff]
      %v3346 = vld [vmem:[#allocation3 + $0x4f8] sm:$0xff]
      %v3347 = vld [vmem:[#allocation3 + $0x500] sm:$0xff]
      %v3348 = vld [vmem:[#allocation3 + $0x508] sm:$0xff]
      %v3349 = vld [vmem:[#allocation3 + $0x510] sm:$0xff]
      %v3350 = vld [vmem:[#allocation3 + $0x518] sm:$0xff]
      %v3351 = vld [vmem:[#allocation3 + $0x520] sm:$0xff]
      %v3352 = vld [vmem:[#allocation3 + $0x528] sm:$0xff]
      %v3353 = vld [vmem:[#allocation3 + $0x530] sm:$0xff]
      %v3354 = vld [vmem:[#allocation3 + $0x538] sm:$0xff]
      %3377 = vrot.lane.b32.xlu0 %v3333, 16
      %v3378 = vpop.permute.xlu0 %3377
      %3379 = vrot.lane.b32.xlu0 %v3334, 16
      %v3380 = vpop.permute.xlu0 %3379
      %3381 = vrot.lane.b32.xlu0 %v3335, 16
      %v3382 = vpop.permute.xlu0 %3381
      %3383 = vrot.lane.b32.xlu0 %v3336, 16
      %v3384 = vpop.permute.xlu0 %3383
      %3385 = vrot.lane.b32.xlu0 %v3337, 16
      %v3386 = vpop.permute.xlu0 %3385
      %3387 = vrot.lane.b32.xlu0 %v3338, 16
      %v3388 = vpop.permute.xlu0 %3387
      %3389 = vrot.lane.b32.xlu0 %v3339, 16
      %v3390 = vpop.permute.xlu0 %3389
      %3391 = vrot.lane.b32.xlu0 %v3340, 16
      %v3392 = vpop.permute.xlu0 %3391
      %3393 = vrot.lane.b32.xlu0 %v3341, 16
      %v3394 = vpop.permute.xlu0 %3393
      %3395 = vrot.lane.b32.xlu0 %v3342, 16
      %v3396 = vpop.permute.xlu0 %3395
      %3397 = vrot.lane.b32.xlu0 %v3343, 16
      %v3398 = vpop.permute.xlu0 %3397
      %3399 = vrot.lane.b32.xlu0 %v3344, 16
      %v3400 = vpop.permute.xlu0 %3399
      %3401 = vrot.lane.b32.xlu0 %v3345, 16
      %v3402 = vpop.permute.xlu0 %3401
      %3403 = vrot.lane.b32.xlu0 %v3346, 16
      %v3404 = vpop.permute.xlu0 %3403
      %3405 = vrot.lane.b32.xlu0 %v3347, 16
      %v3406 = vpop.permute.xlu0 %3405
      %3407 = vrot.lane.b32.xlu0 %v3348, 16
      %v3408 = vpop.permute.xlu0 %3407
      %3409 = vrot.lane.b32.xlu0 %v3349, 16
      %v3410 = vpop.permute.xlu0 %3409
      %3411 = vrot.lane.b32.xlu0 %v3350, 16
      %v3412 = vpop.permute.xlu0 %3411
      %3413 = vrot.lane.b32.xlu0 %v3351, 16
      %v3414 = vpop.permute.xlu0 %3413
      %3415 = vrot.lane.b32.xlu0 %v3352, 16
      %v3416 = vpop.permute.xlu0 %3415
      %3417 = vrot.lane.b32.xlu0 %v3353, 16
      %v3418 = vpop.permute.xlu0 %3417
      %3419 = vrot.lane.b32.xlu0 %v3354, 16
      %v3420 = vpop.permute.xlu0 %3419
      %vm3421 = vcmask 130048
      %v3422 = vsel %vm3421, %v3378, %v3380
      %v3423 = vsel %vm3421, %v3380, %v3382
      %v3424 = vsel %vm3421, %v3382, %v3384
      %v3425 = vsel %vm3421, %v3384, %v3386
      %v3426 = vsel %vm3421, %v3386, %v3388
      %v3427 = vsel %vm3421, %v3388, %v3390
      %v3428 = vsel %vm3421, %v3390, %v3392
      %v3429 = vsel %vm3421, %v3392, %v3394
      %v3430 = vsel %vm3421, %v3394, %v3396
      %v3431 = vsel %vm3421, %v3396, %v3398
      %v3432 = vsel %vm3421, %v3400, %v3402
      %v3433 = vsel %vm3421, %v3402, %v3404
      %v3434 = vsel %vm3421, %v3404, %v3406
      %v3435 = vsel %vm3421, %v3406, %v3408
      %v3436 = vsel %vm3421, %v3408, %v3410
      %v3437 = vsel %vm3421, %v3410, %v3412
      %v3438 = vsel %vm3421, %v3412, %v3414
      %v3439 = vsel %vm3421, %v3414, %v3416
      %v3440 = vsel %vm3421, %v3416, %v3418
      %v3441 = vsel %vm3421, %v3418, %v3420
      %v3462 = vadd.f32 %v3313, %v3422
      %v3463 = vadd.f32 %v3314, %v3423
      %v3464 = vadd.f32 %v3315, %v3424
      %v3465 = vadd.f32 %v3316, %v3425
      %v3466 = vadd.f32 %v3317, %v3426
      %v3467 = vadd.f32 %v3318, %v3427
      %v3468 = vadd.f32 %v3319, %v3428
      %v3469 = vadd.f32 %v3320, %v3429
      %v3470 = vadd.f32 %v3321, %v3430
      %v3471 = vadd.f32 %v3322, %v3431
      %v3472 = vadd.f32 %v3323, %v3432
      %v3473 = vadd.f32 %v3324, %v3433
      %v3474 = vadd.f32 %v3325, %v3434
      %v3475 = vadd.f32 %v3326, %v3435
      %v3476 = vadd.f32 %v3327, %v3436
      %v3477 = vadd.f32 %v3328, %v3437
      %v3478 = vadd.f32 %v3329, %v3438
      %v3479 = vadd.f32 %v3330, %v3439
      %v3480 = vadd.f32 %v3331, %v3440
      %v3481 = vadd.f32 %v3332, %v3441
      %v3482 = vld [vmem:[%s2] sm:$0xff]
      %v3483 = vld [vmem:[%s2 + $0x8] sm:$0xff]
      %3485 = vset.pattern.permute.xlu0 0
      %3486 = vperm.xlu0 %3485, %v3482
      %v3487 = vpop.permute.xlu0 %3486
      %3490 = vset.pattern.permute.xlu0 0
      %3491 = vperm.xlu0 %3490, %v3483
      %v3492 = vpop.permute.xlu0 %3491
      %v3494 = vadd.f32 %v3462, %v3487
      %v3495 = vadd.f32 %v3463, %v3487
      %v3496 = vadd.f32 %v3464, %v3487
      %v3497 = vadd.f32 %v3465, %v3487
      %v3498 = vadd.f32 %v3466, %v3487
      %v3499 = vadd.f32 %v3467, %v3487
      %v3500 = vadd.f32 %v3468, %v3487
      %v3501 = vadd.f32 %v3469, %v3487
      %v3502 = vadd.f32 %v3470, %v3487
      %v3503 = vadd.f32 %v3471, %v3487
      %v3504 = vadd.f32 %v3472, %v3492
      %v3505 = vadd.f32 %v3473, %v3492
      %v3506 = vadd.f32 %v3474, %v3492
      %v3507 = vadd.f32 %v3475, %v3492
      %v3508 = vadd.f32 %v3476, %v3492
      %v3509 = vadd.f32 %v3477, %v3492
      %v3510 = vadd.f32 %v3478, %v3492
      %v3511 = vadd.f32 %v3479, %v3492
      %v3512 = vadd.f32 %v3480, %v3492
      %v3513 = vadd.f32 %v3481, %v3492
      %v3514 = vmax.f32 %v3494, 0.0
      %v3515 = vmax.f32 %v3495, 0.0
      %v3516 = vmax.f32 %v3496, 0.0
      %v3517 = vmax.f32 %v3497, 0.0
      %v3518 = vmax.f32 %v3498, 0.0
      %v3519 = vmax.f32 %v3499, 0.0
      %v3520 = vmax.f32 %v3500, 0.0
      %v3521 = vmax.f32 %v3501, 0.0
      %v3522 = vmax.f32 %v3502, 0.0
      %v3523 = vmax.f32 %v3503, 0.0
      %v3524 = vmax.f32 %v3504, 0.0
      %v3525 = vmax.f32 %v3505, 0.0
      %v3526 = vmax.f32 %v3506, 0.0
      %v3527 = vmax.f32 %v3507, 0.0
      %v3528 = vmax.f32 %v3508, 0.0
      %v3529 = vmax.f32 %v3509, 0.0
      %v3530 = vmax.f32 %v3510, 0.0
      %v3531 = vmax.f32 %v3511, 0.0
      %v3532 = vmax.f32 %v3512, 0.0
      %v3533 = vmax.f32 %v3513, 0.0
      %3534 = vst [vmem:[%s170] sm:$0xff] %v3514
      %3535 = vst [vmem:[%s170 + $0x8] sm:$0xff] %v3515
      %3536 = vst [vmem:[%s170 + $0x10] sm:$0xff] %v3516
      %3537 = vst [vmem:[%s170 + $0x18] sm:$0xff] %v3517
      %3538 = vst [vmem:[%s170 + $0x20] sm:$0xff] %v3518
      %3539 = vst [vmem:[%s170 + $0x28] sm:$0xff] %v3519
      %3540 = vst [vmem:[%s170 + $0x30] sm:$0xff] %v3520
      %3541 = vst [vmem:[%s170 + $0x38] sm:$0xff] %v3521
      %3542 = vst [vmem:[%s170 + $0x40] sm:$0xff] %v3522
      %3543 = vst [vmem:[%s170 + $0x48] sm:$0xff] %v3523
      %3544 = vst [vmem:[%s170 + $0x50] sm:$0xff] %v3524
      %3545 = vst [vmem:[%s170 + $0x58] sm:$0xff] %v3525
      %3546 = vst [vmem:[%s170 + $0x60] sm:$0xff] %v3526
      %3547 = vst [vmem:[%s170 + $0x68] sm:$0xff] %v3527
      %3548 = vst [vmem:[%s170 + $0x70] sm:$0xff] %v3528
      %3549 = vst [vmem:[%s170 + $0x78] sm:$0xff] %v3529
      %3550 = vst [vmem:[%s170 + $0x80] sm:$0xff] %v3530
      %3551 = vst [vmem:[%s170 + $0x88] sm:$0xff] %v3531
      %3552 = vst [vmem:[%s170 + $0x90] sm:$0xff] %v3532
      %3553 = vst [vmem:[%s170 + $0x98] sm:$0xff] %v3533
      %p3554 = scmp.lt.s32.totalorder %s14, 1
      %s3555 = scalar_select %p3554, %s14, 1
      %s3556 = smul.addr %s3555, 20
      %s3557 = smul.addr %s3556, 8
      %s3558 = scalar_lea.vmem %s3, %s3557
      // Predicated region
      $region33: #{model_forward.1} parent=31 // pred_check
        %p3559 = pneg %p100
      $region34: #{model_forward.1} parent=31 // pred_check_branch
        %3561 = sbr.rel (%p3559) target = $region36
      $region35: #{model_forward.1} parent=31 // pred_region
        _
      $region36: #{model_forward.1} parent=31 // pred_fallthru
        _
    $region32: #{model_forward.1} parent=5 // pred_fallthru
      _
    %p3562 = scmp.le.s32.totalorder 2, %s9
    // Predicated region
    $region37: #{model_forward.1} parent=5 // pred_check
      %p3563 = pneg %p3562
    $region38: #{model_forward.1} parent=5 // pred_check_branch
      %3565 = sbr.rel (%p3563) target = $region40
    $region39: #{model_forward.1} parent=5 // pred_region
      %s3566 = ssub.s32 %s9, 2
      // Predicated region
      $region41: #{model_forward.1} parent=39 // pred_check
        %p3567 = pneg %p106
      $region42: #{model_forward.1} parent=39 // pred_check_branch
        %3569 = sbr.rel (%p3567) target = $region44
      $region43: #{model_forward.1} parent=39 // pred_region
        %p3570 = scmp.lt.s32.totalorder %s15, 1
        %s3571 = scalar_select %p3570, %s15, 1
        %s3572 = smul.addr %s3571, 20
        %s3573 = smul.addr %s3572, 8
        %s3574 = scalar_lea.vmem %s3, %s3573
      $region44: #{model_forward.1} parent=39 // pred_fallthru
        _
    $region40: #{model_forward.1} parent=5 // pred_fallthru
      _
  $region6: #{model_forward.1} parent=0 // loop_footer
    %s13 = sadd.s32 1, %s9
  $region7: #{model_forward.1} parent=0 // loop_footer_branch
    %8 = sbr.rel target = $region3
  $region8: #{model_forward.1} parent=0 // loop_exit
    _

</llo_original>
